<compile_context>
chip_gen: v7x
topology: tpu7x:2x2x1
jax: 0.10.0
libtpu: 0.0.40
codegen_flags: <defaults>
</compile_context>

<pallas_src>
import functools

import jax
import jax.numpy as jnp
from jax import lax
from jax.experimental import pallas as pl
from jax.experimental.pallas import tpu as pltpu


# ----------------------------------------------------------------------------
# Fused Pallas kernel (built per static config)
# ----------------------------------------------------------------------------
def _make_fused_kernel(T, B, n_state, H, n_layer, n_rb):
    """Returns a kernel computing the full bi-LSTM + ReLU + fc forward pass."""

    def kernel(*refs):
        x_ref = refs[0]                                  # (T, B, n_state)
        layer_refs = refs[1:1 + 6 * n_layer]             # per layer: 6 weight refs
        wfc_ref = refs[1 + 6 * n_layer]                  # (2H, n_rb)
        bfc_ref = refs[2 + 6 * n_layer]                  # (1, n_rb)
        out_ref = refs[3 + 6 * n_layer]                  # (B, n_rb)

        def recur(gx_list, whh_ref):
            """LSTM recurrence over pre-computed x-path gate pre-activations.

            gx_list[s] : (B, 4H) = x_s @ W_ih + b  (gate order i, f, g, o)
            Returns list of hidden states in processing order.
            """
            whh = whh_ref[...]                           # (H, 4H)
            hs = []
            h = None
            c = None
            for step, g_x in enumerate(gx_list):
                if step == 0:
                    gates = g_x                          # h0 = 0  =>  h0 @ W_hh = 0
                else:
                    gates = g_x + jnp.dot(
                        h, whh, preferred_element_type=jnp.float32)
                i_g = jax.nn.sigmoid(gates[:, 0 * H:1 * H])
                f_g = jax.nn.sigmoid(gates[:, 1 * H:2 * H])
                g_g = jnp.tanh(gates[:, 2 * H:3 * H])
                o_g = jax.nn.sigmoid(gates[:, 3 * H:4 * H])
                if step == 0:
                    c = i_g * g_g                        # c0 = 0
                else:
                    c = f_g * c + i_g * g_g
                h = o_g * jnp.tanh(c)
                hs.append(h)
            return hs

        fwd_seq = None      # list over t of (B, H): previous layer forward outputs
        bwd_seq = None      # list over t of (B, H): previous layer backward outputs
        h_fwd_last = None
        h_bwd_last = None

        for layer in range(n_layer):
            (w_ih_f, w_hh_f, b_f,
             w_ih_b, w_hh_b, b_b) = layer_refs[6 * layer:6 * layer + 6]
            last = (layer == n_layer - 1)

            # ---- x-path gate pre-activations (no sequential dependency) ----
            bias_f = jnp.broadcast_to(b_f[...], (B, 4 * H))   # hoisted broadcasts
            bias_b = jnp.broadcast_to(b_b[...], (B, 4 * H))

            if layer == 0:
                wx_f = w_ih_f[...]                       # (n_state, 4H)
                wx_b = w_ih_b[...]
                gx_f = [
                    jnp.dot(x_ref[t], wx_f, preferred_element_type=jnp.float32)
                    + bias_f
                    for t in range(T)
                ]

                def gx_b_at(t, wx_b=wx_b, bias_b=bias_b):
                    return (jnp.dot(x_ref[t], wx_b,
                                    preferred_element_type=jnp.float32) + bias_b)
            else:
                # Input of this layer is concat(fwd, bwd) along features; split
                # W_ih by rows (tile-aligned) so no concatenation is needed.
                wxf_top = w_ih_f[0:H, :]
                wxf_bot = w_ih_f[H:2 * H, :]
                wxb_top = w_ih_b[0:H, :]
                wxb_bot = w_ih_b[H:2 * H, :]
                gx_f = [
                    jnp.dot(fwd_seq[t], wxf_top, preferred_element_type=jnp.float32)
                    + jnp.dot(bwd_seq[t], wxf_bot, preferred_element_type=jnp.float32)
                    + bias_f
                    for t in range(T)
                ]

                def gx_b_at(t, wxb_top=wxb_top, wxb_bot=wxb_bot, bias_b=bias_b,
                            fwd_seq=fwd_seq, bwd_seq=bwd_seq):
                    return (
                        jnp.dot(fwd_seq[t], wxb_top,
                                preferred_element_type=jnp.float32)
                        + jnp.dot(bwd_seq[t], wxb_bot,
                                  preferred_element_type=jnp.float32)
                        + bias_b)

            # ---- forward direction: t = 0 .. T-1 ---------------------------
            f_hs = recur(gx_f, w_hh_f)

            # ---- backward direction ---------------------------------------
            if last:
                # The head only consumes the backward hidden state at t = T-1,
                # which is exactly one recurrence step from zero state.
                b_hs = recur([gx_b_at(T - 1)], w_hh_b)
                h_fwd_last = f_hs[-1]
                h_bwd_last = b_hs[0]
            else:
                gx_b = [gx_b_at(t) for t in range(T - 1, -1, -1)]
                b_hs = recur(gx_b, w_hh_b)               # processing order t=T-1..0
                fwd_seq = f_hs                           # indexed by sequence pos t
                bwd_seq = [b_hs[T - 1 - t] for t in range(T)]

        # ---- head: ReLU + fc (fc weight split by rows, no concat) ----------
        xf = jnp.maximum(h_fwd_last, 0.0)
        xb = jnp.maximum(h_bwd_last, 0.0)
        wfc = wfc_ref[...]                               # (2H, n_rb)
        out = (jnp.dot(xf, wfc[0:H, :], preferred_element_type=jnp.float32)
               + jnp.dot(xb, wfc[H:2 * H, :], preferred_element_type=jnp.float32)
               + bfc_ref[...])
        out_ref[...] = out

    return kernel


# ----------------------------------------------------------------------------
# Wrapper around the single fused pallas_call
# ----------------------------------------------------------------------------
def model_forward_pallas(x_btd, params, n_layer, n_hidden):
    """Full forward pass; x_btd: (B, T, n_state) -> (B, n_rb)."""
    B, T, n_state = x_btd.shape
    n_rb = params["w_fc_t"].shape[1]
    x_tbd = jnp.transpose(x_btd, (1, 0, 2))              # (T, B, n_state) time-major

    inputs = [x_tbd]
    for layer in range(n_layer):
        p = params["lstm"][layer]
        inputs += [p["w_ih_f"], p["w_hh_f"], p["b_f"],
                   p["w_ih_b"], p["w_hh_b"], p["b_b"]]
    inputs += [params["w_fc_t"], params["b_fc"]]

    kernel = _make_fused_kernel(T, B, n_state, n_hidden, n_layer, n_rb)
    vmem = pl.BlockSpec(memory_space=pltpu.MemorySpace.VMEM)
    return pl.pallas_call(
        kernel,
        out_shape=jax.ShapeDtypeStruct((B, n_rb), jnp.float32),
        in_specs=[vmem] * len(inputs),
        out_specs=vmem,
    )(*inputs)


# ----------------------------------------------------------------------------
# Pure-JAX reference (PyTorch bidirectional-LSTM semantics)
# ----------------------------------------------------------------------------
def _lstm_dir_ref(x_tbd, w_ih_t, w_hh_t, bias, hidden):
    T, B, _ = x_tbd.shape
    H = hidden

    def step(carry, x_t):
        h, c = carry
        g = x_t @ w_ih_t + h @ w_hh_t + bias
        i = jax.nn.sigmoid(g[:, :H])
        f = jax.nn.sigmoid(g[:, H:2 * H])
        gg = jnp.tanh(g[:, 2 * H:3 * H])
        o = jax.nn.sigmoid(g[:, 3 * H:])
        c = f * c + i * gg
        h = o * jnp.tanh(c)
        return (h, c), h

    init = (jnp.zeros((B, H), jnp.float32), jnp.zeros((B, H), jnp.float32))
    _, hs = lax.scan(step, init, x_tbd)
    return hs


def model_forward_ref(x_btd, params, n_layer, n_hidden):
    x = jnp.transpose(x_btd, (1, 0, 2))
    for layer in range(n_layer):
        p = params["lstm"][layer]
        fwd = _lstm_dir_ref(x, p["w_ih_f"], p["w_hh_f"], p["b_f"], n_hidden)
        bwd = jnp.flip(
            _lstm_dir_ref(jnp.flip(x, 0), p["w_ih_b"], p["w_hh_b"], p["b_b"], n_hidden),
            0,
        )
        x = jnp.concatenate([fwd, bwd], axis=-1)
    x_last = jnp.maximum(x[-1], 0.0)
    return x_last @ params["w_fc_t"] + params["b_fc"]


# ----------------------------------------------------------------------------
# Deterministic parameter init (shapes match nn.LSTM / nn.Linear in __init__)
# ----------------------------------------------------------------------------
def init_params(key, n_state, n_hidden, n_layer, n_rb):
    k = 1.0 / jnp.sqrt(jnp.float32(n_hidden))
    params = {"lstm": []}
    for layer in range(n_layer):
        d_in = n_state if layer == 0 else 2 * n_hidden
        keys = jax.random.split(key, 9)
        key = keys[0]

        def u(kk, shape):
            return jax.random.uniform(kk, shape, jnp.float32, -k, k)

        layer_p = {
            # stored pre-transposed: (D_in, 4H) and (H, 4H); bias = b_ih + b_hh
            "w_ih_f": u(keys[1], (d_in, 4 * n_hidden)),
            "w_hh_f": u(keys[2], (n_hidden, 4 * n_hidden)),
            "b_f": u(keys[3], (1, 4 * n_hidden)) + u(keys[4], (1, 4 * n_hidden)),
            "w_ih_b": u(keys[5], (d_in, 4 * n_hidden)),
            "w_hh_b": u(keys[6], (n_hidden, 4 * n_hidden)),
            "b_b": u(keys[7], (1, 4 * n_hidden)) + u(keys[8], (1, 4 * n_hidden)),
        }
        params["lstm"].append(layer_p)

    kfc = 1.0 / jnp.sqrt(jnp.float32(2 * n_hidden))
    key, k1, k2 = jax.random.split(key, 3)
    params["w_fc_t"] = jax.random.uniform(
        k1, (2 * n_hidden, n_rb), jnp.float32, -kfc, kfc
    )
    params["b_fc"] = jax.random.uniform(k2, (1, n_rb), jnp.float32, -kfc, kfc)
    return params


# ----------------------------------------------------------------------------
if __name__ == "__main__":
    # Small config consistent with the module's forward.
    B, T = 2, 8
    n_state, n_hidden, n_layer, n_rb = 16, 32, 2, 4

    root = jax.random.PRNGKey(0)
    kx, kp = jax.random.split(root)
    x = jax.random.normal(kx, (B, T, n_state), jnp.float32)
    params = init_params(kp, n_state, n_hidden, n_layer, n_rb)

    fwd = jax.jit(
        functools.partial(model_forward_pallas, n_layer=n_layer, n_hidden=n_hidden)
    )
    out = fwd(x, params)
    out = jax.block_until_ready(out)

    ref = model_forward_ref(x, params, n_layer, n_hidden)
    err = float(jnp.max(jnp.abs(out - ref)))
    assert out.shape == (B, n_rb)
    assert err < 1e-4, f"mismatch vs reference: {err}"
    print("KERNEL_OK")
</pallas_src>

<mosaic_0001>
module attributes {stable_mosaic.version = 11 : i64} {
  func.func @kernel(%arg0: memref<8x2x16xf32, #tpu.memory_space<vmem>>, %arg1: memref<16x128xf32, #tpu.memory_space<vmem>>, %arg2: memref<32x128xf32, #tpu.memory_space<vmem>>, %arg3: memref<1x128xf32, #tpu.memory_space<vmem>>, %arg4: memref<16x128xf32, #tpu.memory_space<vmem>>, %arg5: memref<32x128xf32, #tpu.memory_space<vmem>>, %arg6: memref<1x128xf32, #tpu.memory_space<vmem>>, %arg7: memref<64x128xf32, #tpu.memory_space<vmem>>, %arg8: memref<32x128xf32, #tpu.memory_space<vmem>>, %arg9: memref<1x128xf32, #tpu.memory_space<vmem>>, %arg10: memref<64x128xf32, #tpu.memory_space<vmem>>, %arg11: memref<32x128xf32, #tpu.memory_space<vmem>>, %arg12: memref<1x128xf32, #tpu.memory_space<vmem>>, %arg13: memref<64x4xf32, #tpu.memory_space<vmem>>, %arg14: memref<1x4xf32, #tpu.memory_space<vmem>>, %arg15: memref<2x4xf32, #tpu.memory_space<vmem>>) attributes {dimension_semantics = [], scalar_prefetch = 0 : i64, scratch_operands = 0 : i64, tpu.core_type = #tpu.core_type<tc>} {
    %c0 = arith.constant 0 : index
    %c0_0 = arith.constant 0 : index
    %0 = vector.load %arg3[%c0, %c0_0] : memref<1x128xf32, #tpu.memory_space<vmem>>, vector<1x128xf32>
    %1 = vector.shape_cast %0 : vector<1x128xf32> to vector<1x128xf32>
    %2 = vector.broadcast %1 : vector<1x128xf32> to vector<2x128xf32>
    %c0_1 = arith.constant 0 : index
    %c0_2 = arith.constant 0 : index
    %3 = vector.load %arg6[%c0_1, %c0_2] : memref<1x128xf32, #tpu.memory_space<vmem>>, vector<1x128xf32>
    %4 = vector.shape_cast %3 : vector<1x128xf32> to vector<1x128xf32>
    %5 = vector.broadcast %4 : vector<1x128xf32> to vector<2x128xf32>
    %c0_3 = arith.constant 0 : index
    %c0_4 = arith.constant 0 : index
    %6 = vector.load %arg1[%c0_3, %c0_4] : memref<16x128xf32, #tpu.memory_space<vmem>>, vector<16x128xf32>
    %c0_5 = arith.constant 0 : index
    %c0_6 = arith.constant 0 : index
    %7 = vector.load %arg4[%c0_5, %c0_6] : memref<16x128xf32, #tpu.memory_space<vmem>>, vector<16x128xf32>
    %c0_7 = arith.constant 0 : index
    %c0_8 = arith.constant 0 : index
    %c0_9 = arith.constant 0 : index
    %8 = vector.load %arg0[%c0_7, %c0_8, %c0_9] : memref<8x2x16xf32, #tpu.memory_space<vmem>>, vector<1x2x16xf32>
    %9 = vector.shape_cast %8 : vector<1x2x16xf32> to vector<2x16xf32>
    %cst = arith.constant dense<0.000000e+00> : vector<2x128xf32>
    %10 = tpu.matmul %9, %6, %cst {dimension_numbers = #tpu.dot_dimension_numbers<[1], [0], [0], [1], [0, 0, 1, 1], [], []>} : vector<2x16xf32>, vector<16x128xf32>, vector<2x128xf32> -> vector<2x128xf32>
    %11 = arith.addf %10, %2 : vector<2x128xf32>
    %c1 = arith.constant 1 : index
    %c0_10 = arith.constant 0 : index
    %c0_11 = arith.constant 0 : index
    %12 = vector.load %arg0[%c1, %c0_10, %c0_11] : memref<8x2x16xf32, #tpu.memory_space<vmem>>, vector<1x2x16xf32>
    %13 = vector.shape_cast %12 : vector<1x2x16xf32> to vector<2x16xf32>
    %cst_12 = arith.constant dense<0.000000e+00> : vector<2x128xf32>
    %14 = tpu.matmul %13, %6, %cst_12 {dimension_numbers = #tpu.dot_dimension_numbers<[1], [0], [0], [1], [0, 0, 1, 1], [], []>} : vector<2x16xf32>, vector<16x128xf32>, vector<2x128xf32> -> vector<2x128xf32>
    %15 = arith.addf %14, %2 : vector<2x128xf32>
    %c2 = arith.constant 2 : index
    %c0_13 = arith.constant 0 : index
    %c0_14 = arith.constant 0 : index
    %16 = vector.load %arg0[%c2, %c0_13, %c0_14] : memref<8x2x16xf32, #tpu.memory_space<vmem>>, vector<1x2x16xf32>
    %17 = vector.shape_cast %16 : vector<1x2x16xf32> to vector<2x16xf32>
    %cst_15 = arith.constant dense<0.000000e+00> : vector<2x128xf32>
    %18 = tpu.matmul %17, %6, %cst_15 {dimension_numbers = #tpu.dot_dimension_numbers<[1], [0], [0], [1], [0, 0, 1, 1], [], []>} : vector<2x16xf32>, vector<16x128xf32>, vector<2x128xf32> -> vector<2x128xf32>
    %19 = arith.addf %18, %2 : vector<2x128xf32>
    %c3 = arith.constant 3 : index
    %c0_16 = arith.constant 0 : index
    %c0_17 = arith.constant 0 : index
    %20 = vector.load %arg0[%c3, %c0_16, %c0_17] : memref<8x2x16xf32, #tpu.memory_space<vmem>>, vector<1x2x16xf32>
    %21 = vector.shape_cast %20 : vector<1x2x16xf32> to vector<2x16xf32>
    %cst_18 = arith.constant dense<0.000000e+00> : vector<2x128xf32>
    %22 = tpu.matmul %21, %6, %cst_18 {dimension_numbers = #tpu.dot_dimension_numbers<[1], [0], [0], [1], [0, 0, 1, 1], [], []>} : vector<2x16xf32>, vector<16x128xf32>, vector<2x128xf32> -> vector<2x128xf32>
    %23 = arith.addf %22, %2 : vector<2x128xf32>
    %c4 = arith.constant 4 : index
    %c0_19 = arith.constant 0 : index
    %c0_20 = arith.constant 0 : index
    %24 = vector.load %arg0[%c4, %c0_19, %c0_20] : memref<8x2x16xf32, #tpu.memory_space<vmem>>, vector<1x2x16xf32>
    %25 = vector.shape_cast %24 : vector<1x2x16xf32> to vector<2x16xf32>
    %cst_21 = arith.constant dense<0.000000e+00> : vector<2x128xf32>
    %26 = tpu.matmul %25, %6, %cst_21 {dimension_numbers = #tpu.dot_dimension_numbers<[1], [0], [0], [1], [0, 0, 1, 1], [], []>} : vector<2x16xf32>, vector<16x128xf32>, vector<2x128xf32> -> vector<2x128xf32>
    %27 = arith.addf %26, %2 : vector<2x128xf32>
    %c5 = arith.constant 5 : index
    %c0_22 = arith.constant 0 : index
    %c0_23 = arith.constant 0 : index
    %28 = vector.load %arg0[%c5, %c0_22, %c0_23] : memref<8x2x16xf32, #tpu.memory_space<vmem>>, vector<1x2x16xf32>
    %29 = vector.shape_cast %28 : vector<1x2x16xf32> to vector<2x16xf32>
    %cst_24 = arith.constant dense<0.000000e+00> : vector<2x128xf32>
    %30 = tpu.matmul %29, %6, %cst_24 {dimension_numbers = #tpu.dot_dimension_numbers<[1], [0], [0], [1], [0, 0, 1, 1], [], []>} : vector<2x16xf32>, vector<16x128xf32>, vector<2x128xf32> -> vector<2x128xf32>
    %31 = arith.addf %30, %2 : vector<2x128xf32>
    %c6 = arith.constant 6 : index
    %c0_25 = arith.constant 0 : index
    %c0_26 = arith.constant 0 : index
    %32 = vector.load %arg0[%c6, %c0_25, %c0_26] : memref<8x2x16xf32, #tpu.memory_space<vmem>>, vector<1x2x16xf32>
    %33 = vector.shape_cast %32 : vector<1x2x16xf32> to vector<2x16xf32>
    %cst_27 = arith.constant dense<0.000000e+00> : vector<2x128xf32>
    %34 = tpu.matmul %33, %6, %cst_27 {dimension_numbers = #tpu.dot_dimension_numbers<[1], [0], [0], [1], [0, 0, 1, 1], [], []>} : vector<2x16xf32>, vector<16x128xf32>, vector<2x128xf32> -> vector<2x128xf32>
    %35 = arith.addf %34, %2 : vector<2x128xf32>
    %c7 = arith.constant 7 : index
    %c0_28 = arith.constant 0 : index
    %c0_29 = arith.constant 0 : index
    %36 = vector.load %arg0[%c7, %c0_28, %c0_29] : memref<8x2x16xf32, #tpu.memory_space<vmem>>, vector<1x2x16xf32>
    %37 = vector.shape_cast %36 : vector<1x2x16xf32> to vector<2x16xf32>
    %cst_30 = arith.constant dense<0.000000e+00> : vector<2x128xf32>
    %38 = tpu.matmul %37, %6, %cst_30 {dimension_numbers = #tpu.dot_dimension_numbers<[1], [0], [0], [1], [0, 0, 1, 1], [], []>} : vector<2x16xf32>, vector<16x128xf32>, vector<2x128xf32> -> vector<2x128xf32>
    %39 = arith.addf %38, %2 : vector<2x128xf32>
    %c0_31 = arith.constant 0 : index
    %c0_32 = arith.constant 0 : index
    %40 = vector.load %arg2[%c0_31, %c0_32] : memref<32x128xf32, #tpu.memory_space<vmem>>, vector<32x128xf32>
    %41 = vector.extract_strided_slice %11 {offsets = [0, 0], sizes = [2, 32], strides = [1, 1]} : vector<2x128xf32> to vector<2x32xf32>
    %42 = arith.negf %41 : vector<2x32xf32>
    %43 = math.exp %42 : vector<2x32xf32>
    %cst_33 = arith.constant 1.000000e+00 : f32
    %44 = vector.broadcast %cst_33 : f32 to vector<2x32xf32>
    %45 = arith.addf %44, %43 : vector<2x32xf32>
    %46 = arith.divf %44, %45 : vector<2x32xf32>
    %47 = vector.extract_strided_slice %11 {offsets = [0, 64], sizes = [2, 32], strides = [1, 1]} : vector<2x128xf32> to vector<2x32xf32>
    %48 = math.tanh %47 : vector<2x32xf32>
    %49 = vector.extract_strided_slice %11 {offsets = [0, 96], sizes = [2, 32], strides = [1, 1]} : vector<2x128xf32> to vector<2x32xf32>
    %50 = arith.negf %49 : vector<2x32xf32>
    %51 = math.exp %50 : vector<2x32xf32>
    %cst_34 = arith.constant 1.000000e+00 : f32
    %52 = vector.broadcast %cst_34 : f32 to vector<2x32xf32>
    %53 = arith.addf %52, %51 : vector<2x32xf32>
    %54 = arith.divf %52, %53 : vector<2x32xf32>
    %55 = arith.mulf %46, %48 : vector<2x32xf32>
    %56 = math.tanh %55 : vector<2x32xf32>
    %57 = arith.mulf %54, %56 : vector<2x32xf32>
    %cst_35 = arith.constant dense<0.000000e+00> : vector<2x128xf32>
    %58 = tpu.matmul %57, %40, %cst_35 {dimension_numbers = #tpu.dot_dimension_numbers<[1], [0], [0], [1], [0, 0, 1, 1], [], []>} : vector<2x32xf32>, vector<32x128xf32>, vector<2x128xf32> -> vector<2x128xf32>
    %59 = arith.addf %15, %58 : vector<2x128xf32>
    %60 = vector.extract_strided_slice %59 {offsets = [0, 0], sizes = [2, 32], strides = [1, 1]} : vector<2x128xf32> to vector<2x32xf32>
    %61 = arith.negf %60 : vector<2x32xf32>
    %62 = math.exp %61 : vector<2x32xf32>
    %cst_36 = arith.constant 1.000000e+00 : f32
    %63 = vector.broadcast %cst_36 : f32 to vector<2x32xf32>
    %64 = arith.addf %63, %62 : vector<2x32xf32>
    %65 = arith.divf %63, %64 : vector<2x32xf32>
    %66 = vector.extract_strided_slice %59 {offsets = [0, 32], sizes = [2, 32], strides = [1, 1]} : vector<2x128xf32> to vector<2x32xf32>
    %67 = arith.negf %66 : vector<2x32xf32>
    %68 = math.exp %67 : vector<2x32xf32>
    %cst_37 = arith.constant 1.000000e+00 : f32
    %69 = vector.broadcast %cst_37 : f32 to vector<2x32xf32>
    %70 = arith.addf %69, %68 : vector<2x32xf32>
    %71 = arith.divf %69, %70 : vector<2x32xf32>
    %72 = vector.extract_strided_slice %59 {offsets = [0, 64], sizes = [2, 32], strides = [1, 1]} : vector<2x128xf32> to vector<2x32xf32>
    %73 = math.tanh %72 : vector<2x32xf32>
    %74 = vector.extract_strided_slice %59 {offsets = [0, 96], sizes = [2, 32], strides = [1, 1]} : vector<2x128xf32> to vector<2x32xf32>
    %75 = arith.negf %74 : vector<2x32xf32>
    %76 = math.exp %75 : vector<2x32xf32>
    %cst_38 = arith.constant 1.000000e+00 : f32
    %77 = vector.broadcast %cst_38 : f32 to vector<2x32xf32>
    %78 = arith.addf %77, %76 : vector<2x32xf32>
    %79 = arith.divf %77, %78 : vector<2x32xf32>
    %80 = arith.mulf %71, %55 : vector<2x32xf32>
    %81 = arith.mulf %65, %73 : vector<2x32xf32>
    %82 = arith.addf %80, %81 : vector<2x32xf32>
    %83 = math.tanh %82 : vector<2x32xf32>
    %84 = arith.mulf %79, %83 : vector<2x32xf32>
    %cst_39 = arith.constant dense<0.000000e+00> : vector<2x128xf32>
    %85 = tpu.matmul %84, %40, %cst_39 {dimension_numbers = #tpu.dot_dimension_numbers<[1], [0], [0], [1], [0, 0, 1, 1], [], []>} : vector<2x32xf32>, vector<32x128xf32>, vector<2x128xf32> -> vector<2x128xf32>
    %86 = arith.addf %19, %85 : vector<2x128xf32>
    %87 = vector.extract_strided_slice %86 {offsets = [0, 0], sizes = [2, 32], strides = [1, 1]} : vector<2x128xf32> to vector<2x32xf32>
    %88 = arith.negf %87 : vector<2x32xf32>
    %89 = math.exp %88 : vector<2x32xf32>
    %cst_40 = arith.constant 1.000000e+00 : f32
    %90 = vector.broadcast %cst_40 : f32 to vector<2x32xf32>
    %91 = arith.addf %90, %89 : vector<2x32xf32>
    %92 = arith.divf %90, %91 : vector<2x32xf32>
    %93 = vector.extract_strided_slice %86 {offsets = [0, 32], sizes = [2, 32], strides = [1, 1]} : vector<2x128xf32> to vector<2x32xf32>
    %94 = arith.negf %93 : vector<2x32xf32>
    %95 = math.exp %94 : vector<2x32xf32>
    %cst_41 = arith.constant 1.000000e+00 : f32
    %96 = vector.broadcast %cst_41 : f32 to vector<2x32xf32>
    %97 = arith.addf %96, %95 : vector<2x32xf32>
    %98 = arith.divf %96, %97 : vector<2x32xf32>
    %99 = vector.extract_strided_slice %86 {offsets = [0, 64], sizes = [2, 32], strides = [1, 1]} : vector<2x128xf32> to vector<2x32xf32>
    %100 = math.tanh %99 : vector<2x32xf32>
    %101 = vector.extract_strided_slice %86 {offsets = [0, 96], sizes = [2, 32], strides = [1, 1]} : vector<2x128xf32> to vector<2x32xf32>
    %102 = arith.negf %101 : vector<2x32xf32>
    %103 = math.exp %102 : vector<2x32xf32>
    %cst_42 = arith.constant 1.000000e+00 : f32
    %104 = vector.broadcast %cst_42 : f32 to vector<2x32xf32>
    %105 = arith.addf %104, %103 : vector<2x32xf32>
    %106 = arith.divf %104, %105 : vector<2x32xf32>
    %107 = arith.mulf %98, %82 : vector<2x32xf32>
    %108 = arith.mulf %92, %100 : vector<2x32xf32>
    %109 = arith.addf %107, %108 : vector<2x32xf32>
    %110 = math.tanh %109 : vector<2x32xf32>
    %111 = arith.mulf %106, %110 : vector<2x32xf32>
    %cst_43 = arith.constant dense<0.000000e+00> : vector<2x128xf32>
    %112 = tpu.matmul %111, %40, %cst_43 {dimension_numbers = #tpu.dot_dimension_numbers<[1], [0], [0], [1], [0, 0, 1, 1], [], []>} : vector<2x32xf32>, vector<32x128xf32>, vector<2x128xf32> -> vector<2x128xf32>
    %113 = arith.addf %23, %112 : vector<2x128xf32>
    %114 = vector.extract_strided_slice %113 {offsets = [0, 0], sizes = [2, 32], strides = [1, 1]} : vector<2x128xf32> to vector<2x32xf32>
    %115 = arith.negf %114 : vector<2x32xf32>
    %116 = math.exp %115 : vector<2x32xf32>
    %cst_44 = arith.constant 1.000000e+00 : f32
    %117 = vector.broadcast %cst_44 : f32 to vector<2x32xf32>
    %118 = arith.addf %117, %116 : vector<2x32xf32>
    %119 = arith.divf %117, %118 : vector<2x32xf32>
    %120 = vector.extract_strided_slice %113 {offsets = [0, 32], sizes = [2, 32], strides = [1, 1]} : vector<2x128xf32> to vector<2x32xf32>
    %121 = arith.negf %120 : vector<2x32xf32>
    %122 = math.exp %121 : vector<2x32xf32>
    %cst_45 = arith.constant 1.000000e+00 : f32
    %123 = vector.broadcast %cst_45 : f32 to vector<2x32xf32>
    %124 = arith.addf %123, %122 : vector<2x32xf32>
    %125 = arith.divf %123, %124 : vector<2x32xf32>
    %126 = vector.extract_strided_slice %113 {offsets = [0, 64], sizes = [2, 32], strides = [1, 1]} : vector<2x128xf32> to vector<2x32xf32>
    %127 = math.tanh %126 : vector<2x32xf32>
    %128 = vector.extract_strided_slice %113 {offsets = [0, 96], sizes = [2, 32], strides = [1, 1]} : vector<2x128xf32> to vector<2x32xf32>
    %129 = arith.negf %128 : vector<2x32xf32>
    %130 = math.exp %129 : vector<2x32xf32>
    %cst_46 = arith.constant 1.000000e+00 : f32
    %131 = vector.broadcast %cst_46 : f32 to vector<2x32xf32>
    %132 = arith.addf %131, %130 : vector<2x32xf32>
    %133 = arith.divf %131, %132 : vector<2x32xf32>
    %134 = arith.mulf %125, %109 : vector<2x32xf32>
    %135 = arith.mulf %119, %127 : vector<2x32xf32>
    %136 = arith.addf %134, %135 : vector<2x32xf32>
    %137 = math.tanh %136 : vector<2x32xf32>
    %138 = arith.mulf %133, %137 : vector<2x32xf32>
    %cst_47 = arith.constant dense<0.000000e+00> : vector<2x128xf32>
    %139 = tpu.matmul %138, %40, %cst_47 {dimension_numbers = #tpu.dot_dimension_numbers<[1], [0], [0], [1], [0, 0, 1, 1], [], []>} : vector<2x32xf32>, vector<32x128xf32>, vector<2x128xf32> -> vector<2x128xf32>
    %140 = arith.addf %27, %139 : vector<2x128xf32>
    %141 = vector.extract_strided_slice %140 {offsets = [0, 0], sizes = [2, 32], strides = [1, 1]} : vector<2x128xf32> to vector<2x32xf32>
    %142 = arith.negf %141 : vector<2x32xf32>
    %143 = math.exp %142 : vector<2x32xf32>
    %cst_48 = arith.constant 1.000000e+00 : f32
    %144 = vector.broadcast %cst_48 : f32 to vector<2x32xf32>
    %145 = arith.addf %144, %143 : vector<2x32xf32>
    %146 = arith.divf %144, %145 : vector<2x32xf32>
    %147 = vector.extract_strided_slice %140 {offsets = [0, 32], sizes = [2, 32], strides = [1, 1]} : vector<2x128xf32> to vector<2x32xf32>
    %148 = arith.negf %147 : vector<2x32xf32>
    %149 = math.exp %148 : vector<2x32xf32>
    %cst_49 = arith.constant 1.000000e+00 : f32
    %150 = vector.broadcast %cst_49 : f32 to vector<2x32xf32>
    %151 = arith.addf %150, %149 : vector<2x32xf32>
    %152 = arith.divf %150, %151 : vector<2x32xf32>
    %153 = vector.extract_strided_slice %140 {offsets = [0, 64], sizes = [2, 32], strides = [1, 1]} : vector<2x128xf32> to vector<2x32xf32>
    %154 = math.tanh %153 : vector<2x32xf32>
    %155 = vector.extract_strided_slice %140 {offsets = [0, 96], sizes = [2, 32], strides = [1, 1]} : vector<2x128xf32> to vector<2x32xf32>
    %156 = arith.negf %155 : vector<2x32xf32>
    %157 = math.exp %156 : vector<2x32xf32>
    %cst_50 = arith.constant 1.000000e+00 : f32
    %158 = vector.broadcast %cst_50 : f32 to vector<2x32xf32>
    %159 = arith.addf %158, %157 : vector<2x32xf32>
    %160 = arith.divf %158, %159 : vector<2x32xf32>
    %161 = arith.mulf %152, %136 : vector<2x32xf32>
    %162 = arith.mulf %146, %154 : vector<2x32xf32>
    %163 = arith.addf %161, %162 : vector<2x32xf32>
    %164 = math.tanh %163 : vector<2x32xf32>
    %165 = arith.mulf %160, %164 : vector<2x32xf32>
    %cst_51 = arith.constant dense<0.000000e+00> : vector<2x128xf32>
    %166 = tpu.matmul %165, %40, %cst_51 {dimension_numbers = #tpu.dot_dimension_numbers<[1], [0], [0], [1], [0, 0, 1, 1], [], []>} : vector<2x32xf32>, vector<32x128xf32>, vector<2x128xf32> -> vector<2x128xf32>
    %167 = arith.addf %31, %166 : vector<2x128xf32>
    %168 = vector.extract_strided_slice %167 {offsets = [0, 0], sizes = [2, 32], strides = [1, 1]} : vector<2x128xf32> to vector<2x32xf32>
    %169 = arith.negf %168 : vector<2x32xf32>
    %170 = math.exp %169 : vector<2x32xf32>
    %cst_52 = arith.constant 1.000000e+00 : f32
    %171 = vector.broadcast %cst_52 : f32 to vector<2x32xf32>
    %172 = arith.addf %171, %170 : vector<2x32xf32>
    %173 = arith.divf %171, %172 : vector<2x32xf32>
    %174 = vector.extract_strided_slice %167 {offsets = [0, 32], sizes = [2, 32], strides = [1, 1]} : vector<2x128xf32> to vector<2x32xf32>
    %175 = arith.negf %174 : vector<2x32xf32>
    %176 = math.exp %175 : vector<2x32xf32>
    %cst_53 = arith.constant 1.000000e+00 : f32
    %177 = vector.broadcast %cst_53 : f32 to vector<2x32xf32>
    %178 = arith.addf %177, %176 : vector<2x32xf32>
    %179 = arith.divf %177, %178 : vector<2x32xf32>
    %180 = vector.extract_strided_slice %167 {offsets = [0, 64], sizes = [2, 32], strides = [1, 1]} : vector<2x128xf32> to vector<2x32xf32>
    %181 = math.tanh %180 : vector<2x32xf32>
    %182 = vector.extract_strided_slice %167 {offsets = [0, 96], sizes = [2, 32], strides = [1, 1]} : vector<2x128xf32> to vector<2x32xf32>
    %183 = arith.negf %182 : vector<2x32xf32>
    %184 = math.exp %183 : vector<2x32xf32>
    %cst_54 = arith.constant 1.000000e+00 : f32
    %185 = vector.broadcast %cst_54 : f32 to vector<2x32xf32>
    %186 = arith.addf %185, %184 : vector<2x32xf32>
    %187 = arith.divf %185, %186 : vector<2x32xf32>
    %188 = arith.mulf %179, %163 : vector<2x32xf32>
    %189 = arith.mulf %173, %181 : vector<2x32xf32>
    %190 = arith.addf %188, %189 : vector<2x32xf32>
    %191 = math.tanh %190 : vector<2x32xf32>
    %192 = arith.mulf %187, %191 : vector<2x32xf32>
    %cst_55 = arith.constant dense<0.000000e+00> : vector<2x128xf32>
    %193 = tpu.matmul %192, %40, %cst_55 {dimension_numbers = #tpu.dot_dimension_numbers<[1], [0], [0], [1], [0, 0, 1, 1], [], []>} : vector<2x32xf32>, vector<32x128xf32>, vector<2x128xf32> -> vector<2x128xf32>
    %194 = arith.addf %35, %193 : vector<2x128xf32>
    %195 = vector.extract_strided_slice %194 {offsets = [0, 0], sizes = [2, 32], strides = [1, 1]} : vector<2x128xf32> to vector<2x32xf32>
    %196 = arith.negf %195 : vector<2x32xf32>
    %197 = math.exp %196 : vector<2x32xf32>
    %cst_56 = arith.constant 1.000000e+00 : f32
    %198 = vector.broadcast %cst_56 : f32 to vector<2x32xf32>
    %199 = arith.addf %198, %197 : vector<2x32xf32>
    %200 = arith.divf %198, %199 : vector<2x32xf32>
    %201 = vector.extract_strided_slice %194 {offsets = [0, 32], sizes = [2, 32], strides = [1, 1]} : vector<2x128xf32> to vector<2x32xf32>
    %202 = arith.negf %201 : vector<2x32xf32>
    %203 = math.exp %202 : vector<2x32xf32>
    %cst_57 = arith.constant 1.000000e+00 : f32
    %204 = vector.broadcast %cst_57 : f32 to vector<2x32xf32>
    %205 = arith.addf %204, %203 : vector<2x32xf32>
    %206 = arith.divf %204, %205 : vector<2x32xf32>
    %207 = vector.extract_strided_slice %194 {offsets = [0, 64], sizes = [2, 32], strides = [1, 1]} : vector<2x128xf32> to vector<2x32xf32>
    %208 = math.tanh %207 : vector<2x32xf32>
    %209 = vector.extract_strided_slice %194 {offsets = [0, 96], sizes = [2, 32], strides = [1, 1]} : vector<2x128xf32> to vector<2x32xf32>
    %210 = arith.negf %209 : vector<2x32xf32>
    %211 = math.exp %210 : vector<2x32xf32>
    %cst_58 = arith.constant 1.000000e+00 : f32
    %212 = vector.broadcast %cst_58 : f32 to vector<2x32xf32>
    %213 = arith.addf %212, %211 : vector<2x32xf32>
    %214 = arith.divf %212, %213 : vector<2x32xf32>
    %215 = arith.mulf %206, %190 : vector<2x32xf32>
    %216 = arith.mulf %200, %208 : vector<2x32xf32>
    %217 = arith.addf %215, %216 : vector<2x32xf32>
    %218 = math.tanh %217 : vector<2x32xf32>
    %219 = arith.mulf %214, %218 : vector<2x32xf32>
    %cst_59 = arith.constant dense<0.000000e+00> : vector<2x128xf32>
    %220 = tpu.matmul %219, %40, %cst_59 {dimension_numbers = #tpu.dot_dimension_numbers<[1], [0], [0], [1], [0, 0, 1, 1], [], []>} : vector<2x32xf32>, vector<32x128xf32>, vector<2x128xf32> -> vector<2x128xf32>
    %221 = arith.addf %39, %220 : vector<2x128xf32>
    %222 = vector.extract_strided_slice %221 {offsets = [0, 0], sizes = [2, 32], strides = [1, 1]} : vector<2x128xf32> to vector<2x32xf32>
    %223 = arith.negf %222 : vector<2x32xf32>
    %224 = math.exp %223 : vector<2x32xf32>
    %cst_60 = arith.constant 1.000000e+00 : f32
    %225 = vector.broadcast %cst_60 : f32 to vector<2x32xf32>
    %226 = arith.addf %225, %224 : vector<2x32xf32>
    %227 = arith.divf %225, %226 : vector<2x32xf32>
    %228 = vector.extract_strided_slice %221 {offsets = [0, 32], sizes = [2, 32], strides = [1, 1]} : vector<2x128xf32> to vector<2x32xf32>
    %229 = arith.negf %228 : vector<2x32xf32>
    %230 = math.exp %229 : vector<2x32xf32>
    %cst_61 = arith.constant 1.000000e+00 : f32
    %231 = vector.broadcast %cst_61 : f32 to vector<2x32xf32>
    %232 = arith.addf %231, %230 : vector<2x32xf32>
    %233 = arith.divf %231, %232 : vector<2x32xf32>
    %234 = vector.extract_strided_slice %221 {offsets = [0, 64], sizes = [2, 32], strides = [1, 1]} : vector<2x128xf32> to vector<2x32xf32>
    %235 = math.tanh %234 : vector<2x32xf32>
    %236 = vector.extract_strided_slice %221 {offsets = [0, 96], sizes = [2, 32], strides = [1, 1]} : vector<2x128xf32> to vector<2x32xf32>
    %237 = arith.negf %236 : vector<2x32xf32>
    %238 = math.exp %237 : vector<2x32xf32>
    %cst_62 = arith.constant 1.000000e+00 : f32
    %239 = vector.broadcast %cst_62 : f32 to vector<2x32xf32>
    %240 = arith.addf %239, %238 : vector<2x32xf32>
    %241 = arith.divf %239, %240 : vector<2x32xf32>
    %242 = arith.mulf %233, %217 : vector<2x32xf32>
    %243 = arith.mulf %227, %235 : vector<2x32xf32>
    %244 = arith.addf %242, %243 : vector<2x32xf32>
    %245 = math.tanh %244 : vector<2x32xf32>
    %246 = arith.mulf %241, %245 : vector<2x32xf32>
    %c7_63 = arith.constant 7 : index
    %c0_64 = arith.constant 0 : index
    %c0_65 = arith.constant 0 : index
    %247 = vector.load %arg0[%c7_63, %c0_64, %c0_65] : memref<8x2x16xf32, #tpu.memory_space<vmem>>, vector<1x2x16xf32>
    %248 = vector.shape_cast %247 : vector<1x2x16xf32> to vector<2x16xf32>
    %cst_66 = arith.constant dense<0.000000e+00> : vector<2x128xf32>
    %249 = tpu.matmul %248, %7, %cst_66 {dimension_numbers = #tpu.dot_dimension_numbers<[1], [0], [0], [1], [0, 0, 1, 1], [], []>} : vector<2x16xf32>, vector<16x128xf32>, vector<2x128xf32> -> vector<2x128xf32>
    %250 = arith.addf %249, %5 : vector<2x128xf32>
    %c6_67 = arith.constant 6 : index
    %c0_68 = arith.constant 0 : index
    %c0_69 = arith.constant 0 : index
    %251 = vector.load %arg0[%c6_67, %c0_68, %c0_69] : memref<8x2x16xf32, #tpu.memory_space<vmem>>, vector<1x2x16xf32>
    %252 = vector.shape_cast %251 : vector<1x2x16xf32> to vector<2x16xf32>
    %cst_70 = arith.constant dense<0.000000e+00> : vector<2x128xf32>
    %253 = tpu.matmul %252, %7, %cst_70 {dimension_numbers = #tpu.dot_dimension_numbers<[1], [0], [0], [1], [0, 0, 1, 1], [], []>} : vector<2x16xf32>, vector<16x128xf32>, vector<2x128xf32> -> vector<2x128xf32>
    %254 = arith.addf %253, %5 : vector<2x128xf32>
    %c5_71 = arith.constant 5 : index
    %c0_72 = arith.constant 0 : index
    %c0_73 = arith.constant 0 : index
    %255 = vector.load %arg0[%c5_71, %c0_72, %c0_73] : memref<8x2x16xf32, #tpu.memory_space<vmem>>, vector<1x2x16xf32>
    %256 = vector.shape_cast %255 : vector<1x2x16xf32> to vector<2x16xf32>
    %cst_74 = arith.constant dense<0.000000e+00> : vector<2x128xf32>
    %257 = tpu.matmul %256, %7, %cst_74 {dimension_numbers = #tpu.dot_dimension_numbers<[1], [0], [0], [1], [0, 0, 1, 1], [], []>} : vector<2x16xf32>, vector<16x128xf32>, vector<2x128xf32> -> vector<2x128xf32>
    %258 = arith.addf %257, %5 : vector<2x128xf32>
    %c4_75 = arith.constant 4 : index
    %c0_76 = arith.constant 0 : index
    %c0_77 = arith.constant 0 : index
    %259 = vector.load %arg0[%c4_75, %c0_76, %c0_77] : memref<8x2x16xf32, #tpu.memory_space<vmem>>, vector<1x2x16xf32>
    %260 = vector.shape_cast %259 : vector<1x2x16xf32> to vector<2x16xf32>
    %cst_78 = arith.constant dense<0.000000e+00> : vector<2x128xf32>
    %261 = tpu.matmul %260, %7, %cst_78 {dimension_numbers = #tpu.dot_dimension_numbers<[1], [0], [0], [1], [0, 0, 1, 1], [], []>} : vector<2x16xf32>, vector<16x128xf32>, vector<2x128xf32> -> vector<2x128xf32>
    %262 = arith.addf %261, %5 : vector<2x128xf32>
    %c3_79 = arith.constant 3 : index
    %c0_80 = arith.constant 0 : index
    %c0_81 = arith.constant 0 : index
    %263 = vector.load %arg0[%c3_79, %c0_80, %c0_81] : memref<8x2x16xf32, #tpu.memory_space<vmem>>, vector<1x2x16xf32>
    %264 = vector.shape_cast %263 : vector<1x2x16xf32> to vector<2x16xf32>
    %cst_82 = arith.constant dense<0.000000e+00> : vector<2x128xf32>
    %265 = tpu.matmul %264, %7, %cst_82 {dimension_numbers = #tpu.dot_dimension_numbers<[1], [0], [0], [1], [0, 0, 1, 1], [], []>} : vector<2x16xf32>, vector<16x128xf32>, vector<2x128xf32> -> vector<2x128xf32>
    %266 = arith.addf %265, %5 : vector<2x128xf32>
    %c2_83 = arith.constant 2 : index
    %c0_84 = arith.constant 0 : index
    %c0_85 = arith.constant 0 : index
    %267 = vector.load %arg0[%c2_83, %c0_84, %c0_85] : memref<8x2x16xf32, #tpu.memory_space<vmem>>, vector<1x2x16xf32>
    %268 = vector.shape_cast %267 : vector<1x2x16xf32> to vector<2x16xf32>
    %cst_86 = arith.constant dense<0.000000e+00> : vector<2x128xf32>
    %269 = tpu.matmul %268, %7, %cst_86 {dimension_numbers = #tpu.dot_dimension_numbers<[1], [0], [0], [1], [0, 0, 1, 1], [], []>} : vector<2x16xf32>, vector<16x128xf32>, vector<2x128xf32> -> vector<2x128xf32>
    %270 = arith.addf %269, %5 : vector<2x128xf32>
    %c1_87 = arith.constant 1 : index
    %c0_88 = arith.constant 0 : index
    %c0_89 = arith.constant 0 : index
    %271 = vector.load %arg0[%c1_87, %c0_88, %c0_89] : memref<8x2x16xf32, #tpu.memory_space<vmem>>, vector<1x2x16xf32>
    %272 = vector.shape_cast %271 : vector<1x2x16xf32> to vector<2x16xf32>
    %cst_90 = arith.constant dense<0.000000e+00> : vector<2x128xf32>
    %273 = tpu.matmul %272, %7, %cst_90 {dimension_numbers = #tpu.dot_dimension_numbers<[1], [0], [0], [1], [0, 0, 1, 1], [], []>} : vector<2x16xf32>, vector<16x128xf32>, vector<2x128xf32> -> vector<2x128xf32>
    %274 = arith.addf %273, %5 : vector<2x128xf32>
    %c0_91 = arith.constant 0 : index
    %c0_92 = arith.constant 0 : index
    %c0_93 = arith.constant 0 : index
    %275 = vector.load %arg0[%c0_91, %c0_92, %c0_93] : memref<8x2x16xf32, #tpu.memory_space<vmem>>, vector<1x2x16xf32>
    %276 = vector.shape_cast %275 : vector<1x2x16xf32> to vector<2x16xf32>
    %cst_94 = arith.constant dense<0.000000e+00> : vector<2x128xf32>
    %277 = tpu.matmul %276, %7, %cst_94 {dimension_numbers = #tpu.dot_dimension_numbers<[1], [0], [0], [1], [0, 0, 1, 1], [], []>} : vector<2x16xf32>, vector<16x128xf32>, vector<2x128xf32> -> vector<2x128xf32>
    %278 = arith.addf %277, %5 : vector<2x128xf32>
    %c0_95 = arith.constant 0 : index
    %c0_96 = arith.constant 0 : index
    %279 = vector.load %arg5[%c0_95, %c0_96] : memref<32x128xf32, #tpu.memory_space<vmem>>, vector<32x128xf32>
    %280 = vector.extract_strided_slice %250 {offsets = [0, 0], sizes = [2, 32], strides = [1, 1]} : vector<2x128xf32> to vector<2x32xf32>
    %281 = arith.negf %280 : vector<2x32xf32>
    %282 = math.exp %281 : vector<2x32xf32>
    %cst_97 = arith.constant 1.000000e+00 : f32
    %283 = vector.broadcast %cst_97 : f32 to vector<2x32xf32>
    %284 = arith.addf %283, %282 : vector<2x32xf32>
    %285 = arith.divf %283, %284 : vector<2x32xf32>
    %286 = vector.extract_strided_slice %250 {offsets = [0, 64], sizes = [2, 32], strides = [1, 1]} : vector<2x128xf32> to vector<2x32xf32>
    %287 = math.tanh %286 : vector<2x32xf32>
    %288 = vector.extract_strided_slice %250 {offsets = [0, 96], sizes = [2, 32], strides = [1, 1]} : vector<2x128xf32> to vector<2x32xf32>
    %289 = arith.negf %288 : vector<2x32xf32>
    %290 = math.exp %289 : vector<2x32xf32>
    %cst_98 = arith.constant 1.000000e+00 : f32
    %291 = vector.broadcast %cst_98 : f32 to vector<2x32xf32>
    %292 = arith.addf %291, %290 : vector<2x32xf32>
    %293 = arith.divf %291, %292 : vector<2x32xf32>
    %294 = arith.mulf %285, %287 : vector<2x32xf32>
    %295 = math.tanh %294 : vector<2x32xf32>
    %296 = arith.mulf %293, %295 : vector<2x32xf32>
    %cst_99 = arith.constant dense<0.000000e+00> : vector<2x128xf32>
    %297 = tpu.matmul %296, %279, %cst_99 {dimension_numbers = #tpu.dot_dimension_numbers<[1], [0], [0], [1], [0, 0, 1, 1], [], []>} : vector<2x32xf32>, vector<32x128xf32>, vector<2x128xf32> -> vector<2x128xf32>
    %298 = arith.addf %254, %297 : vector<2x128xf32>
    %299 = vector.extract_strided_slice %298 {offsets = [0, 0], sizes = [2, 32], strides = [1, 1]} : vector<2x128xf32> to vector<2x32xf32>
    %300 = arith.negf %299 : vector<2x32xf32>
    %301 = math.exp %300 : vector<2x32xf32>
    %cst_100 = arith.constant 1.000000e+00 : f32
    %302 = vector.broadcast %cst_100 : f32 to vector<2x32xf32>
    %303 = arith.addf %302, %301 : vector<2x32xf32>
    %304 = arith.divf %302, %303 : vector<2x32xf32>
    %305 = vector.extract_strided_slice %298 {offsets = [0, 32], sizes = [2, 32], strides = [1, 1]} : vector<2x128xf32> to vector<2x32xf32>
    %306 = arith.negf %305 : vector<2x32xf32>
    %307 = math.exp %306 : vector<2x32xf32>
    %cst_101 = arith.constant 1.000000e+00 : f32
    %308 = vector.broadcast %cst_101 : f32 to vector<2x32xf32>
    %309 = arith.addf %308, %307 : vector<2x32xf32>
    %310 = arith.divf %308, %309 : vector<2x32xf32>
    %311 = vector.extract_strided_slice %298 {offsets = [0, 64], sizes = [2, 32], strides = [1, 1]} : vector<2x128xf32> to vector<2x32xf32>
    %312 = math.tanh %311 : vector<2x32xf32>
    %313 = vector.extract_strided_slice %298 {offsets = [0, 96], sizes = [2, 32], strides = [1, 1]} : vector<2x128xf32> to vector<2x32xf32>
    %314 = arith.negf %313 : vector<2x32xf32>
    %315 = math.exp %314 : vector<2x32xf32>
    %cst_102 = arith.constant 1.000000e+00 : f32
    %316 = vector.broadcast %cst_102 : f32 to vector<2x32xf32>
    %317 = arith.addf %316, %315 : vector<2x32xf32>
    %318 = arith.divf %316, %317 : vector<2x32xf32>
    %319 = arith.mulf %310, %294 : vector<2x32xf32>
    %320 = arith.mulf %304, %312 : vector<2x32xf32>
    %321 = arith.addf %319, %320 : vector<2x32xf32>
    %322 = math.tanh %321 : vector<2x32xf32>
    %323 = arith.mulf %318, %322 : vector<2x32xf32>
    %cst_103 = arith.constant dense<0.000000e+00> : vector<2x128xf32>
    %324 = tpu.matmul %323, %279, %cst_103 {dimension_numbers = #tpu.dot_dimension_numbers<[1], [0], [0], [1], [0, 0, 1, 1], [], []>} : vector<2x32xf32>, vector<32x128xf32>, vector<2x128xf32> -> vector<2x128xf32>
    %325 = arith.addf %258, %324 : vector<2x128xf32>
    %326 = vector.extract_strided_slice %325 {offsets = [0, 0], sizes = [2, 32], strides = [1, 1]} : vector<2x128xf32> to vector<2x32xf32>
    %327 = arith.negf %326 : vector<2x32xf32>
    %328 = math.exp %327 : vector<2x32xf32>
    %cst_104 = arith.constant 1.000000e+00 : f32
    %329 = vector.broadcast %cst_104 : f32 to vector<2x32xf32>
    %330 = arith.addf %329, %328 : vector<2x32xf32>
    %331 = arith.divf %329, %330 : vector<2x32xf32>
    %332 = vector.extract_strided_slice %325 {offsets = [0, 32], sizes = [2, 32], strides = [1, 1]} : vector<2x128xf32> to vector<2x32xf32>
    %333 = arith.negf %332 : vector<2x32xf32>
    %334 = math.exp %333 : vector<2x32xf32>
    %cst_105 = arith.constant 1.000000e+00 : f32
    %335 = vector.broadcast %cst_105 : f32 to vector<2x32xf32>
    %336 = arith.addf %335, %334 : vector<2x32xf32>
    %337 = arith.divf %335, %336 : vector<2x32xf32>
    %338 = vector.extract_strided_slice %325 {offsets = [0, 64], sizes = [2, 32], strides = [1, 1]} : vector<2x128xf32> to vector<2x32xf32>
    %339 = math.tanh %338 : vector<2x32xf32>
    %340 = vector.extract_strided_slice %325 {offsets = [0, 96], sizes = [2, 32], strides = [1, 1]} : vector<2x128xf32> to vector<2x32xf32>
    %341 = arith.negf %340 : vector<2x32xf32>
    %342 = math.exp %341 : vector<2x32xf32>
    %cst_106 = arith.constant 1.000000e+00 : f32
    %343 = vector.broadcast %cst_106 : f32 to vector<2x32xf32>
    %344 = arith.addf %343, %342 : vector<2x32xf32>
    %345 = arith.divf %343, %344 : vector<2x32xf32>
    %346 = arith.mulf %337, %321 : vector<2x32xf32>
    %347 = arith.mulf %331, %339 : vector<2x32xf32>
    %348 = arith.addf %346, %347 : vector<2x32xf32>
    %349 = math.tanh %348 : vector<2x32xf32>
    %350 = arith.mulf %345, %349 : vector<2x32xf32>
    %cst_107 = arith.constant dense<0.000000e+00> : vector<2x128xf32>
    %351 = tpu.matmul %350, %279, %cst_107 {dimension_numbers = #tpu.dot_dimension_numbers<[1], [0], [0], [1], [0, 0, 1, 1], [], []>} : vector<2x32xf32>, vector<32x128xf32>, vector<2x128xf32> -> vector<2x128xf32>
    %352 = arith.addf %262, %351 : vector<2x128xf32>
    %353 = vector.extract_strided_slice %352 {offsets = [0, 0], sizes = [2, 32], strides = [1, 1]} : vector<2x128xf32> to vector<2x32xf32>
    %354 = arith.negf %353 : vector<2x32xf32>
    %355 = math.exp %354 : vector<2x32xf32>
    %cst_108 = arith.constant 1.000000e+00 : f32
    %356 = vector.broadcast %cst_108 : f32 to vector<2x32xf32>
    %357 = arith.addf %356, %355 : vector<2x32xf32>
    %358 = arith.divf %356, %357 : vector<2x32xf32>
    %359 = vector.extract_strided_slice %352 {offsets = [0, 32], sizes = [2, 32], strides = [1, 1]} : vector<2x128xf32> to vector<2x32xf32>
    %360 = arith.negf %359 : vector<2x32xf32>
    %361 = math.exp %360 : vector<2x32xf32>
    %cst_109 = arith.constant 1.000000e+00 : f32
    %362 = vector.broadcast %cst_109 : f32 to vector<2x32xf32>
    %363 = arith.addf %362, %361 : vector<2x32xf32>
    %364 = arith.divf %362, %363 : vector<2x32xf32>
    %365 = vector.extract_strided_slice %352 {offsets = [0, 64], sizes = [2, 32], strides = [1, 1]} : vector<2x128xf32> to vector<2x32xf32>
    %366 = math.tanh %365 : vector<2x32xf32>
    %367 = vector.extract_strided_slice %352 {offsets = [0, 96], sizes = [2, 32], strides = [1, 1]} : vector<2x128xf32> to vector<2x32xf32>
    %368 = arith.negf %367 : vector<2x32xf32>
    %369 = math.exp %368 : vector<2x32xf32>
    %cst_110 = arith.constant 1.000000e+00 : f32
    %370 = vector.broadcast %cst_110 : f32 to vector<2x32xf32>
    %371 = arith.addf %370, %369 : vector<2x32xf32>
    %372 = arith.divf %370, %371 : vector<2x32xf32>
    %373 = arith.mulf %364, %348 : vector<2x32xf32>
    %374 = arith.mulf %358, %366 : vector<2x32xf32>
    %375 = arith.addf %373, %374 : vector<2x32xf32>
    %376 = math.tanh %375 : vector<2x32xf32>
    %377 = arith.mulf %372, %376 : vector<2x32xf32>
    %cst_111 = arith.constant dense<0.000000e+00> : vector<2x128xf32>
    %378 = tpu.matmul %377, %279, %cst_111 {dimension_numbers = #tpu.dot_dimension_numbers<[1], [0], [0], [1], [0, 0, 1, 1], [], []>} : vector<2x32xf32>, vector<32x128xf32>, vector<2x128xf32> -> vector<2x128xf32>
    %379 = arith.addf %266, %378 : vector<2x128xf32>
    %380 = vector.extract_strided_slice %379 {offsets = [0, 0], sizes = [2, 32], strides = [1, 1]} : vector<2x128xf32> to vector<2x32xf32>
    %381 = arith.negf %380 : vector<2x32xf32>
    %382 = math.exp %381 : vector<2x32xf32>
    %cst_112 = arith.constant 1.000000e+00 : f32
    %383 = vector.broadcast %cst_112 : f32 to vector<2x32xf32>
    %384 = arith.addf %383, %382 : vector<2x32xf32>
    %385 = arith.divf %383, %384 : vector<2x32xf32>
    %386 = vector.extract_strided_slice %379 {offsets = [0, 32], sizes = [2, 32], strides = [1, 1]} : vector<2x128xf32> to vector<2x32xf32>
    %387 = arith.negf %386 : vector<2x32xf32>
    %388 = math.exp %387 : vector<2x32xf32>
    %cst_113 = arith.constant 1.000000e+00 : f32
    %389 = vector.broadcast %cst_113 : f32 to vector<2x32xf32>
    %390 = arith.addf %389, %388 : vector<2x32xf32>
    %391 = arith.divf %389, %390 : vector<2x32xf32>
    %392 = vector.extract_strided_slice %379 {offsets = [0, 64], sizes = [2, 32], strides = [1, 1]} : vector<2x128xf32> to vector<2x32xf32>
    %393 = math.tanh %392 : vector<2x32xf32>
    %394 = vector.extract_strided_slice %379 {offsets = [0, 96], sizes = [2, 32], strides = [1, 1]} : vector<2x128xf32> to vector<2x32xf32>
    %395 = arith.negf %394 : vector<2x32xf32>
    %396 = math.exp %395 : vector<2x32xf32>
    %cst_114 = arith.constant 1.000000e+00 : f32
    %397 = vector.broadcast %cst_114 : f32 to vector<2x32xf32>
    %398 = arith.addf %397, %396 : vector<2x32xf32>
    %399 = arith.divf %397, %398 : vector<2x32xf32>
    %400 = arith.mulf %391, %375 : vector<2x32xf32>
    %401 = arith.mulf %385, %393 : vector<2x32xf32>
    %402 = arith.addf %400, %401 : vector<2x32xf32>
    %403 = math.tanh %402 : vector<2x32xf32>
    %404 = arith.mulf %399, %403 : vector<2x32xf32>
    %cst_115 = arith.constant dense<0.000000e+00> : vector<2x128xf32>
    %405 = tpu.matmul %404, %279, %cst_115 {dimension_numbers = #tpu.dot_dimension_numbers<[1], [0], [0], [1], [0, 0, 1, 1], [], []>} : vector<2x32xf32>, vector<32x128xf32>, vector<2x128xf32> -> vector<2x128xf32>
    %406 = arith.addf %270, %405 : vector<2x128xf32>
    %407 = vector.extract_strided_slice %406 {offsets = [0, 0], sizes = [2, 32], strides = [1, 1]} : vector<2x128xf32> to vector<2x32xf32>
    %408 = arith.negf %407 : vector<2x32xf32>
    %409 = math.exp %408 : vector<2x32xf32>
    %cst_116 = arith.constant 1.000000e+00 : f32
    %410 = vector.broadcast %cst_116 : f32 to vector<2x32xf32>
    %411 = arith.addf %410, %409 : vector<2x32xf32>
    %412 = arith.divf %410, %411 : vector<2x32xf32>
    %413 = vector.extract_strided_slice %406 {offsets = [0, 32], sizes = [2, 32], strides = [1, 1]} : vector<2x128xf32> to vector<2x32xf32>
    %414 = arith.negf %413 : vector<2x32xf32>
    %415 = math.exp %414 : vector<2x32xf32>
    %cst_117 = arith.constant 1.000000e+00 : f32
    %416 = vector.broadcast %cst_117 : f32 to vector<2x32xf32>
    %417 = arith.addf %416, %415 : vector<2x32xf32>
    %418 = arith.divf %416, %417 : vector<2x32xf32>
    %419 = vector.extract_strided_slice %406 {offsets = [0, 64], sizes = [2, 32], strides = [1, 1]} : vector<2x128xf32> to vector<2x32xf32>
    %420 = math.tanh %419 : vector<2x32xf32>
    %421 = vector.extract_strided_slice %406 {offsets = [0, 96], sizes = [2, 32], strides = [1, 1]} : vector<2x128xf32> to vector<2x32xf32>
    %422 = arith.negf %421 : vector<2x32xf32>
    %423 = math.exp %422 : vector<2x32xf32>
    %cst_118 = arith.constant 1.000000e+00 : f32
    %424 = vector.broadcast %cst_118 : f32 to vector<2x32xf32>
    %425 = arith.addf %424, %423 : vector<2x32xf32>
    %426 = arith.divf %424, %425 : vector<2x32xf32>
    %427 = arith.mulf %418, %402 : vector<2x32xf32>
    %428 = arith.mulf %412, %420 : vector<2x32xf32>
    %429 = arith.addf %427, %428 : vector<2x32xf32>
    %430 = math.tanh %429 : vector<2x32xf32>
    %431 = arith.mulf %426, %430 : vector<2x32xf32>
    %cst_119 = arith.constant dense<0.000000e+00> : vector<2x128xf32>
    %432 = tpu.matmul %431, %279, %cst_119 {dimension_numbers = #tpu.dot_dimension_numbers<[1], [0], [0], [1], [0, 0, 1, 1], [], []>} : vector<2x32xf32>, vector<32x128xf32>, vector<2x128xf32> -> vector<2x128xf32>
    %433 = arith.addf %274, %432 : vector<2x128xf32>
    %434 = vector.extract_strided_slice %433 {offsets = [0, 0], sizes = [2, 32], strides = [1, 1]} : vector<2x128xf32> to vector<2x32xf32>
    %435 = arith.negf %434 : vector<2x32xf32>
    %436 = math.exp %435 : vector<2x32xf32>
    %cst_120 = arith.constant 1.000000e+00 : f32
    %437 = vector.broadcast %cst_120 : f32 to vector<2x32xf32>
    %438 = arith.addf %437, %436 : vector<2x32xf32>
    %439 = arith.divf %437, %438 : vector<2x32xf32>
    %440 = vector.extract_strided_slice %433 {offsets = [0, 32], sizes = [2, 32], strides = [1, 1]} : vector<2x128xf32> to vector<2x32xf32>
    %441 = arith.negf %440 : vector<2x32xf32>
    %442 = math.exp %441 : vector<2x32xf32>
    %cst_121 = arith.constant 1.000000e+00 : f32
    %443 = vector.broadcast %cst_121 : f32 to vector<2x32xf32>
    %444 = arith.addf %443, %442 : vector<2x32xf32>
    %445 = arith.divf %443, %444 : vector<2x32xf32>
    %446 = vector.extract_strided_slice %433 {offsets = [0, 64], sizes = [2, 32], strides = [1, 1]} : vector<2x128xf32> to vector<2x32xf32>
    %447 = math.tanh %446 : vector<2x32xf32>
    %448 = vector.extract_strided_slice %433 {offsets = [0, 96], sizes = [2, 32], strides = [1, 1]} : vector<2x128xf32> to vector<2x32xf32>
    %449 = arith.negf %448 : vector<2x32xf32>
    %450 = math.exp %449 : vector<2x32xf32>
    %cst_122 = arith.constant 1.000000e+00 : f32
    %451 = vector.broadcast %cst_122 : f32 to vector<2x32xf32>
    %452 = arith.addf %451, %450 : vector<2x32xf32>
    %453 = arith.divf %451, %452 : vector<2x32xf32>
    %454 = arith.mulf %445, %429 : vector<2x32xf32>
    %455 = arith.mulf %439, %447 : vector<2x32xf32>
    %456 = arith.addf %454, %455 : vector<2x32xf32>
    %457 = math.tanh %456 : vector<2x32xf32>
    %458 = arith.mulf %453, %457 : vector<2x32xf32>
    %cst_123 = arith.constant dense<0.000000e+00> : vector<2x128xf32>
    %459 = tpu.matmul %458, %279, %cst_123 {dimension_numbers = #tpu.dot_dimension_numbers<[1], [0], [0], [1], [0, 0, 1, 1], [], []>} : vector<2x32xf32>, vector<32x128xf32>, vector<2x128xf32> -> vector<2x128xf32>
    %460 = arith.addf %278, %459 : vector<2x128xf32>
    %461 = vector.extract_strided_slice %460 {offsets = [0, 0], sizes = [2, 32], strides = [1, 1]} : vector<2x128xf32> to vector<2x32xf32>
    %462 = arith.negf %461 : vector<2x32xf32>
    %463 = math.exp %462 : vector<2x32xf32>
    %cst_124 = arith.constant 1.000000e+00 : f32
    %464 = vector.broadcast %cst_124 : f32 to vector<2x32xf32>
    %465 = arith.addf %464, %463 : vector<2x32xf32>
    %466 = arith.divf %464, %465 : vector<2x32xf32>
    %467 = vector.extract_strided_slice %460 {offsets = [0, 32], sizes = [2, 32], strides = [1, 1]} : vector<2x128xf32> to vector<2x32xf32>
    %468 = arith.negf %467 : vector<2x32xf32>
    %469 = math.exp %468 : vector<2x32xf32>
    %cst_125 = arith.constant 1.000000e+00 : f32
    %470 = vector.broadcast %cst_125 : f32 to vector<2x32xf32>
    %471 = arith.addf %470, %469 : vector<2x32xf32>
    %472 = arith.divf %470, %471 : vector<2x32xf32>
    %473 = vector.extract_strided_slice %460 {offsets = [0, 64], sizes = [2, 32], strides = [1, 1]} : vector<2x128xf32> to vector<2x32xf32>
    %474 = math.tanh %473 : vector<2x32xf32>
    %475 = vector.extract_strided_slice %460 {offsets = [0, 96], sizes = [2, 32], strides = [1, 1]} : vector<2x128xf32> to vector<2x32xf32>
    %476 = arith.negf %475 : vector<2x32xf32>
    %477 = math.exp %476 : vector<2x32xf32>
    %cst_126 = arith.constant 1.000000e+00 : f32
    %478 = vector.broadcast %cst_126 : f32 to vector<2x32xf32>
    %479 = arith.addf %478, %477 : vector<2x32xf32>
    %480 = arith.divf %478, %479 : vector<2x32xf32>
    %481 = arith.mulf %472, %456 : vector<2x32xf32>
    %482 = arith.mulf %466, %474 : vector<2x32xf32>
    %483 = arith.addf %481, %482 : vector<2x32xf32>
    %484 = math.tanh %483 : vector<2x32xf32>
    %485 = arith.mulf %480, %484 : vector<2x32xf32>
    %c0_127 = arith.constant 0 : index
    %c0_128 = arith.constant 0 : index
    %486 = vector.load %arg9[%c0_127, %c0_128] : memref<1x128xf32, #tpu.memory_space<vmem>>, vector<1x128xf32>
    %487 = vector.shape_cast %486 : vector<1x128xf32> to vector<1x128xf32>
    %488 = vector.broadcast %487 : vector<1x128xf32> to vector<2x128xf32>
    %c0_129 = arith.constant 0 : index
    %c0_130 = arith.constant 0 : index
    %489 = vector.load %arg12[%c0_129, %c0_130] : memref<1x128xf32, #tpu.memory_space<vmem>>, vector<1x128xf32>
    %490 = vector.shape_cast %489 : vector<1x128xf32> to vector<1x128xf32>
    %491 = vector.broadcast %490 : vector<1x128xf32> to vector<2x128xf32>
    %c0_131 = arith.constant 0 : index
    %c0_132 = arith.constant 0 : index
    %492 = vector.load %arg7[%c0_131, %c0_132] : memref<64x128xf32, #tpu.memory_space<vmem>>, vector<32x128xf32>
    %c32 = arith.constant 32 : index
    %c0_133 = arith.constant 0 : index
    %493 = vector.load %arg7[%c32, %c0_133] : memref<64x128xf32, #tpu.memory_space<vmem>>, vector<32x128xf32>
    %c0_134 = arith.constant 0 : index
    %c0_135 = arith.constant 0 : index
    %494 = vector.load %arg10[%c0_134, %c0_135] : memref<64x128xf32, #tpu.memory_space<vmem>>, vector<32x128xf32>
    %c32_136 = arith.constant 32 : index
    %c0_137 = arith.constant 0 : index
    %495 = vector.load %arg10[%c32_136, %c0_137] : memref<64x128xf32, #tpu.memory_space<vmem>>, vector<32x128xf32>
    %cst_138 = arith.constant dense<0.000000e+00> : vector<2x128xf32>
    %496 = tpu.matmul %57, %492, %cst_138 {dimension_numbers = #tpu.dot_dimension_numbers<[1], [0], [0], [1], [0, 0, 1, 1], [], []>} : vector<2x32xf32>, vector<32x128xf32>, vector<2x128xf32> -> vector<2x128xf32>
    %cst_139 = arith.constant dense<0.000000e+00> : vector<2x128xf32>
    %497 = tpu.matmul %485, %493, %cst_139 {dimension_numbers = #tpu.dot_dimension_numbers<[1], [0], [0], [1], [0, 0, 1, 1], [], []>} : vector<2x32xf32>, vector<32x128xf32>, vector<2x128xf32> -> vector<2x128xf32>
    %498 = arith.addf %496, %497 : vector<2x128xf32>
    %499 = arith.addf %498, %488 : vector<2x128xf32>
    %cst_140 = arith.constant dense<0.000000e+00> : vector<2x128xf32>
    %500 = tpu.matmul %84, %492, %cst_140 {dimension_numbers = #tpu.dot_dimension_numbers<[1], [0], [0], [1], [0, 0, 1, 1], [], []>} : vector<2x32xf32>, vector<32x128xf32>, vector<2x128xf32> -> vector<2x128xf32>
    %cst_141 = arith.constant dense<0.000000e+00> : vector<2x128xf32>
    %501 = tpu.matmul %458, %493, %cst_141 {dimension_numbers = #tpu.dot_dimension_numbers<[1], [0], [0], [1], [0, 0, 1, 1], [], []>} : vector<2x32xf32>, vector<32x128xf32>, vector<2x128xf32> -> vector<2x128xf32>
    %502 = arith.addf %500, %501 : vector<2x128xf32>
    %503 = arith.addf %502, %488 : vector<2x128xf32>
    %cst_142 = arith.constant dense<0.000000e+00> : vector<2x128xf32>
    %504 = tpu.matmul %111, %492, %cst_142 {dimension_numbers = #tpu.dot_dimension_numbers<[1], [0], [0], [1], [0, 0, 1, 1], [], []>} : vector<2x32xf32>, vector<32x128xf32>, vector<2x128xf32> -> vector<2x128xf32>
    %cst_143 = arith.constant dense<0.000000e+00> : vector<2x128xf32>
    %505 = tpu.matmul %431, %493, %cst_143 {dimension_numbers = #tpu.dot_dimension_numbers<[1], [0], [0], [1], [0, 0, 1, 1], [], []>} : vector<2x32xf32>, vector<32x128xf32>, vector<2x128xf32> -> vector<2x128xf32>
    %506 = arith.addf %504, %505 : vector<2x128xf32>
    %507 = arith.addf %506, %488 : vector<2x128xf32>
    %cst_144 = arith.constant dense<0.000000e+00> : vector<2x128xf32>
    %508 = tpu.matmul %138, %492, %cst_144 {dimension_numbers = #tpu.dot_dimension_numbers<[1], [0], [0], [1], [0, 0, 1, 1], [], []>} : vector<2x32xf32>, vector<32x128xf32>, vector<2x128xf32> -> vector<2x128xf32>
    %cst_145 = arith.constant dense<0.000000e+00> : vector<2x128xf32>
    %509 = tpu.matmul %404, %493, %cst_145 {dimension_numbers = #tpu.dot_dimension_numbers<[1], [0], [0], [1], [0, 0, 1, 1], [], []>} : vector<2x32xf32>, vector<32x128xf32>, vector<2x128xf32> -> vector<2x128xf32>
    %510 = arith.addf %508, %509 : vector<2x128xf32>
    %511 = arith.addf %510, %488 : vector<2x128xf32>
    %cst_146 = arith.constant dense<0.000000e+00> : vector<2x128xf32>
    %512 = tpu.matmul %165, %492, %cst_146 {dimension_numbers = #tpu.dot_dimension_numbers<[1], [0], [0], [1], [0, 0, 1, 1], [], []>} : vector<2x32xf32>, vector<32x128xf32>, vector<2x128xf32> -> vector<2x128xf32>
    %cst_147 = arith.constant dense<0.000000e+00> : vector<2x128xf32>
    %513 = tpu.matmul %377, %493, %cst_147 {dimension_numbers = #tpu.dot_dimension_numbers<[1], [0], [0], [1], [0, 0, 1, 1], [], []>} : vector<2x32xf32>, vector<32x128xf32>, vector<2x128xf32> -> vector<2x128xf32>
    %514 = arith.addf %512, %513 : vector<2x128xf32>
    %515 = arith.addf %514, %488 : vector<2x128xf32>
    %cst_148 = arith.constant dense<0.000000e+00> : vector<2x128xf32>
    %516 = tpu.matmul %192, %492, %cst_148 {dimension_numbers = #tpu.dot_dimension_numbers<[1], [0], [0], [1], [0, 0, 1, 1], [], []>} : vector<2x32xf32>, vector<32x128xf32>, vector<2x128xf32> -> vector<2x128xf32>
    %cst_149 = arith.constant dense<0.000000e+00> : vector<2x128xf32>
    %517 = tpu.matmul %350, %493, %cst_149 {dimension_numbers = #tpu.dot_dimension_numbers<[1], [0], [0], [1], [0, 0, 1, 1], [], []>} : vector<2x32xf32>, vector<32x128xf32>, vector<2x128xf32> -> vector<2x128xf32>
    %518 = arith.addf %516, %517 : vector<2x128xf32>
    %519 = arith.addf %518, %488 : vector<2x128xf32>
    %cst_150 = arith.constant dense<0.000000e+00> : vector<2x128xf32>
    %520 = tpu.matmul %219, %492, %cst_150 {dimension_numbers = #tpu.dot_dimension_numbers<[1], [0], [0], [1], [0, 0, 1, 1], [], []>} : vector<2x32xf32>, vector<32x128xf32>, vector<2x128xf32> -> vector<2x128xf32>
    %cst_151 = arith.constant dense<0.000000e+00> : vector<2x128xf32>
    %521 = tpu.matmul %323, %493, %cst_151 {dimension_numbers = #tpu.dot_dimension_numbers<[1], [0], [0], [1], [0, 0, 1, 1], [], []>} : vector<2x32xf32>, vector<32x128xf32>, vector<2x128xf32> -> vector<2x128xf32>
    %522 = arith.addf %520, %521 : vector<2x128xf32>
    %523 = arith.addf %522, %488 : vector<2x128xf32>
    %cst_152 = arith.constant dense<0.000000e+00> : vector<2x128xf32>
    %524 = tpu.matmul %246, %492, %cst_152 {dimension_numbers = #tpu.dot_dimension_numbers<[1], [0], [0], [1], [0, 0, 1, 1], [], []>} : vector<2x32xf32>, vector<32x128xf32>, vector<2x128xf32> -> vector<2x128xf32>
    %cst_153 = arith.constant dense<0.000000e+00> : vector<2x128xf32>
    %525 = tpu.matmul %296, %493, %cst_153 {dimension_numbers = #tpu.dot_dimension_numbers<[1], [0], [0], [1], [0, 0, 1, 1], [], []>} : vector<2x32xf32>, vector<32x128xf32>, vector<2x128xf32> -> vector<2x128xf32>
    %526 = arith.addf %524, %525 : vector<2x128xf32>
    %527 = arith.addf %526, %488 : vector<2x128xf32>
    %c0_154 = arith.constant 0 : index
    %c0_155 = arith.constant 0 : index
    %528 = vector.load %arg8[%c0_154, %c0_155] : memref<32x128xf32, #tpu.memory_space<vmem>>, vector<32x128xf32>
    %529 = vector.extract_strided_slice %499 {offsets = [0, 0], sizes = [2, 32], strides = [1, 1]} : vector<2x128xf32> to vector<2x32xf32>
    %530 = arith.negf %529 : vector<2x32xf32>
    %531 = math.exp %530 : vector<2x32xf32>
    %cst_156 = arith.constant 1.000000e+00 : f32
    %532 = vector.broadcast %cst_156 : f32 to vector<2x32xf32>
    %533 = arith.addf %532, %531 : vector<2x32xf32>
    %534 = arith.divf %532, %533 : vector<2x32xf32>
    %535 = vector.extract_strided_slice %499 {offsets = [0, 64], sizes = [2, 32], strides = [1, 1]} : vector<2x128xf32> to vector<2x32xf32>
    %536 = math.tanh %535 : vector<2x32xf32>
    %537 = vector.extract_strided_slice %499 {offsets = [0, 96], sizes = [2, 32], strides = [1, 1]} : vector<2x128xf32> to vector<2x32xf32>
    %538 = arith.negf %537 : vector<2x32xf32>
    %539 = math.exp %538 : vector<2x32xf32>
    %cst_157 = arith.constant 1.000000e+00 : f32
    %540 = vector.broadcast %cst_157 : f32 to vector<2x32xf32>
    %541 = arith.addf %540, %539 : vector<2x32xf32>
    %542 = arith.divf %540, %541 : vector<2x32xf32>
    %543 = arith.mulf %534, %536 : vector<2x32xf32>
    %544 = math.tanh %543 : vector<2x32xf32>
    %545 = arith.mulf %542, %544 : vector<2x32xf32>
    %cst_158 = arith.constant dense<0.000000e+00> : vector<2x128xf32>
    %546 = tpu.matmul %545, %528, %cst_158 {dimension_numbers = #tpu.dot_dimension_numbers<[1], [0], [0], [1], [0, 0, 1, 1], [], []>} : vector<2x32xf32>, vector<32x128xf32>, vector<2x128xf32> -> vector<2x128xf32>
    %547 = arith.addf %503, %546 : vector<2x128xf32>
    %548 = vector.extract_strided_slice %547 {offsets = [0, 0], sizes = [2, 32], strides = [1, 1]} : vector<2x128xf32> to vector<2x32xf32>
    %549 = arith.negf %548 : vector<2x32xf32>
    %550 = math.exp %549 : vector<2x32xf32>
    %cst_159 = arith.constant 1.000000e+00 : f32
    %551 = vector.broadcast %cst_159 : f32 to vector<2x32xf32>
    %552 = arith.addf %551, %550 : vector<2x32xf32>
    %553 = arith.divf %551, %552 : vector<2x32xf32>
    %554 = vector.extract_strided_slice %547 {offsets = [0, 32], sizes = [2, 32], strides = [1, 1]} : vector<2x128xf32> to vector<2x32xf32>
    %555 = arith.negf %554 : vector<2x32xf32>
    %556 = math.exp %555 : vector<2x32xf32>
    %cst_160 = arith.constant 1.000000e+00 : f32
    %557 = vector.broadcast %cst_160 : f32 to vector<2x32xf32>
    %558 = arith.addf %557, %556 : vector<2x32xf32>
    %559 = arith.divf %557, %558 : vector<2x32xf32>
    %560 = vector.extract_strided_slice %547 {offsets = [0, 64], sizes = [2, 32], strides = [1, 1]} : vector<2x128xf32> to vector<2x32xf32>
    %561 = math.tanh %560 : vector<2x32xf32>
    %562 = vector.extract_strided_slice %547 {offsets = [0, 96], sizes = [2, 32], strides = [1, 1]} : vector<2x128xf32> to vector<2x32xf32>
    %563 = arith.negf %562 : vector<2x32xf32>
    %564 = math.exp %563 : vector<2x32xf32>
    %cst_161 = arith.constant 1.000000e+00 : f32
    %565 = vector.broadcast %cst_161 : f32 to vector<2x32xf32>
    %566 = arith.addf %565, %564 : vector<2x32xf32>
    %567 = arith.divf %565, %566 : vector<2x32xf32>
    %568 = arith.mulf %559, %543 : vector<2x32xf32>
    %569 = arith.mulf %553, %561 : vector<2x32xf32>
    %570 = arith.addf %568, %569 : vector<2x32xf32>
    %571 = math.tanh %570 : vector<2x32xf32>
    %572 = arith.mulf %567, %571 : vector<2x32xf32>
    %cst_162 = arith.constant dense<0.000000e+00> : vector<2x128xf32>
    %573 = tpu.matmul %572, %528, %cst_162 {dimension_numbers = #tpu.dot_dimension_numbers<[1], [0], [0], [1], [0, 0, 1, 1], [], []>} : vector<2x32xf32>, vector<32x128xf32>, vector<2x128xf32> -> vector<2x128xf32>
    %574 = arith.addf %507, %573 : vector<2x128xf32>
    %575 = vector.extract_strided_slice %574 {offsets = [0, 0], sizes = [2, 32], strides = [1, 1]} : vector<2x128xf32> to vector<2x32xf32>
    %576 = arith.negf %575 : vector<2x32xf32>
    %577 = math.exp %576 : vector<2x32xf32>
    %cst_163 = arith.constant 1.000000e+00 : f32
    %578 = vector.broadcast %cst_163 : f32 to vector<2x32xf32>
    %579 = arith.addf %578, %577 : vector<2x32xf32>
    %580 = arith.divf %578, %579 : vector<2x32xf32>
    %581 = vector.extract_strided_slice %574 {offsets = [0, 32], sizes = [2, 32], strides = [1, 1]} : vector<2x128xf32> to vector<2x32xf32>
    %582 = arith.negf %581 : vector<2x32xf32>
    %583 = math.exp %582 : vector<2x32xf32>
    %cst_164 = arith.constant 1.000000e+00 : f32
    %584 = vector.broadcast %cst_164 : f32 to vector<2x32xf32>
    %585 = arith.addf %584, %583 : vector<2x32xf32>
    %586 = arith.divf %584, %585 : vector<2x32xf32>
    %587 = vector.extract_strided_slice %574 {offsets = [0, 64], sizes = [2, 32], strides = [1, 1]} : vector<2x128xf32> to vector<2x32xf32>
    %588 = math.tanh %587 : vector<2x32xf32>
    %589 = vector.extract_strided_slice %574 {offsets = [0, 96], sizes = [2, 32], strides = [1, 1]} : vector<2x128xf32> to vector<2x32xf32>
    %590 = arith.negf %589 : vector<2x32xf32>
    %591 = math.exp %590 : vector<2x32xf32>
    %cst_165 = arith.constant 1.000000e+00 : f32
    %592 = vector.broadcast %cst_165 : f32 to vector<2x32xf32>
    %593 = arith.addf %592, %591 : vector<2x32xf32>
    %594 = arith.divf %592, %593 : vector<2x32xf32>
    %595 = arith.mulf %586, %570 : vector<2x32xf32>
    %596 = arith.mulf %580, %588 : vector<2x32xf32>
    %597 = arith.addf %595, %596 : vector<2x32xf32>
    %598 = math.tanh %597 : vector<2x32xf32>
    %599 = arith.mulf %594, %598 : vector<2x32xf32>
    %cst_166 = arith.constant dense<0.000000e+00> : vector<2x128xf32>
    %600 = tpu.matmul %599, %528, %cst_166 {dimension_numbers = #tpu.dot_dimension_numbers<[1], [0], [0], [1], [0, 0, 1, 1], [], []>} : vector<2x32xf32>, vector<32x128xf32>, vector<2x128xf32> -> vector<2x128xf32>
    %601 = arith.addf %511, %600 : vector<2x128xf32>
    %602 = vector.extract_strided_slice %601 {offsets = [0, 0], sizes = [2, 32], strides = [1, 1]} : vector<2x128xf32> to vector<2x32xf32>
    %603 = arith.negf %602 : vector<2x32xf32>
    %604 = math.exp %603 : vector<2x32xf32>
    %cst_167 = arith.constant 1.000000e+00 : f32
    %605 = vector.broadcast %cst_167 : f32 to vector<2x32xf32>
    %606 = arith.addf %605, %604 : vector<2x32xf32>
    %607 = arith.divf %605, %606 : vector<2x32xf32>
    %608 = vector.extract_strided_slice %601 {offsets = [0, 32], sizes = [2, 32], strides = [1, 1]} : vector<2x128xf32> to vector<2x32xf32>
    %609 = arith.negf %608 : vector<2x32xf32>
    %610 = math.exp %609 : vector<2x32xf32>
    %cst_168 = arith.constant 1.000000e+00 : f32
    %611 = vector.broadcast %cst_168 : f32 to vector<2x32xf32>
    %612 = arith.addf %611, %610 : vector<2x32xf32>
    %613 = arith.divf %611, %612 : vector<2x32xf32>
    %614 = vector.extract_strided_slice %601 {offsets = [0, 64], sizes = [2, 32], strides = [1, 1]} : vector<2x128xf32> to vector<2x32xf32>
    %615 = math.tanh %614 : vector<2x32xf32>
    %616 = vector.extract_strided_slice %601 {offsets = [0, 96], sizes = [2, 32], strides = [1, 1]} : vector<2x128xf32> to vector<2x32xf32>
    %617 = arith.negf %616 : vector<2x32xf32>
    %618 = math.exp %617 : vector<2x32xf32>
    %cst_169 = arith.constant 1.000000e+00 : f32
    %619 = vector.broadcast %cst_169 : f32 to vector<2x32xf32>
    %620 = arith.addf %619, %618 : vector<2x32xf32>
    %621 = arith.divf %619, %620 : vector<2x32xf32>
    %622 = arith.mulf %613, %597 : vector<2x32xf32>
    %623 = arith.mulf %607, %615 : vector<2x32xf32>
    %624 = arith.addf %622, %623 : vector<2x32xf32>
    %625 = math.tanh %624 : vector<2x32xf32>
    %626 = arith.mulf %621, %625 : vector<2x32xf32>
    %cst_170 = arith.constant dense<0.000000e+00> : vector<2x128xf32>
    %627 = tpu.matmul %626, %528, %cst_170 {dimension_numbers = #tpu.dot_dimension_numbers<[1], [0], [0], [1], [0, 0, 1, 1], [], []>} : vector<2x32xf32>, vector<32x128xf32>, vector<2x128xf32> -> vector<2x128xf32>
    %628 = arith.addf %515, %627 : vector<2x128xf32>
    %629 = vector.extract_strided_slice %628 {offsets = [0, 0], sizes = [2, 32], strides = [1, 1]} : vector<2x128xf32> to vector<2x32xf32>
    %630 = arith.negf %629 : vector<2x32xf32>
    %631 = math.exp %630 : vector<2x32xf32>
    %cst_171 = arith.constant 1.000000e+00 : f32
    %632 = vector.broadcast %cst_171 : f32 to vector<2x32xf32>
    %633 = arith.addf %632, %631 : vector<2x32xf32>
    %634 = arith.divf %632, %633 : vector<2x32xf32>
    %635 = vector.extract_strided_slice %628 {offsets = [0, 32], sizes = [2, 32], strides = [1, 1]} : vector<2x128xf32> to vector<2x32xf32>
    %636 = arith.negf %635 : vector<2x32xf32>
    %637 = math.exp %636 : vector<2x32xf32>
    %cst_172 = arith.constant 1.000000e+00 : f32
    %638 = vector.broadcast %cst_172 : f32 to vector<2x32xf32>
    %639 = arith.addf %638, %637 : vector<2x32xf32>
    %640 = arith.divf %638, %639 : vector<2x32xf32>
    %641 = vector.extract_strided_slice %628 {offsets = [0, 64], sizes = [2, 32], strides = [1, 1]} : vector<2x128xf32> to vector<2x32xf32>
    %642 = math.tanh %641 : vector<2x32xf32>
    %643 = vector.extract_strided_slice %628 {offsets = [0, 96], sizes = [2, 32], strides = [1, 1]} : vector<2x128xf32> to vector<2x32xf32>
    %644 = arith.negf %643 : vector<2x32xf32>
    %645 = math.exp %644 : vector<2x32xf32>
    %cst_173 = arith.constant 1.000000e+00 : f32
    %646 = vector.broadcast %cst_173 : f32 to vector<2x32xf32>
    %647 = arith.addf %646, %645 : vector<2x32xf32>
    %648 = arith.divf %646, %647 : vector<2x32xf32>
    %649 = arith.mulf %640, %624 : vector<2x32xf32>
    %650 = arith.mulf %634, %642 : vector<2x32xf32>
    %651 = arith.addf %649, %650 : vector<2x32xf32>
    %652 = math.tanh %651 : vector<2x32xf32>
    %653 = arith.mulf %648, %652 : vector<2x32xf32>
    %cst_174 = arith.constant dense<0.000000e+00> : vector<2x128xf32>
    %654 = tpu.matmul %653, %528, %cst_174 {dimension_numbers = #tpu.dot_dimension_numbers<[1], [0], [0], [1], [0, 0, 1, 1], [], []>} : vector<2x32xf32>, vector<32x128xf32>, vector<2x128xf32> -> vector<2x128xf32>
    %655 = arith.addf %519, %654 : vector<2x128xf32>
    %656 = vector.extract_strided_slice %655 {offsets = [0, 0], sizes = [2, 32], strides = [1, 1]} : vector<2x128xf32> to vector<2x32xf32>
    %657 = arith.negf %656 : vector<2x32xf32>
    %658 = math.exp %657 : vector<2x32xf32>
    %cst_175 = arith.constant 1.000000e+00 : f32
    %659 = vector.broadcast %cst_175 : f32 to vector<2x32xf32>
    %660 = arith.addf %659, %658 : vector<2x32xf32>
    %661 = arith.divf %659, %660 : vector<2x32xf32>
    %662 = vector.extract_strided_slice %655 {offsets = [0, 32], sizes = [2, 32], strides = [1, 1]} : vector<2x128xf32> to vector<2x32xf32>
    %663 = arith.negf %662 : vector<2x32xf32>
    %664 = math.exp %663 : vector<2x32xf32>
    %cst_176 = arith.constant 1.000000e+00 : f32
    %665 = vector.broadcast %cst_176 : f32 to vector<2x32xf32>
    %666 = arith.addf %665, %664 : vector<2x32xf32>
    %667 = arith.divf %665, %666 : vector<2x32xf32>
    %668 = vector.extract_strided_slice %655 {offsets = [0, 64], sizes = [2, 32], strides = [1, 1]} : vector<2x128xf32> to vector<2x32xf32>
    %669 = math.tanh %668 : vector<2x32xf32>
    %670 = vector.extract_strided_slice %655 {offsets = [0, 96], sizes = [2, 32], strides = [1, 1]} : vector<2x128xf32> to vector<2x32xf32>
    %671 = arith.negf %670 : vector<2x32xf32>
    %672 = math.exp %671 : vector<2x32xf32>
    %cst_177 = arith.constant 1.000000e+00 : f32
    %673 = vector.broadcast %cst_177 : f32 to vector<2x32xf32>
    %674 = arith.addf %673, %672 : vector<2x32xf32>
    %675 = arith.divf %673, %674 : vector<2x32xf32>
    %676 = arith.mulf %667, %651 : vector<2x32xf32>
    %677 = arith.mulf %661, %669 : vector<2x32xf32>
    %678 = arith.addf %676, %677 : vector<2x32xf32>
    %679 = math.tanh %678 : vector<2x32xf32>
    %680 = arith.mulf %675, %679 : vector<2x32xf32>
    %cst_178 = arith.constant dense<0.000000e+00> : vector<2x128xf32>
    %681 = tpu.matmul %680, %528, %cst_178 {dimension_numbers = #tpu.dot_dimension_numbers<[1], [0], [0], [1], [0, 0, 1, 1], [], []>} : vector<2x32xf32>, vector<32x128xf32>, vector<2x128xf32> -> vector<2x128xf32>
    %682 = arith.addf %523, %681 : vector<2x128xf32>
    %683 = vector.extract_strided_slice %682 {offsets = [0, 0], sizes = [2, 32], strides = [1, 1]} : vector<2x128xf32> to vector<2x32xf32>
    %684 = arith.negf %683 : vector<2x32xf32>
    %685 = math.exp %684 : vector<2x32xf32>
    %cst_179 = arith.constant 1.000000e+00 : f32
    %686 = vector.broadcast %cst_179 : f32 to vector<2x32xf32>
    %687 = arith.addf %686, %685 : vector<2x32xf32>
    %688 = arith.divf %686, %687 : vector<2x32xf32>
    %689 = vector.extract_strided_slice %682 {offsets = [0, 32], sizes = [2, 32], strides = [1, 1]} : vector<2x128xf32> to vector<2x32xf32>
    %690 = arith.negf %689 : vector<2x32xf32>
    %691 = math.exp %690 : vector<2x32xf32>
    %cst_180 = arith.constant 1.000000e+00 : f32
    %692 = vector.broadcast %cst_180 : f32 to vector<2x32xf32>
    %693 = arith.addf %692, %691 : vector<2x32xf32>
    %694 = arith.divf %692, %693 : vector<2x32xf32>
    %695 = vector.extract_strided_slice %682 {offsets = [0, 64], sizes = [2, 32], strides = [1, 1]} : vector<2x128xf32> to vector<2x32xf32>
    %696 = math.tanh %695 : vector<2x32xf32>
    %697 = vector.extract_strided_slice %682 {offsets = [0, 96], sizes = [2, 32], strides = [1, 1]} : vector<2x128xf32> to vector<2x32xf32>
    %698 = arith.negf %697 : vector<2x32xf32>
    %699 = math.exp %698 : vector<2x32xf32>
    %cst_181 = arith.constant 1.000000e+00 : f32
    %700 = vector.broadcast %cst_181 : f32 to vector<2x32xf32>
    %701 = arith.addf %700, %699 : vector<2x32xf32>
    %702 = arith.divf %700, %701 : vector<2x32xf32>
    %703 = arith.mulf %694, %678 : vector<2x32xf32>
    %704 = arith.mulf %688, %696 : vector<2x32xf32>
    %705 = arith.addf %703, %704 : vector<2x32xf32>
    %706 = math.tanh %705 : vector<2x32xf32>
    %707 = arith.mulf %702, %706 : vector<2x32xf32>
    %cst_182 = arith.constant dense<0.000000e+00> : vector<2x128xf32>
    %708 = tpu.matmul %707, %528, %cst_182 {dimension_numbers = #tpu.dot_dimension_numbers<[1], [0], [0], [1], [0, 0, 1, 1], [], []>} : vector<2x32xf32>, vector<32x128xf32>, vector<2x128xf32> -> vector<2x128xf32>
    %709 = arith.addf %527, %708 : vector<2x128xf32>
    %710 = vector.extract_strided_slice %709 {offsets = [0, 0], sizes = [2, 32], strides = [1, 1]} : vector<2x128xf32> to vector<2x32xf32>
    %711 = arith.negf %710 : vector<2x32xf32>
    %712 = math.exp %711 : vector<2x32xf32>
    %cst_183 = arith.constant 1.000000e+00 : f32
    %713 = vector.broadcast %cst_183 : f32 to vector<2x32xf32>
    %714 = arith.addf %713, %712 : vector<2x32xf32>
    %715 = arith.divf %713, %714 : vector<2x32xf32>
    %716 = vector.extract_strided_slice %709 {offsets = [0, 32], sizes = [2, 32], strides = [1, 1]} : vector<2x128xf32> to vector<2x32xf32>
    %717 = arith.negf %716 : vector<2x32xf32>
    %718 = math.exp %717 : vector<2x32xf32>
    %cst_184 = arith.constant 1.000000e+00 : f32
    %719 = vector.broadcast %cst_184 : f32 to vector<2x32xf32>
    %720 = arith.addf %719, %718 : vector<2x32xf32>
    %721 = arith.divf %719, %720 : vector<2x32xf32>
    %722 = vector.extract_strided_slice %709 {offsets = [0, 64], sizes = [2, 32], strides = [1, 1]} : vector<2x128xf32> to vector<2x32xf32>
    %723 = math.tanh %722 : vector<2x32xf32>
    %724 = vector.extract_strided_slice %709 {offsets = [0, 96], sizes = [2, 32], strides = [1, 1]} : vector<2x128xf32> to vector<2x32xf32>
    %725 = arith.negf %724 : vector<2x32xf32>
    %726 = math.exp %725 : vector<2x32xf32>
    %cst_185 = arith.constant 1.000000e+00 : f32
    %727 = vector.broadcast %cst_185 : f32 to vector<2x32xf32>
    %728 = arith.addf %727, %726 : vector<2x32xf32>
    %729 = arith.divf %727, %728 : vector<2x32xf32>
    %730 = arith.mulf %721, %705 : vector<2x32xf32>
    %731 = arith.mulf %715, %723 : vector<2x32xf32>
    %732 = arith.addf %730, %731 : vector<2x32xf32>
    %733 = math.tanh %732 : vector<2x32xf32>
    %734 = arith.mulf %729, %733 : vector<2x32xf32>
    %cst_186 = arith.constant dense<0.000000e+00> : vector<2x128xf32>
    %735 = tpu.matmul %246, %494, %cst_186 {dimension_numbers = #tpu.dot_dimension_numbers<[1], [0], [0], [1], [0, 0, 1, 1], [], []>} : vector<2x32xf32>, vector<32x128xf32>, vector<2x128xf32> -> vector<2x128xf32>
    %cst_187 = arith.constant dense<0.000000e+00> : vector<2x128xf32>
    %736 = tpu.matmul %296, %495, %cst_187 {dimension_numbers = #tpu.dot_dimension_numbers<[1], [0], [0], [1], [0, 0, 1, 1], [], []>} : vector<2x32xf32>, vector<32x128xf32>, vector<2x128xf32> -> vector<2x128xf32>
    %737 = arith.addf %735, %736 : vector<2x128xf32>
    %738 = arith.addf %737, %491 : vector<2x128xf32>
    %739 = vector.extract_strided_slice %738 {offsets = [0, 0], sizes = [2, 32], strides = [1, 1]} : vector<2x128xf32> to vector<2x32xf32>
    %740 = arith.negf %739 : vector<2x32xf32>
    %741 = math.exp %740 : vector<2x32xf32>
    %cst_188 = arith.constant 1.000000e+00 : f32
    %742 = vector.broadcast %cst_188 : f32 to vector<2x32xf32>
    %743 = arith.addf %742, %741 : vector<2x32xf32>
    %744 = arith.divf %742, %743 : vector<2x32xf32>
    %745 = vector.extract_strided_slice %738 {offsets = [0, 64], sizes = [2, 32], strides = [1, 1]} : vector<2x128xf32> to vector<2x32xf32>
    %746 = math.tanh %745 : vector<2x32xf32>
    %747 = vector.extract_strided_slice %738 {offsets = [0, 96], sizes = [2, 32], strides = [1, 1]} : vector<2x128xf32> to vector<2x32xf32>
    %748 = arith.negf %747 : vector<2x32xf32>
    %749 = math.exp %748 : vector<2x32xf32>
    %cst_189 = arith.constant 1.000000e+00 : f32
    %750 = vector.broadcast %cst_189 : f32 to vector<2x32xf32>
    %751 = arith.addf %750, %749 : vector<2x32xf32>
    %752 = arith.divf %750, %751 : vector<2x32xf32>
    %753 = arith.mulf %744, %746 : vector<2x32xf32>
    %754 = math.tanh %753 : vector<2x32xf32>
    %755 = arith.mulf %752, %754 : vector<2x32xf32>
    %cst_190 = arith.constant 0.000000e+00 : f32
    %756 = vector.broadcast %cst_190 : f32 to vector<2x32xf32>
    %757 = arith.maximumf %734, %756 : vector<2x32xf32>
    %cst_191 = arith.constant 0.000000e+00 : f32
    %758 = vector.broadcast %cst_191 : f32 to vector<2x32xf32>
    %759 = arith.maximumf %755, %758 : vector<2x32xf32>
    %c0_192 = arith.constant 0 : index
    %c0_193 = arith.constant 0 : index
    %760 = vector.load %arg13[%c0_192, %c0_193] : memref<64x4xf32, #tpu.memory_space<vmem>>, vector<64x4xf32>
    %761 = vector.extract_strided_slice %760 {offsets = [0, 0], sizes = [32, 4], strides = [1, 1]} : vector<64x4xf32> to vector<32x4xf32>
    %cst_194 = arith.constant dense<0.000000e+00> : vector<2x4xf32>
    %762 = tpu.matmul %757, %761, %cst_194 {dimension_numbers = #tpu.dot_dimension_numbers<[1], [0], [0], [1], [0, 0, 1, 1], [], []>} : vector<2x32xf32>, vector<32x4xf32>, vector<2x4xf32> -> vector<2x4xf32>
    %763 = vector.extract_strided_slice %760 {offsets = [32, 0], sizes = [32, 4], strides = [1, 1]} : vector<64x4xf32> to vector<32x4xf32>
    %cst_195 = arith.constant dense<0.000000e+00> : vector<2x4xf32>
    %764 = tpu.matmul %759, %763, %cst_195 {dimension_numbers = #tpu.dot_dimension_numbers<[1], [0], [0], [1], [0, 0, 1, 1], [], []>} : vector<2x32xf32>, vector<32x4xf32>, vector<2x4xf32> -> vector<2x4xf32>
    %765 = arith.addf %762, %764 : vector<2x4xf32>
    %c0_196 = arith.constant 0 : index
    %c0_197 = arith.constant 0 : index
    %766 = vector.load %arg14[%c0_196, %c0_197] : memref<1x4xf32, #tpu.memory_space<vmem>>, vector<1x4xf32>
    %767 = vector.broadcast %766 : vector<1x4xf32> to vector<2x4xf32>
    %768 = arith.addf %765, %767 : vector<2x4xf32>
    %c0_198 = arith.constant 0 : index
    %c0_199 = arith.constant 0 : index
    %769 = vector.load %arg15[%c0_198, %c0_199] : memref<2x4xf32, #tpu.memory_space<vmem>>, vector<2x4xf32>
    tpu.vector_store %arg15[%c0_198, %c0_199], %768 {strides = array<i32>} : memref<2x4xf32, #tpu.memory_space<vmem>>, vector<2x4xf32>,
    return
  }
}

</mosaic_0001>

<llo_original>
// kernel: model_forward_pallas.1
$region0: #{model_forward_pallas.1}
  #allocation0 [shape = 'u32[]', space=smem, size = 0x4, offset = 0x4, fixed_abs, tag = 'smem constant byte address 0x4 - core index']
  #allocation1 [shape = 'u32[144,128]{1,0:T(1,128)}', space=vmem, size = 0x12000, scoped, tag = 'internal scratch']
  %s0 = inlined_call_operand.vmem [shape: f32[8,2,16], index: 0, kind: input, shape index: {}]
  %s1 = inlined_call_operand.hbm [shape: f32[16,128], index: 1, kind: input, shape index: {}]
  %s2 = inlined_call_operand.hbm [shape: f32[32,128], index: 2, kind: input, shape index: {}]
  %s3 = inlined_call_operand.vmem [shape: f32[1,128], index: 3, kind: input, shape index: {}]
  %s4 = inlined_call_operand.hbm [shape: f32[16,128], index: 4, kind: input, shape index: {}]
  %s5 = inlined_call_operand.hbm [shape: f32[32,128], index: 5, kind: input, shape index: {}]
  %s6 = inlined_call_operand.vmem [shape: f32[1,128], index: 6, kind: input, shape index: {}]
  %s7 = inlined_call_operand.vmem [shape: f32[64,128], index: 7, kind: input, shape index: {}]
  %s8 = inlined_call_operand.hbm [shape: f32[32,128], index: 8, kind: input, shape index: {}]
  %s9 = inlined_call_operand.hbm [shape: f32[1,128], index: 9, kind: input, shape index: {}]
  %s10 = inlined_call_operand.vmem [shape: f32[64,128], index: 10, kind: input, shape index: {}]
  %s11 = inlined_call_operand.hbm [shape: f32[32,128], index: 11, kind: input, shape index: {}]
  %s12 = inlined_call_operand.hbm [shape: f32[1,128], index: 12, kind: input, shape index: {}]
  %s13 = inlined_call_operand.vmem [shape: f32[64,4], index: 13, kind: input, shape index: {}]
  %s14 = inlined_call_operand.hbm [shape: f32[1,4], index: 14, kind: input, shape index: {}]
  %s15 = inlined_call_operand.hbm [shape: f32[2,4], index: 15, kind: output, shape index: {}]
  %s16 = sld [smem:[#allocation0]]
  $region106: #{model_forward_pallas.1} parent=0
    _
  %s18 = ssub.s32 1, %s16
  %s19 = scalar_select 0, %s18, %s16
  $region1: #{model_forward_pallas.1} parent=0
    #allocation2 [shape = 'u8[8192]{0}', space=vmem, size = 0x2000, scoped, tag = 'input window, operand 1, single buffered']
    #allocation3 [shape = 's32[1]{0}', space=sflag, size = 0x4, scoped, tag = 'scoped memory for model_forward_pallas.1']
    #allocation4 [shape = 's32[1]{0}', space=sflag, size = 0x4, scoped, tag = 'scoped memory for model_forward_pallas.1']
    #allocation5 [shape = 'u8[16384]{0}', space=vmem, size = 0x4000, scoped, tag = 'input window, operand 2, single buffered']
    #allocation6 [shape = 's32[1]{0}', space=sflag, size = 0x4, scoped, tag = 'scoped memory for model_forward_pallas.1']
    #allocation7 [shape = 'u8[8192]{0}', space=vmem, size = 0x2000, scoped, tag = 'input window, operand 4, single buffered']
    #allocation8 [shape = 'u8[16384]{0}', space=vmem, size = 0x4000, scoped, tag = 'input window, operand 5, single buffered']
    #allocation9 [shape = 's32[1]{0}', space=sflag, size = 0x4, scoped, tag = 'scoped memory for model_forward_pallas.1']
    #allocation10 [shape = 'u8[16384]{0}', space=vmem, size = 0x4000, scoped, tag = 'input window, operand 8, single buffered']
    #allocation11 [shape = 'u8[512]{0}', space=vmem, size = 0x400, scoped, tag = 'input window, operand 9, single buffered']
    #allocation12 [shape = 's32[1]{0}', space=sflag, size = 0x4, scoped, tag = 'scoped memory for model_forward_pallas.1']
    #allocation13 [shape = 'u8[16384]{0}', space=vmem, size = 0x4000, scoped, tag = 'input window, operand 11, single buffered']
    #allocation14 [shape = 'u8[512]{0}', space=vmem, size = 0x400, scoped, tag = 'input window, operand 12, single buffered']
    #allocation15 [shape = 's32[1]{0}', space=sflag, size = 0x4, scoped, tag = 'scoped memory for model_forward_pallas.1']
    #allocation16 [shape = 'u8[512]{0}', space=vmem, size = 0x400, scoped, tag = 'input window, operand 14, single buffered']
    #allocation17 [shape = 'u8[1024]{0}', space=vmem, size = 0x400, scoped, tag = 'output window, operand 0, single buffered']
    %20 = vsyncpa [#allocation3], 0
    %21 = vsyncpa [#allocation6], 0
    %22 = vsyncpa [#allocation9], 0
    %23 = vsyncpa [#allocation12], 0
    %24 = vsyncpa [#allocation15], 0
    %25 = vsyncpa [#allocation4], 0
    // Predicated region
    $region2: #{model_forward_pallas.1} parent=1 // pred_check
      _
    $region3: #{model_forward_pallas.1} parent=1 // pred_check_branch
      %27 = sbr.rel (0) target = $region5
    $region4: #{model_forward_pallas.1} parent=1 // pred_region
      _
    $region5: #{model_forward_pallas.1} parent=1 // pred_fallthru
      _
    // Predicated region
    $region6: #{model_forward_pallas.1} parent=1 // pred_check
      _
    $region7: #{model_forward_pallas.1} parent=1 // pred_check_branch
      %29 = sbr.rel (0) target = $region9
    $region8: #{model_forward_pallas.1} parent=1 // pred_region
      %s31 = ssub.s32 256, 256
      %32 = vsyncadd [#allocation3], %s31
      %s33 = sshll.u32 [#allocation2], 4
      %s34 = int_to_ptr.vmem [resolvable:$true] %s33
      %39 = dma.hbm_to_vmem [thread:$0]  %s1, 256, %s34, [#allocation3], 128, 128, 8
    $region9: #{model_forward_pallas.1} parent=1 // pred_fallthru
      _
    // Predicated region
    $region10: #{model_forward_pallas.1} parent=1 // pred_check
      _
    $region11: #{model_forward_pallas.1} parent=1 // pred_check_branch
      %41 = sbr.rel (0) target = $region13
    $region12: #{model_forward_pallas.1} parent=1 // pred_region
      %s43 = ssub.s32 512, 512
      %44 = vsyncadd [#allocation6], %s43
      %s45 = sshll.u32 [#allocation5], 4
      %s46 = int_to_ptr.vmem [resolvable:$true] %s45
      %51 = dma.hbm_to_vmem [thread:$0]  %s2, 512, %s46, [#allocation6], 128, 128, 8
    $region13: #{model_forward_pallas.1} parent=1 // pred_fallthru
      _
    // Predicated region
    $region14: #{model_forward_pallas.1} parent=1 // pred_check
      _
    $region15: #{model_forward_pallas.1} parent=1 // pred_check_branch
      %53 = sbr.rel (0) target = $region17
    $region16: #{model_forward_pallas.1} parent=1 // pred_region
      _
    $region17: #{model_forward_pallas.1} parent=1 // pred_fallthru
      _
    // Predicated region
    $region18: #{model_forward_pallas.1} parent=1 // pred_check
      _
    $region19: #{model_forward_pallas.1} parent=1 // pred_check_branch
      %55 = sbr.rel (0) target = $region21
    $region20: #{model_forward_pallas.1} parent=1 // pred_region
      %s57 = ssub.s32 256, 256
      %58 = vsyncadd [#allocation6], %s57
      %s59 = sshll.u32 [#allocation7], 4
      %s60 = int_to_ptr.vmem [resolvable:$true] %s59
      %65 = dma.hbm_to_vmem [thread:$0]  %s4, 256, %s60, [#allocation6], 128, 128, 8
    $region21: #{model_forward_pallas.1} parent=1 // pred_fallthru
      _
    // Predicated region
    $region22: #{model_forward_pallas.1} parent=1 // pred_check
      _
    $region23: #{model_forward_pallas.1} parent=1 // pred_check_branch
      %67 = sbr.rel (0) target = $region25
    $region24: #{model_forward_pallas.1} parent=1 // pred_region
      %s69 = ssub.s32 512, 512
      %70 = vsyncadd [#allocation9], %s69
      %s71 = sshll.u32 [#allocation8], 4
      %s72 = int_to_ptr.vmem [resolvable:$true] %s71
      %77 = dma.hbm_to_vmem [thread:$0]  %s5, 512, %s72, [#allocation9], 128, 128, 8
    $region25: #{model_forward_pallas.1} parent=1 // pred_fallthru
      _
    // Predicated region
    $region26: #{model_forward_pallas.1} parent=1 // pred_check
      _
    $region27: #{model_forward_pallas.1} parent=1 // pred_check_branch
      %79 = sbr.rel (0) target = $region29
    $region28: #{model_forward_pallas.1} parent=1 // pred_region
      _
    $region29: #{model_forward_pallas.1} parent=1 // pred_fallthru
      _
    // Predicated region
    $region30: #{model_forward_pallas.1} parent=1 // pred_check
      _
    $region31: #{model_forward_pallas.1} parent=1 // pred_check_branch
      %81 = sbr.rel (0) target = $region33
    $region32: #{model_forward_pallas.1} parent=1 // pred_region
      _
    $region33: #{model_forward_pallas.1} parent=1 // pred_fallthru
      _
    // Predicated region
    $region34: #{model_forward_pallas.1} parent=1 // pred_check
      _
    $region35: #{model_forward_pallas.1} parent=1 // pred_check_branch
      %83 = sbr.rel (0) target = $region37
    $region36: #{model_forward_pallas.1} parent=1 // pred_region
      %s85 = ssub.s32 512, 512
      %86 = vsyncadd [#allocation9], %s85
      %s87 = sshll.u32 [#allocation10], 4
      %s88 = int_to_ptr.vmem [resolvable:$true] %s87
      %93 = dma.hbm_to_vmem [thread:$0]  %s8, 512, %s88, [#allocation9], 128, 128, 8
    $region37: #{model_forward_pallas.1} parent=1 // pred_fallthru
      _
    // Predicated region
    $region38: #{model_forward_pallas.1} parent=1 // pred_check
      _
    $region39: #{model_forward_pallas.1} parent=1 // pred_check_branch
      %95 = sbr.rel (0) target = $region41
    $region40: #{model_forward_pallas.1} parent=1 // pred_region
      %s97 = ssub.s32 16, 16
      %98 = vsyncadd [#allocation12], %s97
      %s100 = sshll.u32 [#allocation11], 4
      %s101 = int_to_ptr.vmem [resolvable:$true] %s100
      %103 = dma.hbm_to_vmem [thread:$0]  %s9, 16, %s101, [#allocation12]
    $region41: #{model_forward_pallas.1} parent=1 // pred_fallthru
      _
    // Predicated region
    $region42: #{model_forward_pallas.1} parent=1 // pred_check
      _
    $region43: #{model_forward_pallas.1} parent=1 // pred_check_branch
      %105 = sbr.rel (0) target = $region45
    $region44: #{model_forward_pallas.1} parent=1 // pred_region
      _
    $region45: #{model_forward_pallas.1} parent=1 // pred_fallthru
      _
    // Predicated region
    $region46: #{model_forward_pallas.1} parent=1 // pred_check
      _
    $region47: #{model_forward_pallas.1} parent=1 // pred_check_branch
      %107 = sbr.rel (0) target = $region49
    $region48: #{model_forward_pallas.1} parent=1 // pred_region
      %s109 = ssub.s32 512, 512
      %110 = vsyncadd [#allocation12], %s109
      %s111 = sshll.u32 [#allocation13], 4
      %s112 = int_to_ptr.vmem [resolvable:$true] %s111
      %117 = dma.hbm_to_vmem [thread:$0]  %s11, 512, %s112, [#allocation12], 128, 128, 8
    $region49: #{model_forward_pallas.1} parent=1 // pred_fallthru
      _
    // Predicated region
    $region50: #{model_forward_pallas.1} parent=1 // pred_check
      _
    $region51: #{model_forward_pallas.1} parent=1 // pred_check_branch
      %119 = sbr.rel (0) target = $region53
    $region52: #{model_forward_pallas.1} parent=1 // pred_region
      %s121 = ssub.s32 16, 16
      %122 = vsyncadd [#allocation15], %s121
      %s124 = sshll.u32 [#allocation14], 4
      %s125 = int_to_ptr.vmem [resolvable:$true] %s124
      %127 = dma.hbm_to_vmem [thread:$0]  %s12, 16, %s125, [#allocation15]
    $region53: #{model_forward_pallas.1} parent=1 // pred_fallthru
      _
    // Predicated region
    $region54: #{model_forward_pallas.1} parent=1 // pred_check
      _
    $region55: #{model_forward_pallas.1} parent=1 // pred_check_branch
      %129 = sbr.rel (0) target = $region57
    $region56: #{model_forward_pallas.1} parent=1 // pred_region
      _
    $region57: #{model_forward_pallas.1} parent=1 // pred_fallthru
      _
    // Predicated region
    $region58: #{model_forward_pallas.1} parent=1 // pred_check
      _
    $region59: #{model_forward_pallas.1} parent=1 // pred_check_branch
      %131 = sbr.rel (0) target = $region61
    $region60: #{model_forward_pallas.1} parent=1 // pred_region
      %s133 = ssub.s32 16, 16
      %134 = vsyncadd [#allocation15], %s133
      %s136 = sshll.u32 [#allocation16], 4
      %s137 = int_to_ptr.vmem [resolvable:$true] %s136
      %139 = dma.hbm_to_vmem [thread:$0]  %s14, 16, %s137, [#allocation15]
    $region61: #{model_forward_pallas.1} parent=1 // pred_fallthru
      _
    // Predicated region
    $region62: #{model_forward_pallas.1} parent=1 // pred_check
      _
    $region63: #{model_forward_pallas.1} parent=1 // pred_check_branch
      %141 = sbr.rel (0) target = $region65
    $region64: #{model_forward_pallas.1} parent=1 // pred_region
      %142 = dma.done [#allocation3], 256
    $region65: #{model_forward_pallas.1} parent=1 // pred_fallthru
      _
    // Predicated region
    $region66: #{model_forward_pallas.1} parent=1 // pred_check
      _
    $region67: #{model_forward_pallas.1} parent=1 // pred_check_branch
      %144 = sbr.rel (0) target = $region69
    $region68: #{model_forward_pallas.1} parent=1 // pred_region
      %145 = dma.done [#allocation6], 512
    $region69: #{model_forward_pallas.1} parent=1 // pred_fallthru
      _
    // Predicated region
    $region70: #{model_forward_pallas.1} parent=1 // pred_check
      _
    $region71: #{model_forward_pallas.1} parent=1 // pred_check_branch
      %147 = sbr.rel (0) target = $region73
    $region72: #{model_forward_pallas.1} parent=1 // pred_region
      %148 = dma.done [#allocation6], 256
    $region73: #{model_forward_pallas.1} parent=1 // pred_fallthru
      _
    // Predicated region
    $region74: #{model_forward_pallas.1} parent=1 // pred_check
      _
    $region75: #{model_forward_pallas.1} parent=1 // pred_check_branch
      %150 = sbr.rel (0) target = $region77
    $region76: #{model_forward_pallas.1} parent=1 // pred_region
      %151 = dma.done [#allocation9], 512
    $region77: #{model_forward_pallas.1} parent=1 // pred_fallthru
      _
    // Predicated region
    $region78: #{model_forward_pallas.1} parent=1 // pred_check
      _
    $region79: #{model_forward_pallas.1} parent=1 // pred_check_branch
      %153 = sbr.rel (0) target = $region81
    $region80: #{model_forward_pallas.1} parent=1 // pred_region
      %154 = dma.done [#allocation9], 512
    $region81: #{model_forward_pallas.1} parent=1 // pred_fallthru
      _
    // Predicated region
    $region82: #{model_forward_pallas.1} parent=1 // pred_check
      _
    $region83: #{model_forward_pallas.1} parent=1 // pred_check_branch
      %156 = sbr.rel (0) target = $region85
    $region84: #{model_forward_pallas.1} parent=1 // pred_region
      %157 = dma.done [#allocation12], 16
    $region85: #{model_forward_pallas.1} parent=1 // pred_fallthru
      _
    // Predicated region
    $region86: #{model_forward_pallas.1} parent=1 // pred_check
      _
    $region87: #{model_forward_pallas.1} parent=1 // pred_check_branch
      %159 = sbr.rel (0) target = $region89
    $region88: #{model_forward_pallas.1} parent=1 // pred_region
      %160 = dma.done [#allocation12], 512
    $region89: #{model_forward_pallas.1} parent=1 // pred_fallthru
      _
    // Predicated region
    $region90: #{model_forward_pallas.1} parent=1 // pred_check
      _
    $region91: #{model_forward_pallas.1} parent=1 // pred_check_branch
      %162 = sbr.rel (0) target = $region93
    $region92: #{model_forward_pallas.1} parent=1 // pred_region
      %163 = dma.done [#allocation15], 16
    $region93: #{model_forward_pallas.1} parent=1 // pred_fallthru
      _
    // Predicated region
    $region94: #{model_forward_pallas.1} parent=1 // pred_check
      _
    $region95: #{model_forward_pallas.1} parent=1 // pred_check_branch
      %165 = sbr.rel (0) target = $region97
    $region96: #{model_forward_pallas.1} parent=1 // pred_region
      %166 = dma.done [#allocation15], 16
    $region97: #{model_forward_pallas.1} parent=1 // pred_fallthru
      _
    %v167 = vld [vmem:[%s3] sm:$0x1]
    %v169 = vlaneseq
    %v170 = vshrl.u32 %v169, 7
    %v171 = vsub.s32 0, %v170
    %v172 = vrot.slane %v167, %v171
    %v174 = vld [vmem:[%s6] sm:$0x1]
    %v176 = vlaneseq
    %v177 = vshrl.u32 %v176, 7
    %v178 = vsub.s32 0, %v177
    %v179 = vrot.slane %v174, %v178
    %v181 = vld [vmem:[#allocation2] sm:$0xff]
    %v182 = vld [vmem:[#allocation2 + $0x8] sm:$0xff]
    %v183 = vld [vmem:[#allocation7] sm:$0xff]
    %v184 = vld [vmem:[#allocation7 + $0x8] sm:$0xff]
    %v185 = vld [vmem:[%s0] sm:$0x3]
    %vm186 = vcmask 130048
    %v188 = vsel %vm186, %v185, 0
    %190 = vmatprep.subr.mxu0 0.0
    %191 = vmatpush1.msra.mxu0 %v181
    %192 = vmatprep.subr.mxu0 0.0
    %193 = vmatpush1.msra.mxu0 %v182
    %194 = vmatprep.subr.mxu0 0.0
    %195 = vmatpush1.msra.mxu0 0.0
    %196 = vmatprep.subr.mxu0 0.0
    %197 = vmatpush1.msra.mxu0 0.0
    %198 = vmatprep.subr.mxu0 0.0
    %199 = vmatpush1.msra.mxu0 0.0
    %200 = vmatprep.subr.mxu0 0.0
    %201 = vmatpush1.msra.mxu0 0.0
    %202 = vmatprep.subr.mxu0 0.0
    %203 = vmatpush1.msra.mxu0 0.0
    %204 = vmatprep.subr.mxu0 0.0
    %205 = vmatpush1.msra.mxu0 0.0
    %206 = vmatprep.subr.mxu0 0.0
    %207 = vmatpush1.msra.mxu0 0.0
    %208 = vmatprep.subr.mxu0 0.0
    %209 = vmatpush1.msra.mxu0 0.0
    %210 = vmatprep.subr.mxu0 0.0
    %211 = vmatpush1.msra.mxu0 0.0
    %212 = vmatprep.subr.mxu0 0.0
    %213 = vmatpush1.msra.mxu0 0.0
    %214 = vmatprep.subr.mxu0 0.0
    %215 = vmatpush1.msra.mxu0 0.0
    %216 = vmatprep.subr.mxu0 0.0
    %217 = vmatpush1.msra.mxu0 0.0
    %218 = vmatprep.subr.mxu0 0.0
    %219 = vmatpush1.msra.mxu0 0.0
    %220 = vmatprep.subr.mxu0 0.0
    %221 = vmatpush1.msra.mxu0 0.0
    %222 = vmatprep.subr.mxu0 0.0
    %223 = vmatpush1.msra.mxu0 0.0
    %224 = vmatprep.subr.mxu0 0.0
    %225 = vmatpush1.msra.mxu0 0.0
    %226 = vmatprep.subr.mxu0 0.0
    %227 = vmatpush1.msra.mxu0 0.0
    %228 = vmatprep.subr.mxu0 0.0
    %229 = vmatpush1.msra.mxu0 0.0
    %230 = vmatprep.subr.mxu0 0.0
    %231 = vmatpush1.msra.mxu0 0.0
    %232 = vmatprep.subr.mxu0 0.0
    %233 = vmatpush1.msra.mxu0 0.0
    %234 = vmatprep.subr.mxu0 0.0
    %235 = vmatpush1.msra.mxu0 0.0
    %236 = vmatprep.subr.mxu0 0.0
    %237 = vmatpush1.msra.mxu0 0.0
    %238 = vmatprep.subr.mxu0 0.0
    %239 = vmatpush1.msra.mxu0 0.0
    %240 = vmatprep.subr.mxu0 0.0
    %241 = vmatpush1.msra.mxu0 0.0
    %242 = vmatprep.subr.mxu0 0.0
    %243 = vmatpush1.msra.mxu0 0.0
    %244 = vmatprep.subr.mxu0 0.0
    %245 = vmatpush1.msra.mxu0 0.0
    %246 = vmatprep.subr.mxu0 0.0
    %247 = vmatpush1.msra.mxu0 0.0
    %248 = vmatprep.subr.mxu0 0.0
    %249 = vmatpush1.msra.mxu0 0.0
    %250 = vmatprep.subr.mxu0 0.0
    %251 = vmatpush1.msra.mxu0 0.0
    %252 = vmatprep.subr.mxu0 0.0
    %253 = vmatpush1.msra.mxu0 0.0
    %254 = vmatprep.mubr.f32.mxu0 0.0
    %255 = vmatmul.mubr.f32.gmra.mrb[0].mxu0 %v188
    %v256 = vpop.f32.mrb[0].mxu0
    %v257 = vadd.f32 %v172, %v256
    %v258 = vpop.f32.mrb[0].mxu0
    %259 = vdwg.mxu0
    %s260 = scalar_lea.vmem %s0, 2
    %v261 = vld [vmem:[%s260] sm:$0x3]
    %v263 = vsel %vm186, %v261, 0
    %265 = vmatprep.subr.mxu0 0.0
    %266 = vmatpush1.msra.mxu0 %v181
    %267 = vmatprep.subr.mxu0 0.0
    %268 = vmatpush1.msra.mxu0 %v182
    %269 = vmatprep.subr.mxu0 0.0
    %270 = vmatpush1.msra.mxu0 0.0
    %271 = vmatprep.subr.mxu0 0.0
    %272 = vmatpush1.msra.mxu0 0.0
    %273 = vmatprep.subr.mxu0 0.0
    %274 = vmatpush1.msra.mxu0 0.0
    %275 = vmatprep.subr.mxu0 0.0
    %276 = vmatpush1.msra.mxu0 0.0
    %277 = vmatprep.subr.mxu0 0.0
    %278 = vmatpush1.msra.mxu0 0.0
    %279 = vmatprep.subr.mxu0 0.0
    %280 = vmatpush1.msra.mxu0 0.0
    %281 = vmatprep.subr.mxu0 0.0
    %282 = vmatpush1.msra.mxu0 0.0
    %283 = vmatprep.subr.mxu0 0.0
    %284 = vmatpush1.msra.mxu0 0.0
    %285 = vmatprep.subr.mxu0 0.0
    %286 = vmatpush1.msra.mxu0 0.0
    %287 = vmatprep.subr.mxu0 0.0
    %288 = vmatpush1.msra.mxu0 0.0
    %289 = vmatprep.subr.mxu0 0.0
    %290 = vmatpush1.msra.mxu0 0.0
    %291 = vmatprep.subr.mxu0 0.0
    %292 = vmatpush1.msra.mxu0 0.0
    %293 = vmatprep.subr.mxu0 0.0
    %294 = vmatpush1.msra.mxu0 0.0
    %295 = vmatprep.subr.mxu0 0.0
    %296 = vmatpush1.msra.mxu0 0.0
    %297 = vmatprep.subr.mxu0 0.0
    %298 = vmatpush1.msra.mxu0 0.0
    %299 = vmatprep.subr.mxu0 0.0
    %300 = vmatpush1.msra.mxu0 0.0
    %301 = vmatprep.subr.mxu0 0.0
    %302 = vmatpush1.msra.mxu0 0.0
    %303 = vmatprep.subr.mxu0 0.0
    %304 = vmatpush1.msra.mxu0 0.0
    %305 = vmatprep.subr.mxu0 0.0
    %306 = vmatpush1.msra.mxu0 0.0
    %307 = vmatprep.subr.mxu0 0.0
    %308 = vmatpush1.msra.mxu0 0.0
    %309 = vmatprep.subr.mxu0 0.0
    %310 = vmatpush1.msra.mxu0 0.0
    %311 = vmatprep.subr.mxu0 0.0
    %312 = vmatpush1.msra.mxu0 0.0
    %313 = vmatprep.subr.mxu0 0.0
    %314 = vmatpush1.msra.mxu0 0.0
    %315 = vmatprep.subr.mxu0 0.0
    %316 = vmatpush1.msra.mxu0 0.0
    %317 = vmatprep.subr.mxu0 0.0
    %318 = vmatpush1.msra.mxu0 0.0
    %319 = vmatprep.subr.mxu0 0.0
    %320 = vmatpush1.msra.mxu0 0.0
    %321 = vmatprep.subr.mxu0 0.0
    %322 = vmatpush1.msra.mxu0 0.0
    %323 = vmatprep.subr.mxu0 0.0
    %324 = vmatpush1.msra.mxu0 0.0
    %325 = vmatprep.subr.mxu0 0.0
    %326 = vmatpush1.msra.mxu0 0.0
    %327 = vmatprep.subr.mxu0 0.0
    %328 = vmatpush1.msra.mxu0 0.0
    %329 = vmatprep.mubr.f32.mxu0 0.0
    %330 = vmatmul.mubr.f32.gmra.mrb[0].mxu0 %v263
    %v331 = vpop.f32.mrb[0].mxu0
    %v332 = vadd.f32 %v172, %v331
    %v333 = vpop.f32.mrb[0].mxu0
    %334 = vdwg.mxu0
    %s335 = scalar_lea.vmem %s0, 4
    %v336 = vld [vmem:[%s335] sm:$0x3]
    %v338 = vsel %vm186, %v336, 0
    %340 = vmatprep.subr.mxu0 0.0
    %341 = vmatpush1.msra.mxu0 %v181
    %342 = vmatprep.subr.mxu0 0.0
    %343 = vmatpush1.msra.mxu0 %v182
    %344 = vmatprep.subr.mxu0 0.0
    %345 = vmatpush1.msra.mxu0 0.0
    %346 = vmatprep.subr.mxu0 0.0
    %347 = vmatpush1.msra.mxu0 0.0
    %348 = vmatprep.subr.mxu0 0.0
    %349 = vmatpush1.msra.mxu0 0.0
    %350 = vmatprep.subr.mxu0 0.0
    %351 = vmatpush1.msra.mxu0 0.0
    %352 = vmatprep.subr.mxu0 0.0
    %353 = vmatpush1.msra.mxu0 0.0
    %354 = vmatprep.subr.mxu0 0.0
    %355 = vmatpush1.msra.mxu0 0.0
    %356 = vmatprep.subr.mxu0 0.0
    %357 = vmatpush1.msra.mxu0 0.0
    %358 = vmatprep.subr.mxu0 0.0
    %359 = vmatpush1.msra.mxu0 0.0
    %360 = vmatprep.subr.mxu0 0.0
    %361 = vmatpush1.msra.mxu0 0.0
    %362 = vmatprep.subr.mxu0 0.0
    %363 = vmatpush1.msra.mxu0 0.0
    %364 = vmatprep.subr.mxu0 0.0
    %365 = vmatpush1.msra.mxu0 0.0
    %366 = vmatprep.subr.mxu0 0.0
    %367 = vmatpush1.msra.mxu0 0.0
    %368 = vmatprep.subr.mxu0 0.0
    %369 = vmatpush1.msra.mxu0 0.0
    %370 = vmatprep.subr.mxu0 0.0
    %371 = vmatpush1.msra.mxu0 0.0
    %372 = vmatprep.subr.mxu0 0.0
    %373 = vmatpush1.msra.mxu0 0.0
    %374 = vmatprep.subr.mxu0 0.0
    %375 = vmatpush1.msra.mxu0 0.0
    %376 = vmatprep.subr.mxu0 0.0
    %377 = vmatpush1.msra.mxu0 0.0
    %378 = vmatprep.subr.mxu0 0.0
    %379 = vmatpush1.msra.mxu0 0.0
    %380 = vmatprep.subr.mxu0 0.0
    %381 = vmatpush1.msra.mxu0 0.0
    %382 = vmatprep.subr.mxu0 0.0
    %383 = vmatpush1.msra.mxu0 0.0
    %384 = vmatprep.subr.mxu0 0.0
    %385 = vmatpush1.msra.mxu0 0.0
    %386 = vmatprep.subr.mxu0 0.0
    %387 = vmatpush1.msra.mxu0 0.0
    %388 = vmatprep.subr.mxu0 0.0
    %389 = vmatpush1.msra.mxu0 0.0
    %390 = vmatprep.subr.mxu0 0.0
    %391 = vmatpush1.msra.mxu0 0.0
    %392 = vmatprep.subr.mxu0 0.0
    %393 = vmatpush1.msra.mxu0 0.0
    %394 = vmatprep.subr.mxu0 0.0
    %395 = vmatpush1.msra.mxu0 0.0
    %396 = vmatprep.subr.mxu0 0.0
    %397 = vmatpush1.msra.mxu0 0.0
    %398 = vmatprep.subr.mxu0 0.0
    %399 = vmatpush1.msra.mxu0 0.0
    %400 = vmatprep.subr.mxu0 0.0
    %401 = vmatpush1.msra.mxu0 0.0
    %402 = vmatprep.subr.mxu0 0.0
    %403 = vmatpush1.msra.mxu0 0.0
    %404 = vmatprep.mubr.f32.mxu0 0.0
    %405 = vmatmul.mubr.f32.gmra.mrb[0].mxu0 %v338
    %v406 = vpop.f32.mrb[0].mxu0
    %v407 = vadd.f32 %v172, %v406
    %v408 = vpop.f32.mrb[0].mxu0
    %409 = vdwg.mxu0
    %s410 = scalar_lea.vmem %s0, 6
    %v411 = vld [vmem:[%s410] sm:$0x3]
    %v413 = vsel %vm186, %v411, 0
    %415 = vmatprep.subr.mxu0 0.0
    %416 = vmatpush1.msra.mxu0 %v181
    %417 = vmatprep.subr.mxu0 0.0
    %418 = vmatpush1.msra.mxu0 %v182
    %419 = vmatprep.subr.mxu0 0.0
    %420 = vmatpush1.msra.mxu0 0.0
    %421 = vmatprep.subr.mxu0 0.0
    %422 = vmatpush1.msra.mxu0 0.0
    %423 = vmatprep.subr.mxu0 0.0
    %424 = vmatpush1.msra.mxu0 0.0
    %425 = vmatprep.subr.mxu0 0.0
    %426 = vmatpush1.msra.mxu0 0.0
    %427 = vmatprep.subr.mxu0 0.0
    %428 = vmatpush1.msra.mxu0 0.0
    %429 = vmatprep.subr.mxu0 0.0
    %430 = vmatpush1.msra.mxu0 0.0
    %431 = vmatprep.subr.mxu0 0.0
    %432 = vmatpush1.msra.mxu0 0.0
    %433 = vmatprep.subr.mxu0 0.0
    %434 = vmatpush1.msra.mxu0 0.0
    %435 = vmatprep.subr.mxu0 0.0
    %436 = vmatpush1.msra.mxu0 0.0
    %437 = vmatprep.subr.mxu0 0.0
    %438 = vmatpush1.msra.mxu0 0.0
    %439 = vmatprep.subr.mxu0 0.0
    %440 = vmatpush1.msra.mxu0 0.0
    %441 = vmatprep.subr.mxu0 0.0
    %442 = vmatpush1.msra.mxu0 0.0
    %443 = vmatprep.subr.mxu0 0.0
    %444 = vmatpush1.msra.mxu0 0.0
    %445 = vmatprep.subr.mxu0 0.0
    %446 = vmatpush1.msra.mxu0 0.0
    %447 = vmatprep.subr.mxu0 0.0
    %448 = vmatpush1.msra.mxu0 0.0
    %449 = vmatprep.subr.mxu0 0.0
    %450 = vmatpush1.msra.mxu0 0.0
    %451 = vmatprep.subr.mxu0 0.0
    %452 = vmatpush1.msra.mxu0 0.0
    %453 = vmatprep.subr.mxu0 0.0
    %454 = vmatpush1.msra.mxu0 0.0
    %455 = vmatprep.subr.mxu0 0.0
    %456 = vmatpush1.msra.mxu0 0.0
    %457 = vmatprep.subr.mxu0 0.0
    %458 = vmatpush1.msra.mxu0 0.0
    %459 = vmatprep.subr.mxu0 0.0
    %460 = vmatpush1.msra.mxu0 0.0
    %461 = vmatprep.subr.mxu0 0.0
    %462 = vmatpush1.msra.mxu0 0.0
    %463 = vmatprep.subr.mxu0 0.0
    %464 = vmatpush1.msra.mxu0 0.0
    %465 = vmatprep.subr.mxu0 0.0
    %466 = vmatpush1.msra.mxu0 0.0
    %467 = vmatprep.subr.mxu0 0.0
    %468 = vmatpush1.msra.mxu0 0.0
    %469 = vmatprep.subr.mxu0 0.0
    %470 = vmatpush1.msra.mxu0 0.0
    %471 = vmatprep.subr.mxu0 0.0
    %472 = vmatpush1.msra.mxu0 0.0
    %473 = vmatprep.subr.mxu0 0.0
    %474 = vmatpush1.msra.mxu0 0.0
    %475 = vmatprep.subr.mxu0 0.0
    %476 = vmatpush1.msra.mxu0 0.0
    %477 = vmatprep.subr.mxu0 0.0
    %478 = vmatpush1.msra.mxu0 0.0
    %479 = vmatprep.mubr.f32.mxu0 0.0
    %480 = vmatmul.mubr.f32.gmra.mrb[0].mxu0 %v413
    %v481 = vpop.f32.mrb[0].mxu0
    %v482 = vadd.f32 %v172, %v481
    %v483 = vpop.f32.mrb[0].mxu0
    %484 = vdwg.mxu0
    %s485 = scalar_lea.vmem %s0, 8
    %v486 = vld [vmem:[%s485] sm:$0x3]
    %v488 = vsel %vm186, %v486, 0
    %490 = vmatprep.subr.mxu0 0.0
    %491 = vmatpush1.msra.mxu0 %v181
    %492 = vmatprep.subr.mxu0 0.0
    %493 = vmatpush1.msra.mxu0 %v182
    %494 = vmatprep.subr.mxu0 0.0
    %495 = vmatpush1.msra.mxu0 0.0
    %496 = vmatprep.subr.mxu0 0.0
    %497 = vmatpush1.msra.mxu0 0.0
    %498 = vmatprep.subr.mxu0 0.0
    %499 = vmatpush1.msra.mxu0 0.0
    %500 = vmatprep.subr.mxu0 0.0
    %501 = vmatpush1.msra.mxu0 0.0
    %502 = vmatprep.subr.mxu0 0.0
    %503 = vmatpush1.msra.mxu0 0.0
    %504 = vmatprep.subr.mxu0 0.0
    %505 = vmatpush1.msra.mxu0 0.0
    %506 = vmatprep.subr.mxu0 0.0
    %507 = vmatpush1.msra.mxu0 0.0
    %508 = vmatprep.subr.mxu0 0.0
    %509 = vmatpush1.msra.mxu0 0.0
    %510 = vmatprep.subr.mxu0 0.0
    %511 = vmatpush1.msra.mxu0 0.0
    %512 = vmatprep.subr.mxu0 0.0
    %513 = vmatpush1.msra.mxu0 0.0
    %514 = vmatprep.subr.mxu0 0.0
    %515 = vmatpush1.msra.mxu0 0.0
    %516 = vmatprep.subr.mxu0 0.0
    %517 = vmatpush1.msra.mxu0 0.0
    %518 = vmatprep.subr.mxu0 0.0
    %519 = vmatpush1.msra.mxu0 0.0
    %520 = vmatprep.subr.mxu0 0.0
    %521 = vmatpush1.msra.mxu0 0.0
    %522 = vmatprep.subr.mxu0 0.0
    %523 = vmatpush1.msra.mxu0 0.0
    %524 = vmatprep.subr.mxu0 0.0
    %525 = vmatpush1.msra.mxu0 0.0
    %526 = vmatprep.subr.mxu0 0.0
    %527 = vmatpush1.msra.mxu0 0.0
    %528 = vmatprep.subr.mxu0 0.0
    %529 = vmatpush1.msra.mxu0 0.0
    %530 = vmatprep.subr.mxu0 0.0
    %531 = vmatpush1.msra.mxu0 0.0
    %532 = vmatprep.subr.mxu0 0.0
    %533 = vmatpush1.msra.mxu0 0.0
    %534 = vmatprep.subr.mxu0 0.0
    %535 = vmatpush1.msra.mxu0 0.0
    %536 = vmatprep.subr.mxu0 0.0
    %537 = vmatpush1.msra.mxu0 0.0
    %538 = vmatprep.subr.mxu0 0.0
    %539 = vmatpush1.msra.mxu0 0.0
    %540 = vmatprep.subr.mxu0 0.0
    %541 = vmatpush1.msra.mxu0 0.0
    %542 = vmatprep.subr.mxu0 0.0
    %543 = vmatpush1.msra.mxu0 0.0
    %544 = vmatprep.subr.mxu0 0.0
    %545 = vmatpush1.msra.mxu0 0.0
    %546 = vmatprep.subr.mxu0 0.0
    %547 = vmatpush1.msra.mxu0 0.0
    %548 = vmatprep.subr.mxu0 0.0
    %549 = vmatpush1.msra.mxu0 0.0
    %550 = vmatprep.subr.mxu0 0.0
    %551 = vmatpush1.msra.mxu0 0.0
    %552 = vmatprep.subr.mxu0 0.0
    %553 = vmatpush1.msra.mxu0 0.0
    %554 = vmatprep.mubr.f32.mxu0 0.0
    %555 = vmatmul.mubr.f32.gmra.mrb[0].mxu0 %v488
    %v556 = vpop.f32.mrb[0].mxu0
    %v557 = vadd.f32 %v172, %v556
    %v558 = vpop.f32.mrb[0].mxu0
    %559 = vdwg.mxu0
    %s560 = scalar_lea.vmem %s0, 10
    %v561 = vld [vmem:[%s560] sm:$0x3]
    %v563 = vsel %vm186, %v561, 0
    %565 = vmatprep.subr.mxu0 0.0
    %566 = vmatpush1.msra.mxu0 %v181
    %567 = vmatprep.subr.mxu0 0.0
    %568 = vmatpush1.msra.mxu0 %v182
    %569 = vmatprep.subr.mxu0 0.0
    %570 = vmatpush1.msra.mxu0 0.0
    %571 = vmatprep.subr.mxu0 0.0
    %572 = vmatpush1.msra.mxu0 0.0
    %573 = vmatprep.subr.mxu0 0.0
    %574 = vmatpush1.msra.mxu0 0.0
    %575 = vmatprep.subr.mxu0 0.0
    %576 = vmatpush1.msra.mxu0 0.0
    %577 = vmatprep.subr.mxu0 0.0
    %578 = vmatpush1.msra.mxu0 0.0
    %579 = vmatprep.subr.mxu0 0.0
    %580 = vmatpush1.msra.mxu0 0.0
    %581 = vmatprep.subr.mxu0 0.0
    %582 = vmatpush1.msra.mxu0 0.0
    %583 = vmatprep.subr.mxu0 0.0
    %584 = vmatpush1.msra.mxu0 0.0
    %585 = vmatprep.subr.mxu0 0.0
    %586 = vmatpush1.msra.mxu0 0.0
    %587 = vmatprep.subr.mxu0 0.0
    %588 = vmatpush1.msra.mxu0 0.0
    %589 = vmatprep.subr.mxu0 0.0
    %590 = vmatpush1.msra.mxu0 0.0
    %591 = vmatprep.subr.mxu0 0.0
    %592 = vmatpush1.msra.mxu0 0.0
    %593 = vmatprep.subr.mxu0 0.0
    %594 = vmatpush1.msra.mxu0 0.0
    %595 = vmatprep.subr.mxu0 0.0
    %596 = vmatpush1.msra.mxu0 0.0
    %597 = vmatprep.subr.mxu0 0.0
    %598 = vmatpush1.msra.mxu0 0.0
    %599 = vmatprep.subr.mxu0 0.0
    %600 = vmatpush1.msra.mxu0 0.0
    %601 = vmatprep.subr.mxu0 0.0
    %602 = vmatpush1.msra.mxu0 0.0
    %603 = vmatprep.subr.mxu0 0.0
    %604 = vmatpush1.msra.mxu0 0.0
    %605 = vmatprep.subr.mxu0 0.0
    %606 = vmatpush1.msra.mxu0 0.0
    %607 = vmatprep.subr.mxu0 0.0
    %608 = vmatpush1.msra.mxu0 0.0
    %609 = vmatprep.subr.mxu0 0.0
    %610 = vmatpush1.msra.mxu0 0.0
    %611 = vmatprep.subr.mxu0 0.0
    %612 = vmatpush1.msra.mxu0 0.0
    %613 = vmatprep.subr.mxu0 0.0
    %614 = vmatpush1.msra.mxu0 0.0
    %615 = vmatprep.subr.mxu0 0.0
    %616 = vmatpush1.msra.mxu0 0.0
    %617 = vmatprep.subr.mxu0 0.0
    %618 = vmatpush1.msra.mxu0 0.0
    %619 = vmatprep.subr.mxu0 0.0
    %620 = vmatpush1.msra.mxu0 0.0
    %621 = vmatprep.subr.mxu0 0.0
    %622 = vmatpush1.msra.mxu0 0.0
    %623 = vmatprep.subr.mxu0 0.0
    %624 = vmatpush1.msra.mxu0 0.0
    %625 = vmatprep.subr.mxu0 0.0
    %626 = vmatpush1.msra.mxu0 0.0
    %627 = vmatprep.subr.mxu0 0.0
    %628 = vmatpush1.msra.mxu0 0.0
    %629 = vmatprep.mubr.f32.mxu0 0.0
    %630 = vmatmul.mubr.f32.gmra.mrb[0].mxu0 %v563
    %v631 = vpop.f32.mrb[0].mxu0
    %v632 = vadd.f32 %v172, %v631
    %v633 = vpop.f32.mrb[0].mxu0
    %634 = vdwg.mxu0
    %s635 = scalar_lea.vmem %s0, 12
    %v636 = vld [vmem:[%s635] sm:$0x3]
    %v638 = vsel %vm186, %v636, 0
    %640 = vmatprep.subr.mxu0 0.0
    %641 = vmatpush1.msra.mxu0 %v181
    %642 = vmatprep.subr.mxu0 0.0
    %643 = vmatpush1.msra.mxu0 %v182
    %644 = vmatprep.subr.mxu0 0.0
    %645 = vmatpush1.msra.mxu0 0.0
    %646 = vmatprep.subr.mxu0 0.0
    %647 = vmatpush1.msra.mxu0 0.0
    %648 = vmatprep.subr.mxu0 0.0
    %649 = vmatpush1.msra.mxu0 0.0
    %650 = vmatprep.subr.mxu0 0.0
    %651 = vmatpush1.msra.mxu0 0.0
    %652 = vmatprep.subr.mxu0 0.0
    %653 = vmatpush1.msra.mxu0 0.0
    %654 = vmatprep.subr.mxu0 0.0
    %655 = vmatpush1.msra.mxu0 0.0
    %656 = vmatprep.subr.mxu0 0.0
    %657 = vmatpush1.msra.mxu0 0.0
    %658 = vmatprep.subr.mxu0 0.0
    %659 = vmatpush1.msra.mxu0 0.0
    %660 = vmatprep.subr.mxu0 0.0
    %661 = vmatpush1.msra.mxu0 0.0
    %662 = vmatprep.subr.mxu0 0.0
    %663 = vmatpush1.msra.mxu0 0.0
    %664 = vmatprep.subr.mxu0 0.0
    %665 = vmatpush1.msra.mxu0 0.0
    %666 = vmatprep.subr.mxu0 0.0
    %667 = vmatpush1.msra.mxu0 0.0
    %668 = vmatprep.subr.mxu0 0.0
    %669 = vmatpush1.msra.mxu0 0.0
    %670 = vmatprep.subr.mxu0 0.0
    %671 = vmatpush1.msra.mxu0 0.0
    %672 = vmatprep.subr.mxu0 0.0
    %673 = vmatpush1.msra.mxu0 0.0
    %674 = vmatprep.subr.mxu0 0.0
    %675 = vmatpush1.msra.mxu0 0.0
    %676 = vmatprep.subr.mxu0 0.0
    %677 = vmatpush1.msra.mxu0 0.0
    %678 = vmatprep.subr.mxu0 0.0
    %679 = vmatpush1.msra.mxu0 0.0
    %680 = vmatprep.subr.mxu0 0.0
    %681 = vmatpush1.msra.mxu0 0.0
    %682 = vmatprep.subr.mxu0 0.0
    %683 = vmatpush1.msra.mxu0 0.0
    %684 = vmatprep.subr.mxu0 0.0
    %685 = vmatpush1.msra.mxu0 0.0
    %686 = vmatprep.subr.mxu0 0.0
    %687 = vmatpush1.msra.mxu0 0.0
    %688 = vmatprep.subr.mxu0 0.0
    %689 = vmatpush1.msra.mxu0 0.0
    %690 = vmatprep.subr.mxu0 0.0
    %691 = vmatpush1.msra.mxu0 0.0
    %692 = vmatprep.subr.mxu0 0.0
    %693 = vmatpush1.msra.mxu0 0.0
    %694 = vmatprep.subr.mxu0 0.0
    %695 = vmatpush1.msra.mxu0 0.0
    %696 = vmatprep.subr.mxu0 0.0
    %697 = vmatpush1.msra.mxu0 0.0
    %698 = vmatprep.subr.mxu0 0.0
    %699 = vmatpush1.msra.mxu0 0.0
    %700 = vmatprep.subr.mxu0 0.0
    %701 = vmatpush1.msra.mxu0 0.0
    %702 = vmatprep.subr.mxu0 0.0
    %703 = vmatpush1.msra.mxu0 0.0
    %704 = vmatprep.mubr.f32.mxu0 0.0
    %705 = vmatmul.mubr.f32.gmra.mrb[0].mxu0 %v638
    %v706 = vpop.f32.mrb[0].mxu0
    %v707 = vadd.f32 %v172, %v706
    %v708 = vpop.f32.mrb[0].mxu0
    %709 = vdwg.mxu0
    %s710 = scalar_lea.vmem %s0, 14
    %v711 = vld [vmem:[%s710] sm:$0x3]
    %v713 = vsel %vm186, %v711, 0
    %715 = vmatprep.subr.mxu0 0.0
    %716 = vmatpush1.msra.mxu0 %v181
    %717 = vmatprep.subr.mxu0 0.0
    %718 = vmatpush1.msra.mxu0 %v182
    %719 = vmatprep.subr.mxu0 0.0
    %720 = vmatpush1.msra.mxu0 0.0
    %721 = vmatprep.subr.mxu0 0.0
    %722 = vmatpush1.msra.mxu0 0.0
    %723 = vmatprep.subr.mxu0 0.0
    %724 = vmatpush1.msra.mxu0 0.0
    %725 = vmatprep.subr.mxu0 0.0
    %726 = vmatpush1.msra.mxu0 0.0
    %727 = vmatprep.subr.mxu0 0.0
    %728 = vmatpush1.msra.mxu0 0.0
    %729 = vmatprep.subr.mxu0 0.0
    %730 = vmatpush1.msra.mxu0 0.0
    %731 = vmatprep.subr.mxu0 0.0
    %732 = vmatpush1.msra.mxu0 0.0
    %733 = vmatprep.subr.mxu0 0.0
    %734 = vmatpush1.msra.mxu0 0.0
    %735 = vmatprep.subr.mxu0 0.0
    %736 = vmatpush1.msra.mxu0 0.0
    %737 = vmatprep.subr.mxu0 0.0
    %738 = vmatpush1.msra.mxu0 0.0
    %739 = vmatprep.subr.mxu0 0.0
    %740 = vmatpush1.msra.mxu0 0.0
    %741 = vmatprep.subr.mxu0 0.0
    %742 = vmatpush1.msra.mxu0 0.0
    %743 = vmatprep.subr.mxu0 0.0
    %744 = vmatpush1.msra.mxu0 0.0
    %745 = vmatprep.subr.mxu0 0.0
    %746 = vmatpush1.msra.mxu0 0.0
    %747 = vmatprep.subr.mxu0 0.0
    %748 = vmatpush1.msra.mxu0 0.0
    %749 = vmatprep.subr.mxu0 0.0
    %750 = vmatpush1.msra.mxu0 0.0
    %751 = vmatprep.subr.mxu0 0.0
    %752 = vmatpush1.msra.mxu0 0.0
    %753 = vmatprep.subr.mxu0 0.0
    %754 = vmatpush1.msra.mxu0 0.0
    %755 = vmatprep.subr.mxu0 0.0
    %756 = vmatpush1.msra.mxu0 0.0
    %757 = vmatprep.subr.mxu0 0.0
    %758 = vmatpush1.msra.mxu0 0.0
    %759 = vmatprep.subr.mxu0 0.0
    %760 = vmatpush1.msra.mxu0 0.0
    %761 = vmatprep.subr.mxu0 0.0
    %762 = vmatpush1.msra.mxu0 0.0
    %763 = vmatprep.subr.mxu0 0.0
    %764 = vmatpush1.msra.mxu0 0.0
    %765 = vmatprep.subr.mxu0 0.0
    %766 = vmatpush1.msra.mxu0 0.0
    %767 = vmatprep.subr.mxu0 0.0
    %768 = vmatpush1.msra.mxu0 0.0
    %769 = vmatprep.subr.mxu0 0.0
    %770 = vmatpush1.msra.mxu0 0.0
    %771 = vmatprep.subr.mxu0 0.0
    %772 = vmatpush1.msra.mxu0 0.0
    %773 = vmatprep.subr.mxu0 0.0
    %774 = vmatpush1.msra.mxu0 0.0
    %775 = vmatprep.subr.mxu0 0.0
    %776 = vmatpush1.msra.mxu0 0.0
    %777 = vmatprep.subr.mxu0 0.0
    %778 = vmatpush1.msra.mxu0 0.0
    %779 = vmatprep.mubr.f32.mxu0 0.0
    %780 = vmatmul.mubr.f32.gmra.mrb[0].mxu0 %v713
    %v781 = vpop.f32.mrb[0].mxu0
    %v782 = vadd.f32 %v172, %v781
    %v783 = vpop.f32.mrb[0].mxu0
    %784 = vdwg.mxu0
    %v785 = vld [vmem:[#allocation5] sm:$0xff]
    %v786 = vld [vmem:[#allocation5 + $0x8] sm:$0xff]
    %v787 = vld [vmem:[#allocation5 + $0x10] sm:$0xff]
    %v788 = vld [vmem:[#allocation5 + $0x18] sm:$0xff]
    %v789 = vxor.u32 %v257, 2147483648
    %v790 = vmul.f32 %v789, 1.442695
    %v791 = vpow.pop %v790
    %v792 = vadd.f32 %v791, 1.0
    %v793 = vrcp.pop %v792
    %v794 = vmul.f32 1.0, %v793
    %v795 = vtanh.pop %v257
    %797 = vrot.lane.b32.xlu0 %v795, 64
    %v798 = vpop.permute.xlu0 %797
    %v800 = vmul.f32 %v794, %v798
    %v801 = vtanh.pop %v800
    %803 = vrot.lane.b32.xlu0 %v801, 96
    %v804 = vpop.permute.xlu0 %803
    %v806 = vmul.f32 %v794, %v804
    %808 = vrot.lane.b32.xlu0 %v806, 32
    %v809 = vpop.permute.xlu0 %808
    %vm810 = vcmask 261120
    %v811 = vsel %vm810, %v809, 0
    %813 = vmatprep.subr.mxu0 0.0
    %814 = vmatpush1.msra.mxu0 %v785
    %815 = vmatprep.subr.mxu0 0.0
    %816 = vmatpush1.msra.mxu0 %v786
    %817 = vmatprep.subr.mxu0 0.0
    %818 = vmatpush1.msra.mxu0 %v787
    %819 = vmatprep.subr.mxu0 0.0
    %820 = vmatpush1.msra.mxu0 %v788
    %821 = vmatprep.subr.mxu0 0.0
    %822 = vmatpush1.msra.mxu0 0.0
    %823 = vmatprep.subr.mxu0 0.0
    %824 = vmatpush1.msra.mxu0 0.0
    %825 = vmatprep.subr.mxu0 0.0
    %826 = vmatpush1.msra.mxu0 0.0
    %827 = vmatprep.subr.mxu0 0.0
    %828 = vmatpush1.msra.mxu0 0.0
    %829 = vmatprep.subr.mxu0 0.0
    %830 = vmatpush1.msra.mxu0 0.0
    %831 = vmatprep.subr.mxu0 0.0
    %832 = vmatpush1.msra.mxu0 0.0
    %833 = vmatprep.subr.mxu0 0.0
    %834 = vmatpush1.msra.mxu0 0.0
    %835 = vmatprep.subr.mxu0 0.0
    %836 = vmatpush1.msra.mxu0 0.0
    %837 = vmatprep.subr.mxu0 0.0
    %838 = vmatpush1.msra.mxu0 0.0
    %839 = vmatprep.subr.mxu0 0.0
    %840 = vmatpush1.msra.mxu0 0.0
    %841 = vmatprep.subr.mxu0 0.0
    %842 = vmatpush1.msra.mxu0 0.0
    %843 = vmatprep.subr.mxu0 0.0
    %844 = vmatpush1.msra.mxu0 0.0
    %845 = vmatprep.subr.mxu0 0.0
    %846 = vmatpush1.msra.mxu0 0.0
    %847 = vmatprep.subr.mxu0 0.0
    %848 = vmatpush1.msra.mxu0 0.0
    %849 = vmatprep.subr.mxu0 0.0
    %850 = vmatpush1.msra.mxu0 0.0
    %851 = vmatprep.subr.mxu0 0.0
    %852 = vmatpush1.msra.mxu0 0.0
    %853 = vmatprep.subr.mxu0 0.0
    %854 = vmatpush1.msra.mxu0 0.0
    %855 = vmatprep.subr.mxu0 0.0
    %856 = vmatpush1.msra.mxu0 0.0
    %857 = vmatprep.subr.mxu0 0.0
    %858 = vmatpush1.msra.mxu0 0.0
    %859 = vmatprep.subr.mxu0 0.0
    %860 = vmatpush1.msra.mxu0 0.0
    %861 = vmatprep.subr.mxu0 0.0
    %862 = vmatpush1.msra.mxu0 0.0
    %863 = vmatprep.subr.mxu0 0.0
    %864 = vmatpush1.msra.mxu0 0.0
    %865 = vmatprep.subr.mxu0 0.0
    %866 = vmatpush1.msra.mxu0 0.0
    %867 = vmatprep.subr.mxu0 0.0
    %868 = vmatpush1.msra.mxu0 0.0
    %869 = vmatprep.subr.mxu0 0.0
    %870 = vmatpush1.msra.mxu0 0.0
    %871 = vmatprep.subr.mxu0 0.0
    %872 = vmatpush1.msra.mxu0 0.0
    %873 = vmatprep.subr.mxu0 0.0
    %874 = vmatpush1.msra.mxu0 0.0
    %875 = vmatprep.subr.mxu0 0.0
    %876 = vmatpush1.msra.mxu0 0.0
    %877 = vmatprep.mubr.f32.mxu0 0.0
    %878 = vmatmul.mubr.f32.gmra.mrb[0].mxu0 %v811
    %v879 = vpop.f32.mrb[0].mxu0
    %v880 = vadd.f32 0.0, %v879
    %v881 = vpop.f32.mrb[0].mxu0
    %882 = vdwg.mxu0
    %v883 = vadd.f32 %v332, %v880
    %v884 = vxor.u32 %v883, 2147483648
    %v885 = vmul.f32 %v884, 1.442695
    %v886 = vpow.pop %v885
    %v887 = vadd.f32 %v886, 1.0
    %v888 = vrcp.pop %v887
    %v889 = vmul.f32 1.0, %v888
    %v890 = vtanh.pop %v883
    %892 = vrot.lane.b32.xlu0 %v800, 32
    %v893 = vpop.permute.xlu0 %892
    %v895 = vmul.f32 %v889, %v893
    %897 = vrot.lane.b32.xlu0 %v890, 64
    %v898 = vpop.permute.xlu0 %897
    %v900 = vmul.f32 %v889, %v898
    %902 = vrot.lane.b32.xlu0 %v900, 32
    %v903 = vpop.permute.xlu0 %902
    %v905 = vadd.f32 %v895, %v903
    %v906 = vtanh.pop %v905
    %908 = vrot.lane.b32.xlu0 %v906, 64
    %v909 = vpop.permute.xlu0 %908
    %v911 = vmul.f32 %v889, %v909
    %913 = vrot.lane.b32.xlu0 %v911, 32
    %v914 = vpop.permute.xlu0 %913
    %v915 = vsel %vm810, %v914, 0
    %917 = vmatprep.subr.mxu0 0.0
    %918 = vmatpush1.msra.mxu0 %v785
    %919 = vmatprep.subr.mxu0 0.0
    %920 = vmatpush1.msra.mxu0 %v786
    %921 = vmatprep.subr.mxu0 0.0
    %922 = vmatpush1.msra.mxu0 %v787
    %923 = vmatprep.subr.mxu0 0.0
    %924 = vmatpush1.msra.mxu0 %v788
    %925 = vmatprep.subr.mxu0 0.0
    %926 = vmatpush1.msra.mxu0 0.0
    %927 = vmatprep.subr.mxu0 0.0
    %928 = vmatpush1.msra.mxu0 0.0
    %929 = vmatprep.subr.mxu0 0.0
    %930 = vmatpush1.msra.mxu0 0.0
    %931 = vmatprep.subr.mxu0 0.0
    %932 = vmatpush1.msra.mxu0 0.0
    %933 = vmatprep.subr.mxu0 0.0
    %934 = vmatpush1.msra.mxu0 0.0
    %935 = vmatprep.subr.mxu0 0.0
    %936 = vmatpush1.msra.mxu0 0.0
    %937 = vmatprep.subr.mxu0 0.0
    %938 = vmatpush1.msra.mxu0 0.0
    %939 = vmatprep.subr.mxu0 0.0
    %940 = vmatpush1.msra.mxu0 0.0
    %941 = vmatprep.subr.mxu0 0.0
    %942 = vmatpush1.msra.mxu0 0.0
    %943 = vmatprep.subr.mxu0 0.0
    %944 = vmatpush1.msra.mxu0 0.0
    %945 = vmatprep.subr.mxu0 0.0
    %946 = vmatpush1.msra.mxu0 0.0
    %947 = vmatprep.subr.mxu0 0.0
    %948 = vmatpush1.msra.mxu0 0.0
    %949 = vmatprep.subr.mxu0 0.0
    %950 = vmatpush1.msra.mxu0 0.0
    %951 = vmatprep.subr.mxu0 0.0
    %952 = vmatpush1.msra.mxu0 0.0
    %953 = vmatprep.subr.mxu0 0.0
    %954 = vmatpush1.msra.mxu0 0.0
    %955 = vmatprep.subr.mxu0 0.0
    %956 = vmatpush1.msra.mxu0 0.0
    %957 = vmatprep.subr.mxu0 0.0
    %958 = vmatpush1.msra.mxu0 0.0
    %959 = vmatprep.subr.mxu0 0.0
    %960 = vmatpush1.msra.mxu0 0.0
    %961 = vmatprep.subr.mxu0 0.0
    %962 = vmatpush1.msra.mxu0 0.0
    %963 = vmatprep.subr.mxu0 0.0
    %964 = vmatpush1.msra.mxu0 0.0
    %965 = vmatprep.subr.mxu0 0.0
    %966 = vmatpush1.msra.mxu0 0.0
    %967 = vmatprep.subr.mxu0 0.0
    %968 = vmatpush1.msra.mxu0 0.0
    %969 = vmatprep.subr.mxu0 0.0
    %970 = vmatpush1.msra.mxu0 0.0
    %971 = vmatprep.subr.mxu0 0.0
    %972 = vmatpush1.msra.mxu0 0.0
    %973 = vmatprep.subr.mxu0 0.0
    %974 = vmatpush1.msra.mxu0 0.0
    %975 = vmatprep.subr.mxu0 0.0
    %976 = vmatpush1.msra.mxu0 0.0
    %977 = vmatprep.subr.mxu0 0.0
    %978 = vmatpush1.msra.mxu0 0.0
    %979 = vmatprep.subr.mxu0 0.0
    %980 = vmatpush1.msra.mxu0 0.0
    %981 = vmatprep.mubr.f32.mxu0 0.0
    %982 = vmatmul.mubr.f32.gmra.mrb[0].mxu0 %v915
    %v983 = vpop.f32.mrb[0].mxu0
    %v984 = vadd.f32 0.0, %v983
    %v985 = vpop.f32.mrb[0].mxu0
    %986 = vdwg.mxu0
    %v987 = vadd.f32 %v407, %v984
    %v988 = vxor.u32 %v987, 2147483648
    %v989 = vmul.f32 %v988, 1.442695
    %v990 = vpow.pop %v989
    %v991 = vadd.f32 %v990, 1.0
    %v992 = vrcp.pop %v991
    %v993 = vmul.f32 1.0, %v992
    %v994 = vtanh.pop %v987
    %v995 = vmul.f32 %v993, %v905
    %997 = vrot.lane.b32.xlu0 %v994, 64
    %v998 = vpop.permute.xlu0 %997
    %v1000 = vmul.f32 %v993, %v998
    %1002 = vrot.lane.b32.xlu0 %v1000, 32
    %v1003 = vpop.permute.xlu0 %1002
    %v1005 = vadd.f32 %v995, %v1003
    %v1006 = vtanh.pop %v1005
    %1008 = vrot.lane.b32.xlu0 %v1006, 64
    %v1009 = vpop.permute.xlu0 %1008
    %v1011 = vmul.f32 %v993, %v1009
    %1013 = vrot.lane.b32.xlu0 %v1011, 32
    %v1014 = vpop.permute.xlu0 %1013
    %v1015 = vsel %vm810, %v1014, 0
    %1017 = vmatprep.subr.mxu0 0.0
    %1018 = vmatpush1.msra.mxu0 %v785
    %1019 = vmatprep.subr.mxu0 0.0
    %1020 = vmatpush1.msra.mxu0 %v786
    %1021 = vmatprep.subr.mxu0 0.0
    %1022 = vmatpush1.msra.mxu0 %v787
    %1023 = vmatprep.subr.mxu0 0.0
    %1024 = vmatpush1.msra.mxu0 %v788
    %1025 = vmatprep.subr.mxu0 0.0
    %1026 = vmatpush1.msra.mxu0 0.0
    %1027 = vmatprep.subr.mxu0 0.0
    %1028 = vmatpush1.msra.mxu0 0.0
    %1029 = vmatprep.subr.mxu0 0.0
    %1030 = vmatpush1.msra.mxu0 0.0
    %1031 = vmatprep.subr.mxu0 0.0
    %1032 = vmatpush1.msra.mxu0 0.0
    %1033 = vmatprep.subr.mxu0 0.0
    %1034 = vmatpush1.msra.mxu0 0.0
    %1035 = vmatprep.subr.mxu0 0.0
    %1036 = vmatpush1.msra.mxu0 0.0
    %1037 = vmatprep.subr.mxu0 0.0
    %1038 = vmatpush1.msra.mxu0 0.0
    %1039 = vmatprep.subr.mxu0 0.0
    %1040 = vmatpush1.msra.mxu0 0.0
    %1041 = vmatprep.subr.mxu0 0.0
    %1042 = vmatpush1.msra.mxu0 0.0
    %1043 = vmatprep.subr.mxu0 0.0
    %1044 = vmatpush1.msra.mxu0 0.0
    %1045 = vmatprep.subr.mxu0 0.0
    %1046 = vmatpush1.msra.mxu0 0.0
    %1047 = vmatprep.subr.mxu0 0.0
    %1048 = vmatpush1.msra.mxu0 0.0
    %1049 = vmatprep.subr.mxu0 0.0
    %1050 = vmatpush1.msra.mxu0 0.0
    %1051 = vmatprep.subr.mxu0 0.0
    %1052 = vmatpush1.msra.mxu0 0.0
    %1053 = vmatprep.subr.mxu0 0.0
    %1054 = vmatpush1.msra.mxu0 0.0
    %1055 = vmatprep.subr.mxu0 0.0
    %1056 = vmatpush1.msra.mxu0 0.0
    %1057 = vmatprep.subr.mxu0 0.0
    %1058 = vmatpush1.msra.mxu0 0.0
    %1059 = vmatprep.subr.mxu0 0.0
    %1060 = vmatpush1.msra.mxu0 0.0
    %1061 = vmatprep.subr.mxu0 0.0
    %1062 = vmatpush1.msra.mxu0 0.0
    %1063 = vmatprep.subr.mxu0 0.0
    %1064 = vmatpush1.msra.mxu0 0.0
    %1065 = vmatprep.subr.mxu0 0.0
    %1066 = vmatpush1.msra.mxu0 0.0
    %1067 = vmatprep.subr.mxu0 0.0
    %1068 = vmatpush1.msra.mxu0 0.0
    %1069 = vmatprep.subr.mxu0 0.0
    %1070 = vmatpush1.msra.mxu0 0.0
    %1071 = vmatprep.subr.mxu0 0.0
    %1072 = vmatpush1.msra.mxu0 0.0
    %1073 = vmatprep.subr.mxu0 0.0
    %1074 = vmatpush1.msra.mxu0 0.0
    %1075 = vmatprep.subr.mxu0 0.0
    %1076 = vmatpush1.msra.mxu0 0.0
    %1077 = vmatprep.subr.mxu0 0.0
    %1078 = vmatpush1.msra.mxu0 0.0
    %1079 = vmatprep.subr.mxu0 0.0
    %1080 = vmatpush1.msra.mxu0 0.0
    %1081 = vmatprep.mubr.f32.mxu0 0.0
    %1082 = vmatmul.mubr.f32.gmra.mrb[0].mxu0 %v1015
    %v1083 = vpop.f32.mrb[0].mxu0
    %v1084 = vadd.f32 0.0, %v1083
    %v1085 = vpop.f32.mrb[0].mxu0
    %1086 = vdwg.mxu0
    %v1087 = vadd.f32 %v482, %v1084
    %v1088 = vxor.u32 %v1087, 2147483648
    %v1089 = vmul.f32 %v1088, 1.442695
    %v1090 = vpow.pop %v1089
    %v1091 = vadd.f32 %v1090, 1.0
    %v1092 = vrcp.pop %v1091
    %v1093 = vmul.f32 1.0, %v1092
    %v1094 = vtanh.pop %v1087
    %v1095 = vmul.f32 %v1093, %v1005
    %1097 = vrot.lane.b32.xlu0 %v1094, 64
    %v1098 = vpop.permute.xlu0 %1097
    %v1100 = vmul.f32 %v1093, %v1098
    %1102 = vrot.lane.b32.xlu0 %v1100, 32
    %v1103 = vpop.permute.xlu0 %1102
    %v1105 = vadd.f32 %v1095, %v1103
    %v1106 = vtanh.pop %v1105
    %1108 = vrot.lane.b32.xlu0 %v1106, 64
    %v1109 = vpop.permute.xlu0 %1108
    %v1111 = vmul.f32 %v1093, %v1109
    %1113 = vrot.lane.b32.xlu0 %v1111, 32
    %v1114 = vpop.permute.xlu0 %1113
    %v1115 = vsel %vm810, %v1114, 0
    %1117 = vmatprep.subr.mxu0 0.0
    %1118 = vmatpush1.msra.mxu0 %v785
    %1119 = vmatprep.subr.mxu0 0.0
    %1120 = vmatpush1.msra.mxu0 %v786
    %1121 = vmatprep.subr.mxu0 0.0
    %1122 = vmatpush1.msra.mxu0 %v787
    %1123 = vmatprep.subr.mxu0 0.0
    %1124 = vmatpush1.msra.mxu0 %v788
    %1125 = vmatprep.subr.mxu0 0.0
    %1126 = vmatpush1.msra.mxu0 0.0
    %1127 = vmatprep.subr.mxu0 0.0
    %1128 = vmatpush1.msra.mxu0 0.0
    %1129 = vmatprep.subr.mxu0 0.0
    %1130 = vmatpush1.msra.mxu0 0.0
    %1131 = vmatprep.subr.mxu0 0.0
    %1132 = vmatpush1.msra.mxu0 0.0
    %1133 = vmatprep.subr.mxu0 0.0
    %1134 = vmatpush1.msra.mxu0 0.0
    %1135 = vmatprep.subr.mxu0 0.0
    %1136 = vmatpush1.msra.mxu0 0.0
    %1137 = vmatprep.subr.mxu0 0.0
    %1138 = vmatpush1.msra.mxu0 0.0
    %1139 = vmatprep.subr.mxu0 0.0
    %1140 = vmatpush1.msra.mxu0 0.0
    %1141 = vmatprep.subr.mxu0 0.0
    %1142 = vmatpush1.msra.mxu0 0.0
    %1143 = vmatprep.subr.mxu0 0.0
    %1144 = vmatpush1.msra.mxu0 0.0
    %1145 = vmatprep.subr.mxu0 0.0
    %1146 = vmatpush1.msra.mxu0 0.0
    %1147 = vmatprep.subr.mxu0 0.0
    %1148 = vmatpush1.msra.mxu0 0.0
    %1149 = vmatprep.subr.mxu0 0.0
    %1150 = vmatpush1.msra.mxu0 0.0
    %1151 = vmatprep.subr.mxu0 0.0
    %1152 = vmatpush1.msra.mxu0 0.0
    %1153 = vmatprep.subr.mxu0 0.0
    %1154 = vmatpush1.msra.mxu0 0.0
    %1155 = vmatprep.subr.mxu0 0.0
    %1156 = vmatpush1.msra.mxu0 0.0
    %1157 = vmatprep.subr.mxu0 0.0
    %1158 = vmatpush1.msra.mxu0 0.0
    %1159 = vmatprep.subr.mxu0 0.0
    %1160 = vmatpush1.msra.mxu0 0.0
    %1161 = vmatprep.subr.mxu0 0.0
    %1162 = vmatpush1.msra.mxu0 0.0
    %1163 = vmatprep.subr.mxu0 0.0
    %1164 = vmatpush1.msra.mxu0 0.0
    %1165 = vmatprep.subr.mxu0 0.0
    %1166 = vmatpush1.msra.mxu0 0.0
    %1167 = vmatprep.subr.mxu0 0.0
    %1168 = vmatpush1.msra.mxu0 0.0
    %1169 = vmatprep.subr.mxu0 0.0
    %1170 = vmatpush1.msra.mxu0 0.0
    %1171 = vmatprep.subr.mxu0 0.0
    %1172 = vmatpush1.msra.mxu0 0.0
    %1173 = vmatprep.subr.mxu0 0.0
    %1174 = vmatpush1.msra.mxu0 0.0
    %1175 = vmatprep.subr.mxu0 0.0
    %1176 = vmatpush1.msra.mxu0 0.0
    %1177 = vmatprep.subr.mxu0 0.0
    %1178 = vmatpush1.msra.mxu0 0.0
    %1179 = vmatprep.subr.mxu0 0.0
    %1180 = vmatpush1.msra.mxu0 0.0
    %1181 = vmatprep.mubr.f32.mxu0 0.0
    %1182 = vmatmul.mubr.f32.gmra.mrb[0].mxu0 %v1115
    %v1183 = vpop.f32.mrb[0].mxu0
    %v1184 = vadd.f32 0.0, %v1183
    %v1185 = vpop.f32.mrb[0].mxu0
    %1186 = vdwg.mxu0
    %v1187 = vadd.f32 %v557, %v1184
    %v1188 = vxor.u32 %v1187, 2147483648
    %v1189 = vmul.f32 %v1188, 1.442695
    %v1190 = vpow.pop %v1189
    %v1191 = vadd.f32 %v1190, 1.0
    %v1192 = vrcp.pop %v1191
    %v1193 = vmul.f32 1.0, %v1192
    %v1194 = vtanh.pop %v1187
    %v1195 = vmul.f32 %v1193, %v1105
    %1197 = vrot.lane.b32.xlu0 %v1194, 64
    %v1198 = vpop.permute.xlu0 %1197
    %v1200 = vmul.f32 %v1193, %v1198
    %1202 = vrot.lane.b32.xlu0 %v1200, 32
    %v1203 = vpop.permute.xlu0 %1202
    %v1205 = vadd.f32 %v1195, %v1203
    %v1206 = vtanh.pop %v1205
    %1208 = vrot.lane.b32.xlu0 %v1206, 64
    %v1209 = vpop.permute.xlu0 %1208
    %v1211 = vmul.f32 %v1193, %v1209
    %1213 = vrot.lane.b32.xlu0 %v1211, 32
    %v1214 = vpop.permute.xlu0 %1213
    %v1215 = vsel %vm810, %v1214, 0
    %1217 = vmatprep.subr.mxu0 0.0
    %1218 = vmatpush1.msra.mxu0 %v785
    %1219 = vmatprep.subr.mxu0 0.0
    %1220 = vmatpush1.msra.mxu0 %v786
    %1221 = vmatprep.subr.mxu0 0.0
    %1222 = vmatpush1.msra.mxu0 %v787
    %1223 = vmatprep.subr.mxu0 0.0
    %1224 = vmatpush1.msra.mxu0 %v788
    %1225 = vmatprep.subr.mxu0 0.0
    %1226 = vmatpush1.msra.mxu0 0.0
    %1227 = vmatprep.subr.mxu0 0.0
    %1228 = vmatpush1.msra.mxu0 0.0
    %1229 = vmatprep.subr.mxu0 0.0
    %1230 = vmatpush1.msra.mxu0 0.0
    %1231 = vmatprep.subr.mxu0 0.0
    %1232 = vmatpush1.msra.mxu0 0.0
    %1233 = vmatprep.subr.mxu0 0.0
    %1234 = vmatpush1.msra.mxu0 0.0
    %1235 = vmatprep.subr.mxu0 0.0
    %1236 = vmatpush1.msra.mxu0 0.0
    %1237 = vmatprep.subr.mxu0 0.0
    %1238 = vmatpush1.msra.mxu0 0.0
    %1239 = vmatprep.subr.mxu0 0.0
    %1240 = vmatpush1.msra.mxu0 0.0
    %1241 = vmatprep.subr.mxu0 0.0
    %1242 = vmatpush1.msra.mxu0 0.0
    %1243 = vmatprep.subr.mxu0 0.0
    %1244 = vmatpush1.msra.mxu0 0.0
    %1245 = vmatprep.subr.mxu0 0.0
    %1246 = vmatpush1.msra.mxu0 0.0
    %1247 = vmatprep.subr.mxu0 0.0
    %1248 = vmatpush1.msra.mxu0 0.0
    %1249 = vmatprep.subr.mxu0 0.0
    %1250 = vmatpush1.msra.mxu0 0.0
    %1251 = vmatprep.subr.mxu0 0.0
    %1252 = vmatpush1.msra.mxu0 0.0
    %1253 = vmatprep.subr.mxu0 0.0
    %1254 = vmatpush1.msra.mxu0 0.0
    %1255 = vmatprep.subr.mxu0 0.0
    %1256 = vmatpush1.msra.mxu0 0.0
    %1257 = vmatprep.subr.mxu0 0.0
    %1258 = vmatpush1.msra.mxu0 0.0
    %1259 = vmatprep.subr.mxu0 0.0
    %1260 = vmatpush1.msra.mxu0 0.0
    %1261 = vmatprep.subr.mxu0 0.0
    %1262 = vmatpush1.msra.mxu0 0.0
    %1263 = vmatprep.subr.mxu0 0.0
    %1264 = vmatpush1.msra.mxu0 0.0
    %1265 = vmatprep.subr.mxu0 0.0
    %1266 = vmatpush1.msra.mxu0 0.0
    %1267 = vmatprep.subr.mxu0 0.0
    %1268 = vmatpush1.msra.mxu0 0.0
    %1269 = vmatprep.subr.mxu0 0.0
    %1270 = vmatpush1.msra.mxu0 0.0
    %1271 = vmatprep.subr.mxu0 0.0
    %1272 = vmatpush1.msra.mxu0 0.0
    %1273 = vmatprep.subr.mxu0 0.0
    %1274 = vmatpush1.msra.mxu0 0.0
    %1275 = vmatprep.subr.mxu0 0.0
    %1276 = vmatpush1.msra.mxu0 0.0
    %1277 = vmatprep.subr.mxu0 0.0
    %1278 = vmatpush1.msra.mxu0 0.0
    %1279 = vmatprep.subr.mxu0 0.0
    %1280 = vmatpush1.msra.mxu0 0.0
    %1281 = vmatprep.mubr.f32.mxu0 0.0
    %1282 = vmatmul.mubr.f32.gmra.mrb[0].mxu0 %v1215
    %v1283 = vpop.f32.mrb[0].mxu0
    %v1284 = vadd.f32 0.0, %v1283
    %v1285 = vpop.f32.mrb[0].mxu0
    %1286 = vdwg.mxu0
    %v1287 = vadd.f32 %v632, %v1284
    %v1288 = vxor.u32 %v1287, 2147483648
    %v1289 = vmul.f32 %v1288, 1.442695
    %v1290 = vpow.pop %v1289
    %v1291 = vadd.f32 %v1290, 1.0
    %v1292 = vrcp.pop %v1291
    %v1293 = vmul.f32 1.0, %v1292
    %v1294 = vtanh.pop %v1287
    %v1295 = vmul.f32 %v1293, %v1205
    %1297 = vrot.lane.b32.xlu0 %v1294, 64
    %v1298 = vpop.permute.xlu0 %1297
    %v1300 = vmul.f32 %v1293, %v1298
    %1302 = vrot.lane.b32.xlu0 %v1300, 32
    %v1303 = vpop.permute.xlu0 %1302
    %v1305 = vadd.f32 %v1295, %v1303
    %v1306 = vtanh.pop %v1305
    %1308 = vrot.lane.b32.xlu0 %v1306, 64
    %v1309 = vpop.permute.xlu0 %1308
    %v1311 = vmul.f32 %v1293, %v1309
    %1313 = vrot.lane.b32.xlu0 %v1311, 32
    %v1314 = vpop.permute.xlu0 %1313
    %v1315 = vsel %vm810, %v1314, 0
    %1317 = vmatprep.subr.mxu0 0.0
    %1318 = vmatpush1.msra.mxu0 %v785
    %1319 = vmatprep.subr.mxu0 0.0
    %1320 = vmatpush1.msra.mxu0 %v786
    %1321 = vmatprep.subr.mxu0 0.0
    %1322 = vmatpush1.msra.mxu0 %v787
    %1323 = vmatprep.subr.mxu0 0.0
    %1324 = vmatpush1.msra.mxu0 %v788
    %1325 = vmatprep.subr.mxu0 0.0
    %1326 = vmatpush1.msra.mxu0 0.0
    %1327 = vmatprep.subr.mxu0 0.0
    %1328 = vmatpush1.msra.mxu0 0.0
    %1329 = vmatprep.subr.mxu0 0.0
    %1330 = vmatpush1.msra.mxu0 0.0
    %1331 = vmatprep.subr.mxu0 0.0
    %1332 = vmatpush1.msra.mxu0 0.0
    %1333 = vmatprep.subr.mxu0 0.0
    %1334 = vmatpush1.msra.mxu0 0.0
    %1335 = vmatprep.subr.mxu0 0.0
    %1336 = vmatpush1.msra.mxu0 0.0
    %1337 = vmatprep.subr.mxu0 0.0
    %1338 = vmatpush1.msra.mxu0 0.0
    %1339 = vmatprep.subr.mxu0 0.0
    %1340 = vmatpush1.msra.mxu0 0.0
    %1341 = vmatprep.subr.mxu0 0.0
    %1342 = vmatpush1.msra.mxu0 0.0
    %1343 = vmatprep.subr.mxu0 0.0
    %1344 = vmatpush1.msra.mxu0 0.0
    %1345 = vmatprep.subr.mxu0 0.0
    %1346 = vmatpush1.msra.mxu0 0.0
    %1347 = vmatprep.subr.mxu0 0.0
    %1348 = vmatpush1.msra.mxu0 0.0
    %1349 = vmatprep.subr.mxu0 0.0
    %1350 = vmatpush1.msra.mxu0 0.0
    %1351 = vmatprep.subr.mxu0 0.0
    %1352 = vmatpush1.msra.mxu0 0.0
    %1353 = vmatprep.subr.mxu0 0.0
    %1354 = vmatpush1.msra.mxu0 0.0
    %1355 = vmatprep.subr.mxu0 0.0
    %1356 = vmatpush1.msra.mxu0 0.0
    %1357 = vmatprep.subr.mxu0 0.0
    %1358 = vmatpush1.msra.mxu0 0.0
    %1359 = vmatprep.subr.mxu0 0.0
    %1360 = vmatpush1.msra.mxu0 0.0
    %1361 = vmatprep.subr.mxu0 0.0
    %1362 = vmatpush1.msra.mxu0 0.0
    %1363 = vmatprep.subr.mxu0 0.0
    %1364 = vmatpush1.msra.mxu0 0.0
    %1365 = vmatprep.subr.mxu0 0.0
    %1366 = vmatpush1.msra.mxu0 0.0
    %1367 = vmatprep.subr.mxu0 0.0
    %1368 = vmatpush1.msra.mxu0 0.0
    %1369 = vmatprep.subr.mxu0 0.0
    %1370 = vmatpush1.msra.mxu0 0.0
    %1371 = vmatprep.subr.mxu0 0.0
    %1372 = vmatpush1.msra.mxu0 0.0
    %1373 = vmatprep.subr.mxu0 0.0
    %1374 = vmatpush1.msra.mxu0 0.0
    %1375 = vmatprep.subr.mxu0 0.0
    %1376 = vmatpush1.msra.mxu0 0.0
    %1377 = vmatprep.subr.mxu0 0.0
    %1378 = vmatpush1.msra.mxu0 0.0
    %1379 = vmatprep.subr.mxu0 0.0
    %1380 = vmatpush1.msra.mxu0 0.0
    %1381 = vmatprep.mubr.f32.mxu0 0.0
    %1382 = vmatmul.mubr.f32.gmra.mrb[0].mxu0 %v1315
    %v1383 = vpop.f32.mrb[0].mxu0
    %v1384 = vadd.f32 0.0, %v1383
    %v1385 = vpop.f32.mrb[0].mxu0
    %1386 = vdwg.mxu0
    %v1387 = vadd.f32 %v707, %v1384
    %v1388 = vxor.u32 %v1387, 2147483648
    %v1389 = vmul.f32 %v1388, 1.442695
    %v1390 = vpow.pop %v1389
    %v1391 = vadd.f32 %v1390, 1.0
    %v1392 = vrcp.pop %v1391
    %v1393 = vmul.f32 1.0, %v1392
    %v1394 = vtanh.pop %v1387
    %v1395 = vmul.f32 %v1393, %v1305
    %1397 = vrot.lane.b32.xlu0 %v1394, 64
    %v1398 = vpop.permute.xlu0 %1397
    %v1400 = vmul.f32 %v1393, %v1398
    %1402 = vrot.lane.b32.xlu0 %v1400, 32
    %v1403 = vpop.permute.xlu0 %1402
    %v1405 = vadd.f32 %v1395, %v1403
    %v1406 = vtanh.pop %v1405
    %1408 = vrot.lane.b32.xlu0 %v1406, 64
    %v1409 = vpop.permute.xlu0 %1408
    %v1411 = vmul.f32 %v1393, %v1409
    %1413 = vrot.lane.b32.xlu0 %v1411, 32
    %v1414 = vpop.permute.xlu0 %1413
    %v1415 = vsel %vm810, %v1414, 0
    %1417 = vmatprep.subr.mxu0 0.0
    %1418 = vmatpush1.msra.mxu0 %v785
    %1419 = vmatprep.subr.mxu0 0.0
    %1420 = vmatpush1.msra.mxu0 %v786
    %1421 = vmatprep.subr.mxu0 0.0
    %1422 = vmatpush1.msra.mxu0 %v787
    %1423 = vmatprep.subr.mxu0 0.0
    %1424 = vmatpush1.msra.mxu0 %v788
    %1425 = vmatprep.subr.mxu0 0.0
    %1426 = vmatpush1.msra.mxu0 0.0
    %1427 = vmatprep.subr.mxu0 0.0
    %1428 = vmatpush1.msra.mxu0 0.0
    %1429 = vmatprep.subr.mxu0 0.0
    %1430 = vmatpush1.msra.mxu0 0.0
    %1431 = vmatprep.subr.mxu0 0.0
    %1432 = vmatpush1.msra.mxu0 0.0
    %1433 = vmatprep.subr.mxu0 0.0
    %1434 = vmatpush1.msra.mxu0 0.0
    %1435 = vmatprep.subr.mxu0 0.0
    %1436 = vmatpush1.msra.mxu0 0.0
    %1437 = vmatprep.subr.mxu0 0.0
    %1438 = vmatpush1.msra.mxu0 0.0
    %1439 = vmatprep.subr.mxu0 0.0
    %1440 = vmatpush1.msra.mxu0 0.0
    %1441 = vmatprep.subr.mxu0 0.0
    %1442 = vmatpush1.msra.mxu0 0.0
    %1443 = vmatprep.subr.mxu0 0.0
    %1444 = vmatpush1.msra.mxu0 0.0
    %1445 = vmatprep.subr.mxu0 0.0
    %1446 = vmatpush1.msra.mxu0 0.0
    %1447 = vmatprep.subr.mxu0 0.0
    %1448 = vmatpush1.msra.mxu0 0.0
    %1449 = vmatprep.subr.mxu0 0.0
    %1450 = vmatpush1.msra.mxu0 0.0
    %1451 = vmatprep.subr.mxu0 0.0
    %1452 = vmatpush1.msra.mxu0 0.0
    %1453 = vmatprep.subr.mxu0 0.0
    %1454 = vmatpush1.msra.mxu0 0.0
    %1455 = vmatprep.subr.mxu0 0.0
    %1456 = vmatpush1.msra.mxu0 0.0
    %1457 = vmatprep.subr.mxu0 0.0
    %1458 = vmatpush1.msra.mxu0 0.0
    %1459 = vmatprep.subr.mxu0 0.0
    %1460 = vmatpush1.msra.mxu0 0.0
    %1461 = vmatprep.subr.mxu0 0.0
    %1462 = vmatpush1.msra.mxu0 0.0
    %1463 = vmatprep.subr.mxu0 0.0
    %1464 = vmatpush1.msra.mxu0 0.0
    %1465 = vmatprep.subr.mxu0 0.0
    %1466 = vmatpush1.msra.mxu0 0.0
    %1467 = vmatprep.subr.mxu0 0.0
    %1468 = vmatpush1.msra.mxu0 0.0
    %1469 = vmatprep.subr.mxu0 0.0
    %1470 = vmatpush1.msra.mxu0 0.0
    %1471 = vmatprep.subr.mxu0 0.0
    %1472 = vmatpush1.msra.mxu0 0.0
    %1473 = vmatprep.subr.mxu0 0.0
    %1474 = vmatpush1.msra.mxu0 0.0
    %1475 = vmatprep.subr.mxu0 0.0
    %1476 = vmatpush1.msra.mxu0 0.0
    %1477 = vmatprep.subr.mxu0 0.0
    %1478 = vmatpush1.msra.mxu0 0.0
    %1479 = vmatprep.subr.mxu0 0.0
    %1480 = vmatpush1.msra.mxu0 0.0
    %1481 = vmatprep.mubr.f32.mxu0 0.0
    %1482 = vmatmul.mubr.f32.gmra.mrb[0].mxu0 %v1415
    %v1483 = vpop.f32.mrb[0].mxu0
    %v1484 = vadd.f32 0.0, %v1483
    %v1485 = vpop.f32.mrb[0].mxu0
    %1486 = vdwg.mxu0
    %v1487 = vadd.f32 %v782, %v1484
    %v1488 = vxor.u32 %v1487, 2147483648
    %v1489 = vmul.f32 %v1488, 1.442695
    %v1490 = vpow.pop %v1489
    %v1491 = vadd.f32 %v1490, 1.0
    %v1492 = vrcp.pop %v1491
    %v1493 = vmul.f32 1.0, %v1492
    %v1494 = vtanh.pop %v1487
    %v1495 = vmul.f32 %v1493, %v1405
    %1497 = vrot.lane.b32.xlu0 %v1494, 64
    %v1498 = vpop.permute.xlu0 %1497
    %v1500 = vmul.f32 %v1493, %v1498
    %1502 = vrot.lane.b32.xlu0 %v1500, 32
    %v1503 = vpop.permute.xlu0 %1502
    %v1505 = vadd.f32 %v1495, %v1503
    %v1506 = vtanh.pop %v1505
    %1508 = vrot.lane.b32.xlu0 %v1506, 64
    %v1509 = vpop.permute.xlu0 %1508
    %v1511 = vmul.f32 %v1493, %v1509
    %1512 = vmatprep.subr.mxu0 0.0
    %1513 = vmatpush1.msra.mxu0 %v183
    %1514 = vmatprep.subr.mxu0 0.0
    %1515 = vmatpush1.msra.mxu0 %v184
    %1516 = vmatprep.subr.mxu0 0.0
    %1517 = vmatpush1.msra.mxu0 0.0
    %1518 = vmatprep.subr.mxu0 0.0
    %1519 = vmatpush1.msra.mxu0 0.0
    %1520 = vmatprep.subr.mxu0 0.0
    %1521 = vmatpush1.msra.mxu0 0.0
    %1522 = vmatprep.subr.mxu0 0.0
    %1523 = vmatpush1.msra.mxu0 0.0
    %1524 = vmatprep.subr.mxu0 0.0
    %1525 = vmatpush1.msra.mxu0 0.0
    %1526 = vmatprep.subr.mxu0 0.0
    %1527 = vmatpush1.msra.mxu0 0.0
    %1528 = vmatprep.subr.mxu0 0.0
    %1529 = vmatpush1.msra.mxu0 0.0
    %1530 = vmatprep.subr.mxu0 0.0
    %1531 = vmatpush1.msra.mxu0 0.0
    %1532 = vmatprep.subr.mxu0 0.0
    %1533 = vmatpush1.msra.mxu0 0.0
    %1534 = vmatprep.subr.mxu0 0.0
    %1535 = vmatpush1.msra.mxu0 0.0
    %1536 = vmatprep.subr.mxu0 0.0
    %1537 = vmatpush1.msra.mxu0 0.0
    %1538 = vmatprep.subr.mxu0 0.0
    %1539 = vmatpush1.msra.mxu0 0.0
    %1540 = vmatprep.subr.mxu0 0.0
    %1541 = vmatpush1.msra.mxu0 0.0
    %1542 = vmatprep.subr.mxu0 0.0
    %1543 = vmatpush1.msra.mxu0 0.0
    %1544 = vmatprep.subr.mxu0 0.0
    %1545 = vmatpush1.msra.mxu0 0.0
    %1546 = vmatprep.subr.mxu0 0.0
    %1547 = vmatpush1.msra.mxu0 0.0
    %1548 = vmatprep.subr.mxu0 0.0
    %1549 = vmatpush1.msra.mxu0 0.0
    %1550 = vmatprep.subr.mxu0 0.0
    %1551 = vmatpush1.msra.mxu0 0.0
    %1552 = vmatprep.subr.mxu0 0.0
    %1553 = vmatpush1.msra.mxu0 0.0
    %1554 = vmatprep.subr.mxu0 0.0
    %1555 = vmatpush1.msra.mxu0 0.0
    %1556 = vmatprep.subr.mxu0 0.0
    %1557 = vmatpush1.msra.mxu0 0.0
    %1558 = vmatprep.subr.mxu0 0.0
    %1559 = vmatpush1.msra.mxu0 0.0
    %1560 = vmatprep.subr.mxu0 0.0
    %1561 = vmatpush1.msra.mxu0 0.0
    %1562 = vmatprep.subr.mxu0 0.0
    %1563 = vmatpush1.msra.mxu0 0.0
    %1564 = vmatprep.subr.mxu0 0.0
    %1565 = vmatpush1.msra.mxu0 0.0
    %1566 = vmatprep.subr.mxu0 0.0
    %1567 = vmatpush1.msra.mxu0 0.0
    %1568 = vmatprep.subr.mxu0 0.0
    %1569 = vmatpush1.msra.mxu0 0.0
    %1570 = vmatprep.subr.mxu0 0.0
    %1571 = vmatpush1.msra.mxu0 0.0
    %1572 = vmatprep.subr.mxu0 0.0
    %1573 = vmatpush1.msra.mxu0 0.0
    %1574 = vmatprep.subr.mxu0 0.0
    %1575 = vmatpush1.msra.mxu0 0.0
    %1576 = vmatprep.mubr.f32.mxu0 0.0
    %1577 = vmatmul.mubr.f32.gmra.mrb[0].mxu0 %v713
    %v1578 = vpop.f32.mrb[0].mxu0
    %v1579 = vadd.f32 %v179, %v1578
    %v1580 = vpop.f32.mrb[0].mxu0
    %1581 = vdwg.mxu0
    %1582 = vmatprep.subr.mxu0 0.0
    %1583 = vmatpush1.msra.mxu0 %v183
    %1584 = vmatprep.subr.mxu0 0.0
    %1585 = vmatpush1.msra.mxu0 %v184
    %1586 = vmatprep.subr.mxu0 0.0
    %1587 = vmatpush1.msra.mxu0 0.0
    %1588 = vmatprep.subr.mxu0 0.0
    %1589 = vmatpush1.msra.mxu0 0.0
    %1590 = vmatprep.subr.mxu0 0.0
    %1591 = vmatpush1.msra.mxu0 0.0
    %1592 = vmatprep.subr.mxu0 0.0
    %1593 = vmatpush1.msra.mxu0 0.0
    %1594 = vmatprep.subr.mxu0 0.0
    %1595 = vmatpush1.msra.mxu0 0.0
    %1596 = vmatprep.subr.mxu0 0.0
    %1597 = vmatpush1.msra.mxu0 0.0
    %1598 = vmatprep.subr.mxu0 0.0
    %1599 = vmatpush1.msra.mxu0 0.0
    %1600 = vmatprep.subr.mxu0 0.0
    %1601 = vmatpush1.msra.mxu0 0.0
    %1602 = vmatprep.subr.mxu0 0.0
    %1603 = vmatpush1.msra.mxu0 0.0
    %1604 = vmatprep.subr.mxu0 0.0
    %1605 = vmatpush1.msra.mxu0 0.0
    %1606 = vmatprep.subr.mxu0 0.0
    %1607 = vmatpush1.msra.mxu0 0.0
    %1608 = vmatprep.subr.mxu0 0.0
    %1609 = vmatpush1.msra.mxu0 0.0
    %1610 = vmatprep.subr.mxu0 0.0
    %1611 = vmatpush1.msra.mxu0 0.0
    %1612 = vmatprep.subr.mxu0 0.0
    %1613 = vmatpush1.msra.mxu0 0.0
    %1614 = vmatprep.subr.mxu0 0.0
    %1615 = vmatpush1.msra.mxu0 0.0
    %1616 = vmatprep.subr.mxu0 0.0
    %1617 = vmatpush1.msra.mxu0 0.0
    %1618 = vmatprep.subr.mxu0 0.0
    %1619 = vmatpush1.msra.mxu0 0.0
    %1620 = vmatprep.subr.mxu0 0.0
    %1621 = vmatpush1.msra.mxu0 0.0
    %1622 = vmatprep.subr.mxu0 0.0
    %1623 = vmatpush1.msra.mxu0 0.0
    %1624 = vmatprep.subr.mxu0 0.0
    %1625 = vmatpush1.msra.mxu0 0.0
    %1626 = vmatprep.subr.mxu0 0.0
    %1627 = vmatpush1.msra.mxu0 0.0
    %1628 = vmatprep.subr.mxu0 0.0
    %1629 = vmatpush1.msra.mxu0 0.0
    %1630 = vmatprep.subr.mxu0 0.0
    %1631 = vmatpush1.msra.mxu0 0.0
    %1632 = vmatprep.subr.mxu0 0.0
    %1633 = vmatpush1.msra.mxu0 0.0
    %1634 = vmatprep.subr.mxu0 0.0
    %1635 = vmatpush1.msra.mxu0 0.0
    %1636 = vmatprep.subr.mxu0 0.0
    %1637 = vmatpush1.msra.mxu0 0.0
    %1638 = vmatprep.subr.mxu0 0.0
    %1639 = vmatpush1.msra.mxu0 0.0
    %1640 = vmatprep.subr.mxu0 0.0
    %1641 = vmatpush1.msra.mxu0 0.0
    %1642 = vmatprep.subr.mxu0 0.0
    %1643 = vmatpush1.msra.mxu0 0.0
    %1644 = vmatprep.subr.mxu0 0.0
    %1645 = vmatpush1.msra.mxu0 0.0
    %1646 = vmatprep.mubr.f32.mxu0 0.0
    %1647 = vmatmul.mubr.f32.gmra.mrb[0].mxu0 %v638
    %v1648 = vpop.f32.mrb[0].mxu0
    %v1649 = vadd.f32 %v179, %v1648
    %v1650 = vpop.f32.mrb[0].mxu0
    %1651 = vdwg.mxu0
    %1652 = vmatprep.subr.mxu0 0.0
    %1653 = vmatpush1.msra.mxu0 %v183
    %1654 = vmatprep.subr.mxu0 0.0
    %1655 = vmatpush1.msra.mxu0 %v184
    %1656 = vmatprep.subr.mxu0 0.0
    %1657 = vmatpush1.msra.mxu0 0.0
    %1658 = vmatprep.subr.mxu0 0.0
    %1659 = vmatpush1.msra.mxu0 0.0
    %1660 = vmatprep.subr.mxu0 0.0
    %1661 = vmatpush1.msra.mxu0 0.0
    %1662 = vmatprep.subr.mxu0 0.0
    %1663 = vmatpush1.msra.mxu0 0.0
    %1664 = vmatprep.subr.mxu0 0.0
    %1665 = vmatpush1.msra.mxu0 0.0
    %1666 = vmatprep.subr.mxu0 0.0
    %1667 = vmatpush1.msra.mxu0 0.0
    %1668 = vmatprep.subr.mxu0 0.0
    %1669 = vmatpush1.msra.mxu0 0.0
    %1670 = vmatprep.subr.mxu0 0.0
    %1671 = vmatpush1.msra.mxu0 0.0
    %1672 = vmatprep.subr.mxu0 0.0
    %1673 = vmatpush1.msra.mxu0 0.0
    %1674 = vmatprep.subr.mxu0 0.0
    %1675 = vmatpush1.msra.mxu0 0.0
    %1676 = vmatprep.subr.mxu0 0.0
    %1677 = vmatpush1.msra.mxu0 0.0
    %1678 = vmatprep.subr.mxu0 0.0
    %1679 = vmatpush1.msra.mxu0 0.0
    %1680 = vmatprep.subr.mxu0 0.0
    %1681 = vmatpush1.msra.mxu0 0.0
    %1682 = vmatprep.subr.mxu0 0.0
    %1683 = vmatpush1.msra.mxu0 0.0
    %1684 = vmatprep.subr.mxu0 0.0
    %1685 = vmatpush1.msra.mxu0 0.0
    %1686 = vmatprep.subr.mxu0 0.0
    %1687 = vmatpush1.msra.mxu0 0.0
    %1688 = vmatprep.subr.mxu0 0.0
    %1689 = vmatpush1.msra.mxu0 0.0
    %1690 = vmatprep.subr.mxu0 0.0
    %1691 = vmatpush1.msra.mxu0 0.0
    %1692 = vmatprep.subr.mxu0 0.0
    %1693 = vmatpush1.msra.mxu0 0.0
    %1694 = vmatprep.subr.mxu0 0.0
    %1695 = vmatpush1.msra.mxu0 0.0
    %1696 = vmatprep.subr.mxu0 0.0
    %1697 = vmatpush1.msra.mxu0 0.0
    %1698 = vmatprep.subr.mxu0 0.0
    %1699 = vmatpush1.msra.mxu0 0.0
    %1700 = vmatprep.subr.mxu0 0.0
    %1701 = vmatpush1.msra.mxu0 0.0
    %1702 = vmatprep.subr.mxu0 0.0
    %1703 = vmatpush1.msra.mxu0 0.0
    %1704 = vmatprep.subr.mxu0 0.0
    %1705 = vmatpush1.msra.mxu0 0.0
    %1706 = vmatprep.subr.mxu0 0.0
    %1707 = vmatpush1.msra.mxu0 0.0
    %1708 = vmatprep.subr.mxu0 0.0
    %1709 = vmatpush1.msra.mxu0 0.0
    %1710 = vmatprep.subr.mxu0 0.0
    %1711 = vmatpush1.msra.mxu0 0.0
    %1712 = vmatprep.subr.mxu0 0.0
    %1713 = vmatpush1.msra.mxu0 0.0
    %1714 = vmatprep.subr.mxu0 0.0
    %1715 = vmatpush1.msra.mxu0 0.0
    %1716 = vmatprep.mubr.f32.mxu0 0.0
    %1717 = vmatmul.mubr.f32.gmra.mrb[0].mxu0 %v563
    %v1718 = vpop.f32.mrb[0].mxu0
    %v1719 = vadd.f32 %v179, %v1718
    %v1720 = vpop.f32.mrb[0].mxu0
    %1721 = vdwg.mxu0
    %1722 = vmatprep.subr.mxu0 0.0
    %1723 = vmatpush1.msra.mxu0 %v183
    %1724 = vmatprep.subr.mxu0 0.0
    %1725 = vmatpush1.msra.mxu0 %v184
    %1726 = vmatprep.subr.mxu0 0.0
    %1727 = vmatpush1.msra.mxu0 0.0
    %1728 = vmatprep.subr.mxu0 0.0
    %1729 = vmatpush1.msra.mxu0 0.0
    %1730 = vmatprep.subr.mxu0 0.0
    %1731 = vmatpush1.msra.mxu0 0.0
    %1732 = vmatprep.subr.mxu0 0.0
    %1733 = vmatpush1.msra.mxu0 0.0
    %1734 = vmatprep.subr.mxu0 0.0
    %1735 = vmatpush1.msra.mxu0 0.0
    %1736 = vmatprep.subr.mxu0 0.0
    %1737 = vmatpush1.msra.mxu0 0.0
    %1738 = vmatprep.subr.mxu0 0.0
    %1739 = vmatpush1.msra.mxu0 0.0
    %1740 = vmatprep.subr.mxu0 0.0
    %1741 = vmatpush1.msra.mxu0 0.0
    %1742 = vmatprep.subr.mxu0 0.0
    %1743 = vmatpush1.msra.mxu0 0.0
    %1744 = vmatprep.subr.mxu0 0.0
    %1745 = vmatpush1.msra.mxu0 0.0
    %1746 = vmatprep.subr.mxu0 0.0
    %1747 = vmatpush1.msra.mxu0 0.0
    %1748 = vmatprep.subr.mxu0 0.0
    %1749 = vmatpush1.msra.mxu0 0.0
    %1750 = vmatprep.subr.mxu0 0.0
    %1751 = vmatpush1.msra.mxu0 0.0
    %1752 = vmatprep.subr.mxu0 0.0
    %1753 = vmatpush1.msra.mxu0 0.0
    %1754 = vmatprep.subr.mxu0 0.0
    %1755 = vmatpush1.msra.mxu0 0.0
    %1756 = vmatprep.subr.mxu0 0.0
    %1757 = vmatpush1.msra.mxu0 0.0
    %1758 = vmatprep.subr.mxu0 0.0
    %1759 = vmatpush1.msra.mxu0 0.0
    %1760 = vmatprep.subr.mxu0 0.0
    %1761 = vmatpush1.msra.mxu0 0.0
    %1762 = vmatprep.subr.mxu0 0.0
    %1763 = vmatpush1.msra.mxu0 0.0
    %1764 = vmatprep.subr.mxu0 0.0
    %1765 = vmatpush1.msra.mxu0 0.0
    %1766 = vmatprep.subr.mxu0 0.0
    %1767 = vmatpush1.msra.mxu0 0.0
    %1768 = vmatprep.subr.mxu0 0.0
    %1769 = vmatpush1.msra.mxu0 0.0
    %1770 = vmatprep.subr.mxu0 0.0
    %1771 = vmatpush1.msra.mxu0 0.0
    %1772 = vmatprep.subr.mxu0 0.0
    %1773 = vmatpush1.msra.mxu0 0.0
    %1774 = vmatprep.subr.mxu0 0.0
    %1775 = vmatpush1.msra.mxu0 0.0
    %1776 = vmatprep.subr.mxu0 0.0
    %1777 = vmatpush1.msra.mxu0 0.0
    %1778 = vmatprep.subr.mxu0 0.0
    %1779 = vmatpush1.msra.mxu0 0.0
    %1780 = vmatprep.subr.mxu0 0.0
    %1781 = vmatpush1.msra.mxu0 0.0
    %1782 = vmatprep.subr.mxu0 0.0
    %1783 = vmatpush1.msra.mxu0 0.0
    %1784 = vmatprep.subr.mxu0 0.0
    %1785 = vmatpush1.msra.mxu0 0.0
    %1786 = vmatprep.mubr.f32.mxu0 0.0
    %1787 = vmatmul.mubr.f32.gmra.mrb[0].mxu0 %v488
    %v1788 = vpop.f32.mrb[0].mxu0
    %v1789 = vadd.f32 %v179, %v1788
    %v1790 = vpop.f32.mrb[0].mxu0
    %1791 = vdwg.mxu0
    %1792 = vmatprep.subr.mxu0 0.0
    %1793 = vmatpush1.msra.mxu0 %v183
    %1794 = vmatprep.subr.mxu0 0.0
    %1795 = vmatpush1.msra.mxu0 %v184
    %1796 = vmatprep.subr.mxu0 0.0
    %1797 = vmatpush1.msra.mxu0 0.0
    %1798 = vmatprep.subr.mxu0 0.0
    %1799 = vmatpush1.msra.mxu0 0.0
    %1800 = vmatprep.subr.mxu0 0.0
    %1801 = vmatpush1.msra.mxu0 0.0
    %1802 = vmatprep.subr.mxu0 0.0
    %1803 = vmatpush1.msra.mxu0 0.0
    %1804 = vmatprep.subr.mxu0 0.0
    %1805 = vmatpush1.msra.mxu0 0.0
    %1806 = vmatprep.subr.mxu0 0.0
    %1807 = vmatpush1.msra.mxu0 0.0
    %1808 = vmatprep.subr.mxu0 0.0
    %1809 = vmatpush1.msra.mxu0 0.0
    %1810 = vmatprep.subr.mxu0 0.0
    %1811 = vmatpush1.msra.mxu0 0.0
    %1812 = vmatprep.subr.mxu0 0.0
    %1813 = vmatpush1.msra.mxu0 0.0
    %1814 = vmatprep.subr.mxu0 0.0
    %1815 = vmatpush1.msra.mxu0 0.0
    %1816 = vmatprep.subr.mxu0 0.0
    %1817 = vmatpush1.msra.mxu0 0.0
    %1818 = vmatprep.subr.mxu0 0.0
    %1819 = vmatpush1.msra.mxu0 0.0
    %1820 = vmatprep.subr.mxu0 0.0
    %1821 = vmatpush1.msra.mxu0 0.0
    %1822 = vmatprep.subr.mxu0 0.0
    %1823 = vmatpush1.msra.mxu0 0.0
    %1824 = vmatprep.subr.mxu0 0.0
    %1825 = vmatpush1.msra.mxu0 0.0
    %1826 = vmatprep.subr.mxu0 0.0
    %1827 = vmatpush1.msra.mxu0 0.0
    %1828 = vmatprep.subr.mxu0 0.0
    %1829 = vmatpush1.msra.mxu0 0.0
    %1830 = vmatprep.subr.mxu0 0.0
    %1831 = vmatpush1.msra.mxu0 0.0
    %1832 = vmatprep.subr.mxu0 0.0
    %1833 = vmatpush1.msra.mxu0 0.0
    %1834 = vmatprep.subr.mxu0 0.0
    %1835 = vmatpush1.msra.mxu0 0.0
    %1836 = vmatprep.subr.mxu0 0.0
    %1837 = vmatpush1.msra.mxu0 0.0
    %1838 = vmatprep.subr.mxu0 0.0
    %1839 = vmatpush1.msra.mxu0 0.0
    %1840 = vmatprep.subr.mxu0 0.0
    %1841 = vmatpush1.msra.mxu0 0.0
    %1842 = vmatprep.subr.mxu0 0.0
    %1843 = vmatpush1.msra.mxu0 0.0
    %1844 = vmatprep.subr.mxu0 0.0
    %1845 = vmatpush1.msra.mxu0 0.0
    %1846 = vmatprep.subr.mxu0 0.0
    %1847 = vmatpush1.msra.mxu0 0.0
    %1848 = vmatprep.subr.mxu0 0.0
    %1849 = vmatpush1.msra.mxu0 0.0
    %1850 = vmatprep.subr.mxu0 0.0
    %1851 = vmatpush1.msra.mxu0 0.0
    %1852 = vmatprep.subr.mxu0 0.0
    %1853 = vmatpush1.msra.mxu0 0.0
    %1854 = vmatprep.subr.mxu0 0.0
    %1855 = vmatpush1.msra.mxu0 0.0
    %1856 = vmatprep.mubr.f32.mxu0 0.0
    %1857 = vmatmul.mubr.f32.gmra.mrb[0].mxu0 %v413
    %v1858 = vpop.f32.mrb[0].mxu0
    %v1859 = vadd.f32 %v179, %v1858
    %v1860 = vpop.f32.mrb[0].mxu0
    %1861 = vdwg.mxu0
    %1862 = vmatprep.subr.mxu0 0.0
    %1863 = vmatpush1.msra.mxu0 %v183
    %1864 = vmatprep.subr.mxu0 0.0
    %1865 = vmatpush1.msra.mxu0 %v184
    %1866 = vmatprep.subr.mxu0 0.0
    %1867 = vmatpush1.msra.mxu0 0.0
    %1868 = vmatprep.subr.mxu0 0.0
    %1869 = vmatpush1.msra.mxu0 0.0
    %1870 = vmatprep.subr.mxu0 0.0
    %1871 = vmatpush1.msra.mxu0 0.0
    %1872 = vmatprep.subr.mxu0 0.0
    %1873 = vmatpush1.msra.mxu0 0.0
    %1874 = vmatprep.subr.mxu0 0.0
    %1875 = vmatpush1.msra.mxu0 0.0
    %1876 = vmatprep.subr.mxu0 0.0
    %1877 = vmatpush1.msra.mxu0 0.0
    %1878 = vmatprep.subr.mxu0 0.0
    %1879 = vmatpush1.msra.mxu0 0.0
    %1880 = vmatprep.subr.mxu0 0.0
    %1881 = vmatpush1.msra.mxu0 0.0
    %1882 = vmatprep.subr.mxu0 0.0
    %1883 = vmatpush1.msra.mxu0 0.0
    %1884 = vmatprep.subr.mxu0 0.0
    %1885 = vmatpush1.msra.mxu0 0.0
    %1886 = vmatprep.subr.mxu0 0.0
    %1887 = vmatpush1.msra.mxu0 0.0
    %1888 = vmatprep.subr.mxu0 0.0
    %1889 = vmatpush1.msra.mxu0 0.0
    %1890 = vmatprep.subr.mxu0 0.0
    %1891 = vmatpush1.msra.mxu0 0.0
    %1892 = vmatprep.subr.mxu0 0.0
    %1893 = vmatpush1.msra.mxu0 0.0
    %1894 = vmatprep.subr.mxu0 0.0
    %1895 = vmatpush1.msra.mxu0 0.0
    %1896 = vmatprep.subr.mxu0 0.0
    %1897 = vmatpush1.msra.mxu0 0.0
    %1898 = vmatprep.subr.mxu0 0.0
    %1899 = vmatpush1.msra.mxu0 0.0
    %1900 = vmatprep.subr.mxu0 0.0
    %1901 = vmatpush1.msra.mxu0 0.0
    %1902 = vmatprep.subr.mxu0 0.0
    %1903 = vmatpush1.msra.mxu0 0.0
    %1904 = vmatprep.subr.mxu0 0.0
    %1905 = vmatpush1.msra.mxu0 0.0
    %1906 = vmatprep.subr.mxu0 0.0
    %1907 = vmatpush1.msra.mxu0 0.0
    %1908 = vmatprep.subr.mxu0 0.0
    %1909 = vmatpush1.msra.mxu0 0.0
    %1910 = vmatprep.subr.mxu0 0.0
    %1911 = vmatpush1.msra.mxu0 0.0
    %1912 = vmatprep.subr.mxu0 0.0
    %1913 = vmatpush1.msra.mxu0 0.0
    %1914 = vmatprep.subr.mxu0 0.0
    %1915 = vmatpush1.msra.mxu0 0.0
    %1916 = vmatprep.subr.mxu0 0.0
    %1917 = vmatpush1.msra.mxu0 0.0
    %1918 = vmatprep.subr.mxu0 0.0
    %1919 = vmatpush1.msra.mxu0 0.0
    %1920 = vmatprep.subr.mxu0 0.0
    %1921 = vmatpush1.msra.mxu0 0.0
    %1922 = vmatprep.subr.mxu0 0.0
    %1923 = vmatpush1.msra.mxu0 0.0
    %1924 = vmatprep.subr.mxu0 0.0
    %1925 = vmatpush1.msra.mxu0 0.0
    %1926 = vmatprep.mubr.f32.mxu0 0.0
    %1927 = vmatmul.mubr.f32.gmra.mrb[0].mxu0 %v338
    %v1928 = vpop.f32.mrb[0].mxu0
    %v1929 = vadd.f32 %v179, %v1928
    %v1930 = vpop.f32.mrb[0].mxu0
    %1931 = vdwg.mxu0
    %1932 = vmatprep.subr.mxu0 0.0
    %1933 = vmatpush1.msra.mxu0 %v183
    %1934 = vmatprep.subr.mxu0 0.0
    %1935 = vmatpush1.msra.mxu0 %v184
    %1936 = vmatprep.subr.mxu0 0.0
    %1937 = vmatpush1.msra.mxu0 0.0
    %1938 = vmatprep.subr.mxu0 0.0
    %1939 = vmatpush1.msra.mxu0 0.0
    %1940 = vmatprep.subr.mxu0 0.0
    %1941 = vmatpush1.msra.mxu0 0.0
    %1942 = vmatprep.subr.mxu0 0.0
    %1943 = vmatpush1.msra.mxu0 0.0
    %1944 = vmatprep.subr.mxu0 0.0
    %1945 = vmatpush1.msra.mxu0 0.0
    %1946 = vmatprep.subr.mxu0 0.0
    %1947 = vmatpush1.msra.mxu0 0.0
    %1948 = vmatprep.subr.mxu0 0.0
    %1949 = vmatpush1.msra.mxu0 0.0
    %1950 = vmatprep.subr.mxu0 0.0
    %1951 = vmatpush1.msra.mxu0 0.0
    %1952 = vmatprep.subr.mxu0 0.0
    %1953 = vmatpush1.msra.mxu0 0.0
    %1954 = vmatprep.subr.mxu0 0.0
    %1955 = vmatpush1.msra.mxu0 0.0
    %1956 = vmatprep.subr.mxu0 0.0
    %1957 = vmatpush1.msra.mxu0 0.0
    %1958 = vmatprep.subr.mxu0 0.0
    %1959 = vmatpush1.msra.mxu0 0.0
    %1960 = vmatprep.subr.mxu0 0.0
    %1961 = vmatpush1.msra.mxu0 0.0
    %1962 = vmatprep.subr.mxu0 0.0
    %1963 = vmatpush1.msra.mxu0 0.0
    %1964 = vmatprep.subr.mxu0 0.0
    %1965 = vmatpush1.msra.mxu0 0.0
    %1966 = vmatprep.subr.mxu0 0.0
    %1967 = vmatpush1.msra.mxu0 0.0
    %1968 = vmatprep.subr.mxu0 0.0
    %1969 = vmatpush1.msra.mxu0 0.0
    %1970 = vmatprep.subr.mxu0 0.0
    %1971 = vmatpush1.msra.mxu0 0.0
    %1972 = vmatprep.subr.mxu0 0.0
    %1973 = vmatpush1.msra.mxu0 0.0
    %1974 = vmatprep.subr.mxu0 0.0
    %1975 = vmatpush1.msra.mxu0 0.0
    %1976 = vmatprep.subr.mxu0 0.0
    %1977 = vmatpush1.msra.mxu0 0.0
    %1978 = vmatprep.subr.mxu0 0.0
    %1979 = vmatpush1.msra.mxu0 0.0
    %1980 = vmatprep.subr.mxu0 0.0
    %1981 = vmatpush1.msra.mxu0 0.0
    %1982 = vmatprep.subr.mxu0 0.0
    %1983 = vmatpush1.msra.mxu0 0.0
    %1984 = vmatprep.subr.mxu0 0.0
    %1985 = vmatpush1.msra.mxu0 0.0
    %1986 = vmatprep.subr.mxu0 0.0
    %1987 = vmatpush1.msra.mxu0 0.0
    %1988 = vmatprep.subr.mxu0 0.0
    %1989 = vmatpush1.msra.mxu0 0.0
    %1990 = vmatprep.subr.mxu0 0.0
    %1991 = vmatpush1.msra.mxu0 0.0
    %1992 = vmatprep.subr.mxu0 0.0
    %1993 = vmatpush1.msra.mxu0 0.0
    %1994 = vmatprep.subr.mxu0 0.0
    %1995 = vmatpush1.msra.mxu0 0.0
    %1996 = vmatprep.mubr.f32.mxu0 0.0
    %1997 = vmatmul.mubr.f32.gmra.mrb[0].mxu0 %v263
    %v1998 = vpop.f32.mrb[0].mxu0
    %v1999 = vadd.f32 %v179, %v1998
    %v2000 = vpop.f32.mrb[0].mxu0
    %2001 = vdwg.mxu0
    %2002 = vmatprep.subr.mxu0 0.0
    %2003 = vmatpush1.msra.mxu0 %v183
    %2004 = vmatprep.subr.mxu0 0.0
    %2005 = vmatpush1.msra.mxu0 %v184
    %2006 = vmatprep.subr.mxu0 0.0
    %2007 = vmatpush1.msra.mxu0 0.0
    %2008 = vmatprep.subr.mxu0 0.0
    %2009 = vmatpush1.msra.mxu0 0.0
    %2010 = vmatprep.subr.mxu0 0.0
    %2011 = vmatpush1.msra.mxu0 0.0
    %2012 = vmatprep.subr.mxu0 0.0
    %2013 = vmatpush1.msra.mxu0 0.0
    %2014 = vmatprep.subr.mxu0 0.0
    %2015 = vmatpush1.msra.mxu0 0.0
    %2016 = vmatprep.subr.mxu0 0.0
    %2017 = vmatpush1.msra.mxu0 0.0
    %2018 = vmatprep.subr.mxu0 0.0
    %2019 = vmatpush1.msra.mxu0 0.0
    %2020 = vmatprep.subr.mxu0 0.0
    %2021 = vmatpush1.msra.mxu0 0.0
    %2022 = vmatprep.subr.mxu0 0.0
    %2023 = vmatpush1.msra.mxu0 0.0
    %2024 = vmatprep.subr.mxu0 0.0
    %2025 = vmatpush1.msra.mxu0 0.0
    %2026 = vmatprep.subr.mxu0 0.0
    %2027 = vmatpush1.msra.mxu0 0.0
    %2028 = vmatprep.subr.mxu0 0.0
    %2029 = vmatpush1.msra.mxu0 0.0
    %2030 = vmatprep.subr.mxu0 0.0
    %2031 = vmatpush1.msra.mxu0 0.0
    %2032 = vmatprep.subr.mxu0 0.0
    %2033 = vmatpush1.msra.mxu0 0.0
    %2034 = vmatprep.subr.mxu0 0.0
    %2035 = vmatpush1.msra.mxu0 0.0
    %2036 = vmatprep.subr.mxu0 0.0
    %2037 = vmatpush1.msra.mxu0 0.0
    %2038 = vmatprep.subr.mxu0 0.0
    %2039 = vmatpush1.msra.mxu0 0.0
    %2040 = vmatprep.subr.mxu0 0.0
    %2041 = vmatpush1.msra.mxu0 0.0
    %2042 = vmatprep.subr.mxu0 0.0
    %2043 = vmatpush1.msra.mxu0 0.0
    %2044 = vmatprep.subr.mxu0 0.0
    %2045 = vmatpush1.msra.mxu0 0.0
    %2046 = vmatprep.subr.mxu0 0.0
    %2047 = vmatpush1.msra.mxu0 0.0
    %2048 = vmatprep.subr.mxu0 0.0
    %2049 = vmatpush1.msra.mxu0 0.0
    %2050 = vmatprep.subr.mxu0 0.0
    %2051 = vmatpush1.msra.mxu0 0.0
    %2052 = vmatprep.subr.mxu0 0.0
    %2053 = vmatpush1.msra.mxu0 0.0
    %2054 = vmatprep.subr.mxu0 0.0
    %2055 = vmatpush1.msra.mxu0 0.0
    %2056 = vmatprep.subr.mxu0 0.0
    %2057 = vmatpush1.msra.mxu0 0.0
    %2058 = vmatprep.subr.mxu0 0.0
    %2059 = vmatpush1.msra.mxu0 0.0
    %2060 = vmatprep.subr.mxu0 0.0
    %2061 = vmatpush1.msra.mxu0 0.0
    %2062 = vmatprep.subr.mxu0 0.0
    %2063 = vmatpush1.msra.mxu0 0.0
    %2064 = vmatprep.subr.mxu0 0.0
    %2065 = vmatpush1.msra.mxu0 0.0
    %2066 = vmatprep.mubr.f32.mxu0 0.0
    %2067 = vmatmul.mubr.f32.gmra.mrb[0].mxu0 %v188
    %v2068 = vpop.f32.mrb[0].mxu0
    %v2069 = vadd.f32 %v179, %v2068
    %v2070 = vpop.f32.mrb[0].mxu0
    %2071 = vdwg.mxu0
    %v2072 = vld [vmem:[#allocation8] sm:$0xff]
    %v2073 = vld [vmem:[#allocation8 + $0x8] sm:$0xff]
    %v2074 = vld [vmem:[#allocation8 + $0x10] sm:$0xff]
    %v2075 = vld [vmem:[#allocation8 + $0x18] sm:$0xff]
    %v2076 = vxor.u32 %v1579, 2147483648
    %v2077 = vmul.f32 %v2076, 1.442695
    %v2078 = vpow.pop %v2077
    %v2079 = vadd.f32 %v2078, 1.0
    %v2080 = vrcp.pop %v2079
    %v2081 = vmul.f32 1.0, %v2080
    %v2082 = vtanh.pop %v1579
    %2084 = vrot.lane.b32.xlu0 %v2082, 64
    %v2085 = vpop.permute.xlu0 %2084
    %v2087 = vmul.f32 %v2081, %v2085
    %v2088 = vtanh.pop %v2087
    %2090 = vrot.lane.b32.xlu0 %v2088, 96
    %v2091 = vpop.permute.xlu0 %2090
    %v2093 = vmul.f32 %v2081, %v2091
    %2095 = vrot.lane.b32.xlu0 %v2093, 32
    %v2096 = vpop.permute.xlu0 %2095
    %v2097 = vsel %vm810, %v2096, 0
    %2099 = vmatprep.subr.mxu0 0.0
    %2100 = vmatpush1.msra.mxu0 %v2072
    %2101 = vmatprep.subr.mxu0 0.0
    %2102 = vmatpush1.msra.mxu0 %v2073
    %2103 = vmatprep.subr.mxu0 0.0
    %2104 = vmatpush1.msra.mxu0 %v2074
    %2105 = vmatprep.subr.mxu0 0.0
    %2106 = vmatpush1.msra.mxu0 %v2075
    %2107 = vmatprep.subr.mxu0 0.0
    %2108 = vmatpush1.msra.mxu0 0.0
    %2109 = vmatprep.subr.mxu0 0.0
    %2110 = vmatpush1.msra.mxu0 0.0
    %2111 = vmatprep.subr.mxu0 0.0
    %2112 = vmatpush1.msra.mxu0 0.0
    %2113 = vmatprep.subr.mxu0 0.0
    %2114 = vmatpush1.msra.mxu0 0.0
    %2115 = vmatprep.subr.mxu0 0.0
    %2116 = vmatpush1.msra.mxu0 0.0
    %2117 = vmatprep.subr.mxu0 0.0
    %2118 = vmatpush1.msra.mxu0 0.0
    %2119 = vmatprep.subr.mxu0 0.0
    %2120 = vmatpush1.msra.mxu0 0.0
    %2121 = vmatprep.subr.mxu0 0.0
    %2122 = vmatpush1.msra.mxu0 0.0
    %2123 = vmatprep.subr.mxu0 0.0
    %2124 = vmatpush1.msra.mxu0 0.0
    %2125 = vmatprep.subr.mxu0 0.0
    %2126 = vmatpush1.msra.mxu0 0.0
    %2127 = vmatprep.subr.mxu0 0.0
    %2128 = vmatpush1.msra.mxu0 0.0
    %2129 = vmatprep.subr.mxu0 0.0
    %2130 = vmatpush1.msra.mxu0 0.0
    %2131 = vmatprep.subr.mxu0 0.0
    %2132 = vmatpush1.msra.mxu0 0.0
    %2133 = vmatprep.subr.mxu0 0.0
    %2134 = vmatpush1.msra.mxu0 0.0
    %2135 = vmatprep.subr.mxu0 0.0
    %2136 = vmatpush1.msra.mxu0 0.0
    %2137 = vmatprep.subr.mxu0 0.0
    %2138 = vmatpush1.msra.mxu0 0.0
    %2139 = vmatprep.subr.mxu0 0.0
    %2140 = vmatpush1.msra.mxu0 0.0
    %2141 = vmatprep.subr.mxu0 0.0
    %2142 = vmatpush1.msra.mxu0 0.0
    %2143 = vmatprep.subr.mxu0 0.0
    %2144 = vmatpush1.msra.mxu0 0.0
    %2145 = vmatprep.subr.mxu0 0.0
    %2146 = vmatpush1.msra.mxu0 0.0
    %2147 = vmatprep.subr.mxu0 0.0
    %2148 = vmatpush1.msra.mxu0 0.0
    %2149 = vmatprep.subr.mxu0 0.0
    %2150 = vmatpush1.msra.mxu0 0.0
    %2151 = vmatprep.subr.mxu0 0.0
    %2152 = vmatpush1.msra.mxu0 0.0
    %2153 = vmatprep.subr.mxu0 0.0
    %2154 = vmatpush1.msra.mxu0 0.0
    %2155 = vmatprep.subr.mxu0 0.0
    %2156 = vmatpush1.msra.mxu0 0.0
    %2157 = vmatprep.subr.mxu0 0.0
    %2158 = vmatpush1.msra.mxu0 0.0
    %2159 = vmatprep.subr.mxu0 0.0
    %2160 = vmatpush1.msra.mxu0 0.0
    %2161 = vmatprep.subr.mxu0 0.0
    %2162 = vmatpush1.msra.mxu0 0.0
    %2163 = vmatprep.mubr.f32.mxu0 0.0
    %2164 = vmatmul.mubr.f32.gmra.mrb[0].mxu0 %v2097
    %v2165 = vpop.f32.mrb[0].mxu0
    %v2166 = vadd.f32 0.0, %v2165
    %v2167 = vpop.f32.mrb[0].mxu0
    %2168 = vdwg.mxu0
    %v2169 = vadd.f32 %v1649, %v2166
    %v2170 = vxor.u32 %v2169, 2147483648
    %v2171 = vmul.f32 %v2170, 1.442695
    %v2172 = vpow.pop %v2171
    %v2173 = vadd.f32 %v2172, 1.0
    %v2174 = vrcp.pop %v2173
    %v2175 = vmul.f32 1.0, %v2174
    %v2176 = vtanh.pop %v2169
    %2178 = vrot.lane.b32.xlu0 %v2087, 32
    %v2179 = vpop.permute.xlu0 %2178
    %v2181 = vmul.f32 %v2175, %v2179
    %2183 = vrot.lane.b32.xlu0 %v2176, 64
    %v2184 = vpop.permute.xlu0 %2183
    %v2186 = vmul.f32 %v2175, %v2184
    %2188 = vrot.lane.b32.xlu0 %v2186, 32
    %v2189 = vpop.permute.xlu0 %2188
    %v2191 = vadd.f32 %v2181, %v2189
    %v2192 = vtanh.pop %v2191
    %2194 = vrot.lane.b32.xlu0 %v2192, 64
    %v2195 = vpop.permute.xlu0 %2194
    %v2197 = vmul.f32 %v2175, %v2195
    %2199 = vrot.lane.b32.xlu0 %v2197, 32
    %v2200 = vpop.permute.xlu0 %2199
    %v2201 = vsel %vm810, %v2200, 0
    %2203 = vmatprep.subr.mxu0 0.0
    %2204 = vmatpush1.msra.mxu0 %v2072
    %2205 = vmatprep.subr.mxu0 0.0
    %2206 = vmatpush1.msra.mxu0 %v2073
    %2207 = vmatprep.subr.mxu0 0.0
    %2208 = vmatpush1.msra.mxu0 %v2074
    %2209 = vmatprep.subr.mxu0 0.0
    %2210 = vmatpush1.msra.mxu0 %v2075
    %2211 = vmatprep.subr.mxu0 0.0
    %2212 = vmatpush1.msra.mxu0 0.0
    %2213 = vmatprep.subr.mxu0 0.0
    %2214 = vmatpush1.msra.mxu0 0.0
    %2215 = vmatprep.subr.mxu0 0.0
    %2216 = vmatpush1.msra.mxu0 0.0
    %2217 = vmatprep.subr.mxu0 0.0
    %2218 = vmatpush1.msra.mxu0 0.0
    %2219 = vmatprep.subr.mxu0 0.0
    %2220 = vmatpush1.msra.mxu0 0.0
    %2221 = vmatprep.subr.mxu0 0.0
    %2222 = vmatpush1.msra.mxu0 0.0
    %2223 = vmatprep.subr.mxu0 0.0
    %2224 = vmatpush1.msra.mxu0 0.0
    %2225 = vmatprep.subr.mxu0 0.0
    %2226 = vmatpush1.msra.mxu0 0.0
    %2227 = vmatprep.subr.mxu0 0.0
    %2228 = vmatpush1.msra.mxu0 0.0
    %2229 = vmatprep.subr.mxu0 0.0
    %2230 = vmatpush1.msra.mxu0 0.0
    %2231 = vmatprep.subr.mxu0 0.0
    %2232 = vmatpush1.msra.mxu0 0.0
    %2233 = vmatprep.subr.mxu0 0.0
    %2234 = vmatpush1.msra.mxu0 0.0
    %2235 = vmatprep.subr.mxu0 0.0
    %2236 = vmatpush1.msra.mxu0 0.0
    %2237 = vmatprep.subr.mxu0 0.0
    %2238 = vmatpush1.msra.mxu0 0.0
    %2239 = vmatprep.subr.mxu0 0.0
    %2240 = vmatpush1.msra.mxu0 0.0
    %2241 = vmatprep.subr.mxu0 0.0
    %2242 = vmatpush1.msra.mxu0 0.0
    %2243 = vmatprep.subr.mxu0 0.0
    %2244 = vmatpush1.msra.mxu0 0.0
    %2245 = vmatprep.subr.mxu0 0.0
    %2246 = vmatpush1.msra.mxu0 0.0
    %2247 = vmatprep.subr.mxu0 0.0
    %2248 = vmatpush1.msra.mxu0 0.0
    %2249 = vmatprep.subr.mxu0 0.0
    %2250 = vmatpush1.msra.mxu0 0.0
    %2251 = vmatprep.subr.mxu0 0.0
    %2252 = vmatpush1.msra.mxu0 0.0
    %2253 = vmatprep.subr.mxu0 0.0
    %2254 = vmatpush1.msra.mxu0 0.0
    %2255 = vmatprep.subr.mxu0 0.0
    %2256 = vmatpush1.msra.mxu0 0.0
    %2257 = vmatprep.subr.mxu0 0.0
    %2258 = vmatpush1.msra.mxu0 0.0
    %2259 = vmatprep.subr.mxu0 0.0
    %2260 = vmatpush1.msra.mxu0 0.0
    %2261 = vmatprep.subr.mxu0 0.0
    %2262 = vmatpush1.msra.mxu0 0.0
    %2263 = vmatprep.subr.mxu0 0.0
    %2264 = vmatpush1.msra.mxu0 0.0
    %2265 = vmatprep.subr.mxu0 0.0
    %2266 = vmatpush1.msra.mxu0 0.0
    %2267 = vmatprep.mubr.f32.mxu0 0.0
    %2268 = vmatmul.mubr.f32.gmra.mrb[0].mxu0 %v2201
    %v2269 = vpop.f32.mrb[0].mxu0
    %v2270 = vadd.f32 0.0, %v2269
    %v2271 = vpop.f32.mrb[0].mxu0
    %2272 = vdwg.mxu0
    %v2273 = vadd.f32 %v1719, %v2270
    %v2274 = vxor.u32 %v2273, 2147483648
    %v2275 = vmul.f32 %v2274, 1.442695
    %v2276 = vpow.pop %v2275
    %v2277 = vadd.f32 %v2276, 1.0
    %v2278 = vrcp.pop %v2277
    %v2279 = vmul.f32 1.0, %v2278
    %v2280 = vtanh.pop %v2273
    %v2281 = vmul.f32 %v2279, %v2191
    %2283 = vrot.lane.b32.xlu0 %v2280, 64
    %v2284 = vpop.permute.xlu0 %2283
    %v2286 = vmul.f32 %v2279, %v2284
    %2288 = vrot.lane.b32.xlu0 %v2286, 32
    %v2289 = vpop.permute.xlu0 %2288
    %v2291 = vadd.f32 %v2281, %v2289
    %v2292 = vtanh.pop %v2291
    %2294 = vrot.lane.b32.xlu0 %v2292, 64
    %v2295 = vpop.permute.xlu0 %2294
    %v2297 = vmul.f32 %v2279, %v2295
    %2299 = vrot.lane.b32.xlu0 %v2297, 32
    %v2300 = vpop.permute.xlu0 %2299
    %v2301 = vsel %vm810, %v2300, 0
    %2303 = vmatprep.subr.mxu0 0.0
    %2304 = vmatpush1.msra.mxu0 %v2072
    %2305 = vmatprep.subr.mxu0 0.0
    %2306 = vmatpush1.msra.mxu0 %v2073
    %2307 = vmatprep.subr.mxu0 0.0
    %2308 = vmatpush1.msra.mxu0 %v2074
    %2309 = vmatprep.subr.mxu0 0.0
    %2310 = vmatpush1.msra.mxu0 %v2075
    %2311 = vmatprep.subr.mxu0 0.0
    %2312 = vmatpush1.msra.mxu0 0.0
    %2313 = vmatprep.subr.mxu0 0.0
    %2314 = vmatpush1.msra.mxu0 0.0
    %2315 = vmatprep.subr.mxu0 0.0
    %2316 = vmatpush1.msra.mxu0 0.0
    %2317 = vmatprep.subr.mxu0 0.0
    %2318 = vmatpush1.msra.mxu0 0.0
    %2319 = vmatprep.subr.mxu0 0.0
    %2320 = vmatpush1.msra.mxu0 0.0
    %2321 = vmatprep.subr.mxu0 0.0
    %2322 = vmatpush1.msra.mxu0 0.0
    %2323 = vmatprep.subr.mxu0 0.0
    %2324 = vmatpush1.msra.mxu0 0.0
    %2325 = vmatprep.subr.mxu0 0.0
    %2326 = vmatpush1.msra.mxu0 0.0
    %2327 = vmatprep.subr.mxu0 0.0
    %2328 = vmatpush1.msra.mxu0 0.0
    %2329 = vmatprep.subr.mxu0 0.0
    %2330 = vmatpush1.msra.mxu0 0.0
    %2331 = vmatprep.subr.mxu0 0.0
    %2332 = vmatpush1.msra.mxu0 0.0
    %2333 = vmatprep.subr.mxu0 0.0
    %2334 = vmatpush1.msra.mxu0 0.0
    %2335 = vmatprep.subr.mxu0 0.0
    %2336 = vmatpush1.msra.mxu0 0.0
    %2337 = vmatprep.subr.mxu0 0.0
    %2338 = vmatpush1.msra.mxu0 0.0
    %2339 = vmatprep.subr.mxu0 0.0
    %2340 = vmatpush1.msra.mxu0 0.0
    %2341 = vmatprep.subr.mxu0 0.0
    %2342 = vmatpush1.msra.mxu0 0.0
    %2343 = vmatprep.subr.mxu0 0.0
    %2344 = vmatpush1.msra.mxu0 0.0
    %2345 = vmatprep.subr.mxu0 0.0
    %2346 = vmatpush1.msra.mxu0 0.0
    %2347 = vmatprep.subr.mxu0 0.0
    %2348 = vmatpush1.msra.mxu0 0.0
    %2349 = vmatprep.subr.mxu0 0.0
    %2350 = vmatpush1.msra.mxu0 0.0
    %2351 = vmatprep.subr.mxu0 0.0
    %2352 = vmatpush1.msra.mxu0 0.0
    %2353 = vmatprep.subr.mxu0 0.0
    %2354 = vmatpush1.msra.mxu0 0.0
    %2355 = vmatprep.subr.mxu0 0.0
    %2356 = vmatpush1.msra.mxu0 0.0
    %2357 = vmatprep.subr.mxu0 0.0
    %2358 = vmatpush1.msra.mxu0 0.0
    %2359 = vmatprep.subr.mxu0 0.0
    %2360 = vmatpush1.msra.mxu0 0.0
    %2361 = vmatprep.subr.mxu0 0.0
    %2362 = vmatpush1.msra.mxu0 0.0
    %2363 = vmatprep.subr.mxu0 0.0
    %2364 = vmatpush1.msra.mxu0 0.0
    %2365 = vmatprep.subr.mxu0 0.0
    %2366 = vmatpush1.msra.mxu0 0.0
    %2367 = vmatprep.mubr.f32.mxu0 0.0
    %2368 = vmatmul.mubr.f32.gmra.mrb[0].mxu0 %v2301
    %v2369 = vpop.f32.mrb[0].mxu0
    %v2370 = vadd.f32 0.0, %v2369
    %v2371 = vpop.f32.mrb[0].mxu0
    %2372 = vdwg.mxu0
    %v2373 = vadd.f32 %v1789, %v2370
    %v2374 = vxor.u32 %v2373, 2147483648
    %v2375 = vmul.f32 %v2374, 1.442695
    %v2376 = vpow.pop %v2375
    %v2377 = vadd.f32 %v2376, 1.0
    %v2378 = vrcp.pop %v2377
    %v2379 = vmul.f32 1.0, %v2378
    %v2380 = vtanh.pop %v2373
    %v2381 = vmul.f32 %v2379, %v2291
    %2383 = vrot.lane.b32.xlu0 %v2380, 64
    %v2384 = vpop.permute.xlu0 %2383
    %v2386 = vmul.f32 %v2379, %v2384
    %2388 = vrot.lane.b32.xlu0 %v2386, 32
    %v2389 = vpop.permute.xlu0 %2388
    %v2391 = vadd.f32 %v2381, %v2389
    %v2392 = vtanh.pop %v2391
    %2394 = vrot.lane.b32.xlu0 %v2392, 64
    %v2395 = vpop.permute.xlu0 %2394
    %v2397 = vmul.f32 %v2379, %v2395
    %2399 = vrot.lane.b32.xlu0 %v2397, 32
    %v2400 = vpop.permute.xlu0 %2399
    %v2401 = vsel %vm810, %v2400, 0
    %2403 = vmatprep.subr.mxu0 0.0
    %2404 = vmatpush1.msra.mxu0 %v2072
    %2405 = vmatprep.subr.mxu0 0.0
    %2406 = vmatpush1.msra.mxu0 %v2073
    %2407 = vmatprep.subr.mxu0 0.0
    %2408 = vmatpush1.msra.mxu0 %v2074
    %2409 = vmatprep.subr.mxu0 0.0
    %2410 = vmatpush1.msra.mxu0 %v2075
    %2411 = vmatprep.subr.mxu0 0.0
    %2412 = vmatpush1.msra.mxu0 0.0
    %2413 = vmatprep.subr.mxu0 0.0
    %2414 = vmatpush1.msra.mxu0 0.0
    %2415 = vmatprep.subr.mxu0 0.0
    %2416 = vmatpush1.msra.mxu0 0.0
    %2417 = vmatprep.subr.mxu0 0.0
    %2418 = vmatpush1.msra.mxu0 0.0
    %2419 = vmatprep.subr.mxu0 0.0
    %2420 = vmatpush1.msra.mxu0 0.0
    %2421 = vmatprep.subr.mxu0 0.0
    %2422 = vmatpush1.msra.mxu0 0.0
    %2423 = vmatprep.subr.mxu0 0.0
    %2424 = vmatpush1.msra.mxu0 0.0
    %2425 = vmatprep.subr.mxu0 0.0
    %2426 = vmatpush1.msra.mxu0 0.0
    %2427 = vmatprep.subr.mxu0 0.0
    %2428 = vmatpush1.msra.mxu0 0.0
    %2429 = vmatprep.subr.mxu0 0.0
    %2430 = vmatpush1.msra.mxu0 0.0
    %2431 = vmatprep.subr.mxu0 0.0
    %2432 = vmatpush1.msra.mxu0 0.0
    %2433 = vmatprep.subr.mxu0 0.0
    %2434 = vmatpush1.msra.mxu0 0.0
    %2435 = vmatprep.subr.mxu0 0.0
    %2436 = vmatpush1.msra.mxu0 0.0
    %2437 = vmatprep.subr.mxu0 0.0
    %2438 = vmatpush1.msra.mxu0 0.0
    %2439 = vmatprep.subr.mxu0 0.0
    %2440 = vmatpush1.msra.mxu0 0.0
    %2441 = vmatprep.subr.mxu0 0.0
    %2442 = vmatpush1.msra.mxu0 0.0
    %2443 = vmatprep.subr.mxu0 0.0
    %2444 = vmatpush1.msra.mxu0 0.0
    %2445 = vmatprep.subr.mxu0 0.0
    %2446 = vmatpush1.msra.mxu0 0.0
    %2447 = vmatprep.subr.mxu0 0.0
    %2448 = vmatpush1.msra.mxu0 0.0
    %2449 = vmatprep.subr.mxu0 0.0
    %2450 = vmatpush1.msra.mxu0 0.0
    %2451 = vmatprep.subr.mxu0 0.0
    %2452 = vmatpush1.msra.mxu0 0.0
    %2453 = vmatprep.subr.mxu0 0.0
    %2454 = vmatpush1.msra.mxu0 0.0
    %2455 = vmatprep.subr.mxu0 0.0
    %2456 = vmatpush1.msra.mxu0 0.0
    %2457 = vmatprep.subr.mxu0 0.0
    %2458 = vmatpush1.msra.mxu0 0.0
    %2459 = vmatprep.subr.mxu0 0.0
    %2460 = vmatpush1.msra.mxu0 0.0
    %2461 = vmatprep.subr.mxu0 0.0
    %2462 = vmatpush1.msra.mxu0 0.0
    %2463 = vmatprep.subr.mxu0 0.0
    %2464 = vmatpush1.msra.mxu0 0.0
    %2465 = vmatprep.subr.mxu0 0.0
    %2466 = vmatpush1.msra.mxu0 0.0
    %2467 = vmatprep.mubr.f32.mxu0 0.0
    %2468 = vmatmul.mubr.f32.gmra.mrb[0].mxu0 %v2401
    %v2469 = vpop.f32.mrb[0].mxu0
    %v2470 = vadd.f32 0.0, %v2469
    %v2471 = vpop.f32.mrb[0].mxu0
    %2472 = vdwg.mxu0
    %v2473 = vadd.f32 %v1859, %v2470
    %v2474 = vxor.u32 %v2473, 2147483648
    %v2475 = vmul.f32 %v2474, 1.442695
    %v2476 = vpow.pop %v2475
    %v2477 = vadd.f32 %v2476, 1.0
    %v2478 = vrcp.pop %v2477
    %v2479 = vmul.f32 1.0, %v2478
    %v2480 = vtanh.pop %v2473
    %v2481 = vmul.f32 %v2479, %v2391
    %2483 = vrot.lane.b32.xlu0 %v2480, 64
    %v2484 = vpop.permute.xlu0 %2483
    %v2486 = vmul.f32 %v2479, %v2484
    %2488 = vrot.lane.b32.xlu0 %v2486, 32
    %v2489 = vpop.permute.xlu0 %2488
    %v2491 = vadd.f32 %v2481, %v2489
    %v2492 = vtanh.pop %v2491
    %2494 = vrot.lane.b32.xlu0 %v2492, 64
    %v2495 = vpop.permute.xlu0 %2494
    %v2497 = vmul.f32 %v2479, %v2495
    %2499 = vrot.lane.b32.xlu0 %v2497, 32
    %v2500 = vpop.permute.xlu0 %2499
    %v2501 = vsel %vm810, %v2500, 0
    %2503 = vmatprep.subr.mxu0 0.0
    %2504 = vmatpush1.msra.mxu0 %v2072
    %2505 = vmatprep.subr.mxu0 0.0
    %2506 = vmatpush1.msra.mxu0 %v2073
    %2507 = vmatprep.subr.mxu0 0.0
    %2508 = vmatpush1.msra.mxu0 %v2074
    %2509 = vmatprep.subr.mxu0 0.0
    %2510 = vmatpush1.msra.mxu0 %v2075
    %2511 = vmatprep.subr.mxu0 0.0
    %2512 = vmatpush1.msra.mxu0 0.0
    %2513 = vmatprep.subr.mxu0 0.0
    %2514 = vmatpush1.msra.mxu0 0.0
    %2515 = vmatprep.subr.mxu0 0.0
    %2516 = vmatpush1.msra.mxu0 0.0
    %2517 = vmatprep.subr.mxu0 0.0
    %2518 = vmatpush1.msra.mxu0 0.0
    %2519 = vmatprep.subr.mxu0 0.0
    %2520 = vmatpush1.msra.mxu0 0.0
    %2521 = vmatprep.subr.mxu0 0.0
    %2522 = vmatpush1.msra.mxu0 0.0
    %2523 = vmatprep.subr.mxu0 0.0
    %2524 = vmatpush1.msra.mxu0 0.0
    %2525 = vmatprep.subr.mxu0 0.0
    %2526 = vmatpush1.msra.mxu0 0.0
    %2527 = vmatprep.subr.mxu0 0.0
    %2528 = vmatpush1.msra.mxu0 0.0
    %2529 = vmatprep.subr.mxu0 0.0
    %2530 = vmatpush1.msra.mxu0 0.0
    %2531 = vmatprep.subr.mxu0 0.0
    %2532 = vmatpush1.msra.mxu0 0.0
    %2533 = vmatprep.subr.mxu0 0.0
    %2534 = vmatpush1.msra.mxu0 0.0
    %2535 = vmatprep.subr.mxu0 0.0
    %2536 = vmatpush1.msra.mxu0 0.0
    %2537 = vmatprep.subr.mxu0 0.0
    %2538 = vmatpush1.msra.mxu0 0.0
    %2539 = vmatprep.subr.mxu0 0.0
    %2540 = vmatpush1.msra.mxu0 0.0
    %2541 = vmatprep.subr.mxu0 0.0
    %2542 = vmatpush1.msra.mxu0 0.0
    %2543 = vmatprep.subr.mxu0 0.0
    %2544 = vmatpush1.msra.mxu0 0.0
    %2545 = vmatprep.subr.mxu0 0.0
    %2546 = vmatpush1.msra.mxu0 0.0
    %2547 = vmatprep.subr.mxu0 0.0
    %2548 = vmatpush1.msra.mxu0 0.0
    %2549 = vmatprep.subr.mxu0 0.0
    %2550 = vmatpush1.msra.mxu0 0.0
    %2551 = vmatprep.subr.mxu0 0.0
    %2552 = vmatpush1.msra.mxu0 0.0
    %2553 = vmatprep.subr.mxu0 0.0
    %2554 = vmatpush1.msra.mxu0 0.0
    %2555 = vmatprep.subr.mxu0 0.0
    %2556 = vmatpush1.msra.mxu0 0.0
    %2557 = vmatprep.subr.mxu0 0.0
    %2558 = vmatpush1.msra.mxu0 0.0
    %2559 = vmatprep.subr.mxu0 0.0
    %2560 = vmatpush1.msra.mxu0 0.0
    %2561 = vmatprep.subr.mxu0 0.0
    %2562 = vmatpush1.msra.mxu0 0.0
    %2563 = vmatprep.subr.mxu0 0.0
    %2564 = vmatpush1.msra.mxu0 0.0
    %2565 = vmatprep.subr.mxu0 0.0
    %2566 = vmatpush1.msra.mxu0 0.0
    %2567 = vmatprep.mubr.f32.mxu0 0.0
    %2568 = vmatmul.mubr.f32.gmra.mrb[0].mxu0 %v2501
    %v2569 = vpop.f32.mrb[0].mxu0
    %v2570 = vadd.f32 0.0, %v2569
    %v2571 = vpop.f32.mrb[0].mxu0
    %2572 = vdwg.mxu0
    %v2573 = vadd.f32 %v1929, %v2570
    %v2574 = vxor.u32 %v2573, 2147483648
    %v2575 = vmul.f32 %v2574, 1.442695
    %v2576 = vpow.pop %v2575
    %v2577 = vadd.f32 %v2576, 1.0
    %v2578 = vrcp.pop %v2577
    %v2579 = vmul.f32 1.0, %v2578
    %v2580 = vtanh.pop %v2573
    %v2581 = vmul.f32 %v2579, %v2491
    %2583 = vrot.lane.b32.xlu0 %v2580, 64
    %v2584 = vpop.permute.xlu0 %2583
    %v2586 = vmul.f32 %v2579, %v2584
    %2588 = vrot.lane.b32.xlu0 %v2586, 32
    %v2589 = vpop.permute.xlu0 %2588
    %v2591 = vadd.f32 %v2581, %v2589
    %v2592 = vtanh.pop %v2591
    %2594 = vrot.lane.b32.xlu0 %v2592, 64
    %v2595 = vpop.permute.xlu0 %2594
    %v2597 = vmul.f32 %v2579, %v2595
    %2599 = vrot.lane.b32.xlu0 %v2597, 32
    %v2600 = vpop.permute.xlu0 %2599
    %v2601 = vsel %vm810, %v2600, 0
    %2603 = vmatprep.subr.mxu0 0.0
    %2604 = vmatpush1.msra.mxu0 %v2072
    %2605 = vmatprep.subr.mxu0 0.0
    %2606 = vmatpush1.msra.mxu0 %v2073
    %2607 = vmatprep.subr.mxu0 0.0
    %2608 = vmatpush1.msra.mxu0 %v2074
    %2609 = vmatprep.subr.mxu0 0.0
    %2610 = vmatpush1.msra.mxu0 %v2075
    %2611 = vmatprep.subr.mxu0 0.0
    %2612 = vmatpush1.msra.mxu0 0.0
    %2613 = vmatprep.subr.mxu0 0.0
    %2614 = vmatpush1.msra.mxu0 0.0
    %2615 = vmatprep.subr.mxu0 0.0
    %2616 = vmatpush1.msra.mxu0 0.0
    %2617 = vmatprep.subr.mxu0 0.0
    %2618 = vmatpush1.msra.mxu0 0.0
    %2619 = vmatprep.subr.mxu0 0.0
    %2620 = vmatpush1.msra.mxu0 0.0
    %2621 = vmatprep.subr.mxu0 0.0
    %2622 = vmatpush1.msra.mxu0 0.0
    %2623 = vmatprep.subr.mxu0 0.0
    %2624 = vmatpush1.msra.mxu0 0.0
    %2625 = vmatprep.subr.mxu0 0.0
    %2626 = vmatpush1.msra.mxu0 0.0
    %2627 = vmatprep.subr.mxu0 0.0
    %2628 = vmatpush1.msra.mxu0 0.0
    %2629 = vmatprep.subr.mxu0 0.0
    %2630 = vmatpush1.msra.mxu0 0.0
    %2631 = vmatprep.subr.mxu0 0.0
    %2632 = vmatpush1.msra.mxu0 0.0
    %2633 = vmatprep.subr.mxu0 0.0
    %2634 = vmatpush1.msra.mxu0 0.0
    %2635 = vmatprep.subr.mxu0 0.0
    %2636 = vmatpush1.msra.mxu0 0.0
    %2637 = vmatprep.subr.mxu0 0.0
    %2638 = vmatpush1.msra.mxu0 0.0
    %2639 = vmatprep.subr.mxu0 0.0
    %2640 = vmatpush1.msra.mxu0 0.0
    %2641 = vmatprep.subr.mxu0 0.0
    %2642 = vmatpush1.msra.mxu0 0.0
    %2643 = vmatprep.subr.mxu0 0.0
    %2644 = vmatpush1.msra.mxu0 0.0
    %2645 = vmatprep.subr.mxu0 0.0
    %2646 = vmatpush1.msra.mxu0 0.0
    %2647 = vmatprep.subr.mxu0 0.0
    %2648 = vmatpush1.msra.mxu0 0.0
    %2649 = vmatprep.subr.mxu0 0.0
    %2650 = vmatpush1.msra.mxu0 0.0
    %2651 = vmatprep.subr.mxu0 0.0
    %2652 = vmatpush1.msra.mxu0 0.0
    %2653 = vmatprep.subr.mxu0 0.0
    %2654 = vmatpush1.msra.mxu0 0.0
    %2655 = vmatprep.subr.mxu0 0.0
    %2656 = vmatpush1.msra.mxu0 0.0
    %2657 = vmatprep.subr.mxu0 0.0
    %2658 = vmatpush1.msra.mxu0 0.0
    %2659 = vmatprep.subr.mxu0 0.0
    %2660 = vmatpush1.msra.mxu0 0.0
    %2661 = vmatprep.subr.mxu0 0.0
    %2662 = vmatpush1.msra.mxu0 0.0
    %2663 = vmatprep.subr.mxu0 0.0
    %2664 = vmatpush1.msra.mxu0 0.0
    %2665 = vmatprep.subr.mxu0 0.0
    %2666 = vmatpush1.msra.mxu0 0.0
    %2667 = vmatprep.mubr.f32.mxu0 0.0
    %2668 = vmatmul.mubr.f32.gmra.mrb[0].mxu0 %v2601
    %v2669 = vpop.f32.mrb[0].mxu0
    %v2670 = vadd.f32 0.0, %v2669
    %v2671 = vpop.f32.mrb[0].mxu0
    %2672 = vdwg.mxu0
    %v2673 = vadd.f32 %v1999, %v2670
    %v2674 = vxor.u32 %v2673, 2147483648
    %v2675 = vmul.f32 %v2674, 1.442695
    %v2676 = vpow.pop %v2675
    %v2677 = vadd.f32 %v2676, 1.0
    %v2678 = vrcp.pop %v2677
    %v2679 = vmul.f32 1.0, %v2678
    %v2680 = vtanh.pop %v2673
    %v2681 = vmul.f32 %v2679, %v2591
    %2683 = vrot.lane.b32.xlu0 %v2680, 64
    %v2684 = vpop.permute.xlu0 %2683
    %v2686 = vmul.f32 %v2679, %v2684
    %2688 = vrot.lane.b32.xlu0 %v2686, 32
    %v2689 = vpop.permute.xlu0 %2688
    %v2691 = vadd.f32 %v2681, %v2689
    %v2692 = vtanh.pop %v2691
    %2694 = vrot.lane.b32.xlu0 %v2692, 64
    %v2695 = vpop.permute.xlu0 %2694
    %v2697 = vmul.f32 %v2679, %v2695
    %2699 = vrot.lane.b32.xlu0 %v2697, 32
    %v2700 = vpop.permute.xlu0 %2699
    %v2701 = vsel %vm810, %v2700, 0
    %2703 = vmatprep.subr.mxu0 0.0
    %2704 = vmatpush1.msra.mxu0 %v2072
    %2705 = vmatprep.subr.mxu0 0.0
    %2706 = vmatpush1.msra.mxu0 %v2073
    %2707 = vmatprep.subr.mxu0 0.0
    %2708 = vmatpush1.msra.mxu0 %v2074
    %2709 = vmatprep.subr.mxu0 0.0
    %2710 = vmatpush1.msra.mxu0 %v2075
    %2711 = vmatprep.subr.mxu0 0.0
    %2712 = vmatpush1.msra.mxu0 0.0
    %2713 = vmatprep.subr.mxu0 0.0
    %2714 = vmatpush1.msra.mxu0 0.0
    %2715 = vmatprep.subr.mxu0 0.0
    %2716 = vmatpush1.msra.mxu0 0.0
    %2717 = vmatprep.subr.mxu0 0.0
    %2718 = vmatpush1.msra.mxu0 0.0
    %2719 = vmatprep.subr.mxu0 0.0
    %2720 = vmatpush1.msra.mxu0 0.0
    %2721 = vmatprep.subr.mxu0 0.0
    %2722 = vmatpush1.msra.mxu0 0.0
    %2723 = vmatprep.subr.mxu0 0.0
    %2724 = vmatpush1.msra.mxu0 0.0
    %2725 = vmatprep.subr.mxu0 0.0
    %2726 = vmatpush1.msra.mxu0 0.0
    %2727 = vmatprep.subr.mxu0 0.0
    %2728 = vmatpush1.msra.mxu0 0.0
    %2729 = vmatprep.subr.mxu0 0.0
    %2730 = vmatpush1.msra.mxu0 0.0
    %2731 = vmatprep.subr.mxu0 0.0
    %2732 = vmatpush1.msra.mxu0 0.0
    %2733 = vmatprep.subr.mxu0 0.0
    %2734 = vmatpush1.msra.mxu0 0.0
    %2735 = vmatprep.subr.mxu0 0.0
    %2736 = vmatpush1.msra.mxu0 0.0
    %2737 = vmatprep.subr.mxu0 0.0
    %2738 = vmatpush1.msra.mxu0 0.0
    %2739 = vmatprep.subr.mxu0 0.0
    %2740 = vmatpush1.msra.mxu0 0.0
    %2741 = vmatprep.subr.mxu0 0.0
    %2742 = vmatpush1.msra.mxu0 0.0
    %2743 = vmatprep.subr.mxu0 0.0
    %2744 = vmatpush1.msra.mxu0 0.0
    %2745 = vmatprep.subr.mxu0 0.0
    %2746 = vmatpush1.msra.mxu0 0.0
    %2747 = vmatprep.subr.mxu0 0.0
    %2748 = vmatpush1.msra.mxu0 0.0
    %2749 = vmatprep.subr.mxu0 0.0
    %2750 = vmatpush1.msra.mxu0 0.0
    %2751 = vmatprep.subr.mxu0 0.0
    %2752 = vmatpush1.msra.mxu0 0.0
    %2753 = vmatprep.subr.mxu0 0.0
    %2754 = vmatpush1.msra.mxu0 0.0
    %2755 = vmatprep.subr.mxu0 0.0
    %2756 = vmatpush1.msra.mxu0 0.0
    %2757 = vmatprep.subr.mxu0 0.0
    %2758 = vmatpush1.msra.mxu0 0.0
    %2759 = vmatprep.subr.mxu0 0.0
    %2760 = vmatpush1.msra.mxu0 0.0
    %2761 = vmatprep.subr.mxu0 0.0
    %2762 = vmatpush1.msra.mxu0 0.0
    %2763 = vmatprep.subr.mxu0 0.0
    %2764 = vmatpush1.msra.mxu0 0.0
    %2765 = vmatprep.subr.mxu0 0.0
    %2766 = vmatpush1.msra.mxu0 0.0
    %2767 = vmatprep.mubr.f32.mxu0 0.0
    %2768 = vmatmul.mubr.f32.gmra.mrb[0].mxu0 %v2701
    %v2769 = vpop.f32.mrb[0].mxu0
    %v2770 = vadd.f32 0.0, %v2769
    %v2771 = vpop.f32.mrb[0].mxu0
    %2772 = vdwg.mxu0
    %v2773 = vadd.f32 %v2069, %v2770
    %v2774 = vxor.u32 %v2773, 2147483648
    %v2775 = vmul.f32 %v2774, 1.442695
    %v2776 = vpow.pop %v2775
    %v2777 = vadd.f32 %v2776, 1.0
    %v2778 = vrcp.pop %v2777
    %v2779 = vmul.f32 1.0, %v2778
    %v2780 = vtanh.pop %v2773
    %v2781 = vmul.f32 %v2779, %v2691
    %2783 = vrot.lane.b32.xlu0 %v2780, 64
    %v2784 = vpop.permute.xlu0 %2783
    %v2786 = vmul.f32 %v2779, %v2784
    %2788 = vrot.lane.b32.xlu0 %v2786, 32
    %v2789 = vpop.permute.xlu0 %2788
    %v2791 = vadd.f32 %v2781, %v2789
    %v2792 = vtanh.pop %v2791
    %2794 = vrot.lane.b32.xlu0 %v2792, 64
    %v2795 = vpop.permute.xlu0 %2794
    %v2797 = vmul.f32 %v2779, %v2795
    %v2798 = vld [vmem:[#allocation11] sm:$0x1]
    %v2800 = vlaneseq
    %v2801 = vshrl.u32 %v2800, 7
    %v2802 = vsub.s32 0, %v2801
    %v2803 = vrot.slane %v2798, %v2802
    %v2805 = vld [vmem:[#allocation14] sm:$0x1]
    %v2807 = vlaneseq
    %v2808 = vshrl.u32 %v2807, 7
    %v2809 = vsub.s32 0, %v2808
    %v2810 = vrot.slane %v2805, %v2809
    %v2812 = vld [vmem:[%s7] sm:$0xff]
    %v2813 = vld [vmem:[%s7 + $0x8] sm:$0xff]
    %v2814 = vld [vmem:[%s7 + $0x10] sm:$0xff]
    %v2815 = vld [vmem:[%s7 + $0x18] sm:$0xff]
    %v2816 = vld [vmem:[%s7 + $0x20] sm:$0xff]
    %v2817 = vld [vmem:[%s7 + $0x28] sm:$0xff]
    %v2818 = vld [vmem:[%s7 + $0x30] sm:$0xff]
    %v2819 = vld [vmem:[%s7 + $0x38] sm:$0xff]
    %v2820 = vld [vmem:[%s10] sm:$0xff]
    %v2821 = vld [vmem:[%s10 + $0x8] sm:$0xff]
    %v2822 = vld [vmem:[%s10 + $0x10] sm:$0xff]
    %v2823 = vld [vmem:[%s10 + $0x18] sm:$0xff]
    %v2824 = vld [vmem:[%s10 + $0x20] sm:$0xff]
    %v2825 = vld [vmem:[%s10 + $0x28] sm:$0xff]
    %v2826 = vld [vmem:[%s10 + $0x30] sm:$0xff]
    %v2827 = vld [vmem:[%s10 + $0x38] sm:$0xff]
    %2829 = vrot.lane.b32.xlu0 %v2797, 32
    %v2830 = vpop.permute.xlu0 %2829
    %v2831 = vsel %vm810, %v2830, 0
    %2833 = vmatprep.subr.mxu0 0.0
    %2834 = vmatpush1.msra.mxu0 %v2816
    %2835 = vmatprep.subr.mxu0 0.0
    %2836 = vmatpush1.msra.mxu0 %v2817
    %2837 = vmatprep.subr.mxu0 0.0
    %2838 = vmatpush1.msra.mxu0 %v2818
    %2839 = vmatprep.subr.mxu0 0.0
    %2840 = vmatpush1.msra.mxu0 %v2819
    %2841 = vmatprep.subr.mxu0 0.0
    %2842 = vmatpush1.msra.mxu0 0.0
    %2843 = vmatprep.subr.mxu0 0.0
    %2844 = vmatpush1.msra.mxu0 0.0
    %2845 = vmatprep.subr.mxu0 0.0
    %2846 = vmatpush1.msra.mxu0 0.0
    %2847 = vmatprep.subr.mxu0 0.0
    %2848 = vmatpush1.msra.mxu0 0.0
    %2849 = vmatprep.subr.mxu0 0.0
    %2850 = vmatpush1.msra.mxu0 0.0
    %2851 = vmatprep.subr.mxu0 0.0
    %2852 = vmatpush1.msra.mxu0 0.0
    %2853 = vmatprep.subr.mxu0 0.0
    %2854 = vmatpush1.msra.mxu0 0.0
    %2855 = vmatprep.subr.mxu0 0.0
    %2856 = vmatpush1.msra.mxu0 0.0
    %2857 = vmatprep.subr.mxu0 0.0
    %2858 = vmatpush1.msra.mxu0 0.0
    %2859 = vmatprep.subr.mxu0 0.0
    %2860 = vmatpush1.msra.mxu0 0.0
    %2861 = vmatprep.subr.mxu0 0.0
    %2862 = vmatpush1.msra.mxu0 0.0
    %2863 = vmatprep.subr.mxu0 0.0
    %2864 = vmatpush1.msra.mxu0 0.0
    %2865 = vmatprep.subr.mxu0 0.0
    %2866 = vmatpush1.msra.mxu0 0.0
    %2867 = vmatprep.subr.mxu0 0.0
    %2868 = vmatpush1.msra.mxu0 0.0
    %2869 = vmatprep.subr.mxu0 0.0
    %2870 = vmatpush1.msra.mxu0 0.0
    %2871 = vmatprep.subr.mxu0 0.0
    %2872 = vmatpush1.msra.mxu0 0.0
    %2873 = vmatprep.subr.mxu0 0.0
    %2874 = vmatpush1.msra.mxu0 0.0
    %2875 = vmatprep.subr.mxu0 0.0
    %2876 = vmatpush1.msra.mxu0 0.0
    %2877 = vmatprep.subr.mxu0 0.0
    %2878 = vmatpush1.msra.mxu0 0.0
    %2879 = vmatprep.subr.mxu0 0.0
    %2880 = vmatpush1.msra.mxu0 0.0
    %2881 = vmatprep.subr.mxu0 0.0
    %2882 = vmatpush1.msra.mxu0 0.0
    %2883 = vmatprep.subr.mxu0 0.0
    %2884 = vmatpush1.msra.mxu0 0.0
    %2885 = vmatprep.subr.mxu0 0.0
    %2886 = vmatpush1.msra.mxu0 0.0
    %2887 = vmatprep.subr.mxu0 0.0
    %2888 = vmatpush1.msra.mxu0 0.0
    %2889 = vmatprep.subr.mxu0 0.0
    %2890 = vmatpush1.msra.mxu0 0.0
    %2891 = vmatprep.subr.mxu0 0.0
    %2892 = vmatpush1.msra.mxu0 0.0
    %2893 = vmatprep.subr.mxu0 0.0
    %2894 = vmatpush1.msra.mxu0 0.0
    %2895 = vmatprep.subr.mxu0 0.0
    %2896 = vmatpush1.msra.mxu0 0.0
    %2897 = vmatprep.mubr.f32.mxu0 0.0
    %2898 = vmatmul.mubr.f32.gmra.mrb[0].mxu0 %v2831
    %v2899 = vpop.f32.mrb[0].mxu0
    %v2900 = vadd.f32 0.0, %v2899
    %v2901 = vpop.f32.mrb[0].mxu0
    %2902 = vdwg.mxu0
    %2903 = vmatprep.subr.mxu0 0.0
    %2904 = vmatpush1.msra.mxu0 %v2812
    %2905 = vmatprep.subr.mxu0 0.0
    %2906 = vmatpush1.msra.mxu0 %v2813
    %2907 = vmatprep.subr.mxu0 0.0
    %2908 = vmatpush1.msra.mxu0 %v2814
    %2909 = vmatprep.subr.mxu0 0.0
    %2910 = vmatpush1.msra.mxu0 %v2815
    %2911 = vmatprep.subr.mxu0 0.0
    %2912 = vmatpush1.msra.mxu0 0.0
    %2913 = vmatprep.subr.mxu0 0.0
    %2914 = vmatpush1.msra.mxu0 0.0
    %2915 = vmatprep.subr.mxu0 0.0
    %2916 = vmatpush1.msra.mxu0 0.0
    %2917 = vmatprep.subr.mxu0 0.0
    %2918 = vmatpush1.msra.mxu0 0.0
    %2919 = vmatprep.subr.mxu0 0.0
    %2920 = vmatpush1.msra.mxu0 0.0
    %2921 = vmatprep.subr.mxu0 0.0
    %2922 = vmatpush1.msra.mxu0 0.0
    %2923 = vmatprep.subr.mxu0 0.0
    %2924 = vmatpush1.msra.mxu0 0.0
    %2925 = vmatprep.subr.mxu0 0.0
    %2926 = vmatpush1.msra.mxu0 0.0
    %2927 = vmatprep.subr.mxu0 0.0
    %2928 = vmatpush1.msra.mxu0 0.0
    %2929 = vmatprep.subr.mxu0 0.0
    %2930 = vmatpush1.msra.mxu0 0.0
    %2931 = vmatprep.subr.mxu0 0.0
    %2932 = vmatpush1.msra.mxu0 0.0
    %2933 = vmatprep.subr.mxu0 0.0
    %2934 = vmatpush1.msra.mxu0 0.0
    %2935 = vmatprep.subr.mxu0 0.0
    %2936 = vmatpush1.msra.mxu0 0.0
    %2937 = vmatprep.subr.mxu0 0.0
    %2938 = vmatpush1.msra.mxu0 0.0
    %2939 = vmatprep.subr.mxu0 0.0
    %2940 = vmatpush1.msra.mxu0 0.0
    %2941 = vmatprep.subr.mxu0 0.0
    %2942 = vmatpush1.msra.mxu0 0.0
    %2943 = vmatprep.subr.mxu0 0.0
    %2944 = vmatpush1.msra.mxu0 0.0
    %2945 = vmatprep.subr.mxu0 0.0
    %2946 = vmatpush1.msra.mxu0 0.0
    %2947 = vmatprep.subr.mxu0 0.0
    %2948 = vmatpush1.msra.mxu0 0.0
    %2949 = vmatprep.subr.mxu0 0.0
    %2950 = vmatpush1.msra.mxu0 0.0
    %2951 = vmatprep.subr.mxu0 0.0
    %2952 = vmatpush1.msra.mxu0 0.0
    %2953 = vmatprep.subr.mxu0 0.0
    %2954 = vmatpush1.msra.mxu0 0.0
    %2955 = vmatprep.subr.mxu0 0.0
    %2956 = vmatpush1.msra.mxu0 0.0
    %2957 = vmatprep.subr.mxu0 0.0
    %2958 = vmatpush1.msra.mxu0 0.0
    %2959 = vmatprep.subr.mxu0 0.0
    %2960 = vmatpush1.msra.mxu0 0.0
    %2961 = vmatprep.subr.mxu0 0.0
    %2962 = vmatpush1.msra.mxu0 0.0
    %2963 = vmatprep.subr.mxu0 0.0
    %2964 = vmatpush1.msra.mxu0 0.0
    %2965 = vmatprep.subr.mxu0 0.0
    %2966 = vmatpush1.msra.mxu0 0.0
    %2967 = vmatprep.mubr.f32.mxu0 0.0
    %2968 = vmatmul.mubr.f32.gmra.mrb[0].mxu0 %v811
    %v2969 = vpop.f32.mrb[0].mxu0
    %v2970 = vadd.f32 %v2900, %v2969
    %v2971 = vpop.f32.mrb[0].mxu0
    %2972 = vdwg.mxu0
    %v2973 = vadd.f32 %v2970, %v2803
    %2974 = vmatprep.subr.mxu0 0.0
    %2975 = vmatpush1.msra.mxu0 %v2816
    %2976 = vmatprep.subr.mxu0 0.0
    %2977 = vmatpush1.msra.mxu0 %v2817
    %2978 = vmatprep.subr.mxu0 0.0
    %2979 = vmatpush1.msra.mxu0 %v2818
    %2980 = vmatprep.subr.mxu0 0.0
    %2981 = vmatpush1.msra.mxu0 %v2819
    %2982 = vmatprep.subr.mxu0 0.0
    %2983 = vmatpush1.msra.mxu0 0.0
    %2984 = vmatprep.subr.mxu0 0.0
    %2985 = vmatpush1.msra.mxu0 0.0
    %2986 = vmatprep.subr.mxu0 0.0
    %2987 = vmatpush1.msra.mxu0 0.0
    %2988 = vmatprep.subr.mxu0 0.0
    %2989 = vmatpush1.msra.mxu0 0.0
    %2990 = vmatprep.subr.mxu0 0.0
    %2991 = vmatpush1.msra.mxu0 0.0
    %2992 = vmatprep.subr.mxu0 0.0
    %2993 = vmatpush1.msra.mxu0 0.0
    %2994 = vmatprep.subr.mxu0 0.0
    %2995 = vmatpush1.msra.mxu0 0.0
    %2996 = vmatprep.subr.mxu0 0.0
    %2997 = vmatpush1.msra.mxu0 0.0
    %2998 = vmatprep.subr.mxu0 0.0
    %2999 = vmatpush1.msra.mxu0 0.0
    %3000 = vmatprep.subr.mxu0 0.0
    %3001 = vmatpush1.msra.mxu0 0.0
    %3002 = vmatprep.subr.mxu0 0.0
    %3003 = vmatpush1.msra.mxu0 0.0
    %3004 = vmatprep.subr.mxu0 0.0
    %3005 = vmatpush1.msra.mxu0 0.0
    %3006 = vmatprep.subr.mxu0 0.0
    %3007 = vmatpush1.msra.mxu0 0.0
    %3008 = vmatprep.subr.mxu0 0.0
    %3009 = vmatpush1.msra.mxu0 0.0
    %3010 = vmatprep.subr.mxu0 0.0
    %3011 = vmatpush1.msra.mxu0 0.0
    %3012 = vmatprep.subr.mxu0 0.0
    %3013 = vmatpush1.msra.mxu0 0.0
    %3014 = vmatprep.subr.mxu0 0.0
    %3015 = vmatpush1.msra.mxu0 0.0
    %3016 = vmatprep.subr.mxu0 0.0
    %3017 = vmatpush1.msra.mxu0 0.0
    %3018 = vmatprep.subr.mxu0 0.0
    %3019 = vmatpush1.msra.mxu0 0.0
    %3020 = vmatprep.subr.mxu0 0.0
    %3021 = vmatpush1.msra.mxu0 0.0
    %3022 = vmatprep.subr.mxu0 0.0
    %3023 = vmatpush1.msra.mxu0 0.0
    %3024 = vmatprep.subr.mxu0 0.0
    %3025 = vmatpush1.msra.mxu0 0.0
    %3026 = vmatprep.subr.mxu0 0.0
    %3027 = vmatpush1.msra.mxu0 0.0
    %3028 = vmatprep.subr.mxu0 0.0
    %3029 = vmatpush1.msra.mxu0 0.0
    %3030 = vmatprep.subr.mxu0 0.0
    %3031 = vmatpush1.msra.mxu0 0.0
    %3032 = vmatprep.subr.mxu0 0.0
    %3033 = vmatpush1.msra.mxu0 0.0
    %3034 = vmatprep.subr.mxu0 0.0
    %3035 = vmatpush1.msra.mxu0 0.0
    %3036 = vmatprep.subr.mxu0 0.0
    %3037 = vmatpush1.msra.mxu0 0.0
    %3038 = vmatprep.mubr.f32.mxu0 0.0
    %3039 = vmatmul.mubr.f32.gmra.mrb[0].mxu0 %v2701
    %v3040 = vpop.f32.mrb[0].mxu0
    %v3041 = vadd.f32 0.0, %v3040
    %v3042 = vpop.f32.mrb[0].mxu0
    %3043 = vdwg.mxu0
    %3044 = vmatprep.subr.mxu0 0.0
    %3045 = vmatpush1.msra.mxu0 %v2812
    %3046 = vmatprep.subr.mxu0 0.0
    %3047 = vmatpush1.msra.mxu0 %v2813
    %3048 = vmatprep.subr.mxu0 0.0
    %3049 = vmatpush1.msra.mxu0 %v2814
    %3050 = vmatprep.subr.mxu0 0.0
    %3051 = vmatpush1.msra.mxu0 %v2815
    %3052 = vmatprep.subr.mxu0 0.0
    %3053 = vmatpush1.msra.mxu0 0.0
    %3054 = vmatprep.subr.mxu0 0.0
    %3055 = vmatpush1.msra.mxu0 0.0
    %3056 = vmatprep.subr.mxu0 0.0
    %3057 = vmatpush1.msra.mxu0 0.0
    %3058 = vmatprep.subr.mxu0 0.0
    %3059 = vmatpush1.msra.mxu0 0.0
    %3060 = vmatprep.subr.mxu0 0.0
    %3061 = vmatpush1.msra.mxu0 0.0
    %3062 = vmatprep.subr.mxu0 0.0
    %3063 = vmatpush1.msra.mxu0 0.0
    %3064 = vmatprep.subr.mxu0 0.0
    %3065 = vmatpush1.msra.mxu0 0.0
    %3066 = vmatprep.subr.mxu0 0.0
    %3067 = vmatpush1.msra.mxu0 0.0
    %3068 = vmatprep.subr.mxu0 0.0
    %3069 = vmatpush1.msra.mxu0 0.0
    %3070 = vmatprep.subr.mxu0 0.0
    %3071 = vmatpush1.msra.mxu0 0.0
    %3072 = vmatprep.subr.mxu0 0.0
    %3073 = vmatpush1.msra.mxu0 0.0
    %3074 = vmatprep.subr.mxu0 0.0
    %3075 = vmatpush1.msra.mxu0 0.0
    %3076 = vmatprep.subr.mxu0 0.0
    %3077 = vmatpush1.msra.mxu0 0.0
    %3078 = vmatprep.subr.mxu0 0.0
    %3079 = vmatpush1.msra.mxu0 0.0
    %3080 = vmatprep.subr.mxu0 0.0
    %3081 = vmatpush1.msra.mxu0 0.0
    %3082 = vmatprep.subr.mxu0 0.0
    %3083 = vmatpush1.msra.mxu0 0.0
    %3084 = vmatprep.subr.mxu0 0.0
    %3085 = vmatpush1.msra.mxu0 0.0
    %3086 = vmatprep.subr.mxu0 0.0
    %3087 = vmatpush1.msra.mxu0 0.0
    %3088 = vmatprep.subr.mxu0 0.0
    %3089 = vmatpush1.msra.mxu0 0.0
    %3090 = vmatprep.subr.mxu0 0.0
    %3091 = vmatpush1.msra.mxu0 0.0
    %3092 = vmatprep.subr.mxu0 0.0
    %3093 = vmatpush1.msra.mxu0 0.0
    %3094 = vmatprep.subr.mxu0 0.0
    %3095 = vmatpush1.msra.mxu0 0.0
    %3096 = vmatprep.subr.mxu0 0.0
    %3097 = vmatpush1.msra.mxu0 0.0
    %3098 = vmatprep.subr.mxu0 0.0
    %3099 = vmatpush1.msra.mxu0 0.0
    %3100 = vmatprep.subr.mxu0 0.0
    %3101 = vmatpush1.msra.mxu0 0.0
    %3102 = vmatprep.subr.mxu0 0.0
    %3103 = vmatpush1.msra.mxu0 0.0
    %3104 = vmatprep.subr.mxu0 0.0
    %3105 = vmatpush1.msra.mxu0 0.0
    %3106 = vmatprep.subr.mxu0 0.0
    %3107 = vmatpush1.msra.mxu0 0.0
    %3108 = vmatprep.mubr.f32.mxu0 0.0
    %3109 = vmatmul.mubr.f32.gmra.mrb[0].mxu0 %v915
    %v3110 = vpop.f32.mrb[0].mxu0
    %v3111 = vadd.f32 %v3041, %v3110
    %v3112 = vpop.f32.mrb[0].mxu0
    %3113 = vdwg.mxu0
    %v3114 = vadd.f32 %v3111, %v2803
    %3115 = vmatprep.subr.mxu0 0.0
    %3116 = vmatpush1.msra.mxu0 %v2816
    %3117 = vmatprep.subr.mxu0 0.0
    %3118 = vmatpush1.msra.mxu0 %v2817
    %3119 = vmatprep.subr.mxu0 0.0
    %3120 = vmatpush1.msra.mxu0 %v2818
    %3121 = vmatprep.subr.mxu0 0.0
    %3122 = vmatpush1.msra.mxu0 %v2819
    %3123 = vmatprep.subr.mxu0 0.0
    %3124 = vmatpush1.msra.mxu0 0.0
    %3125 = vmatprep.subr.mxu0 0.0
    %3126 = vmatpush1.msra.mxu0 0.0
    %3127 = vmatprep.subr.mxu0 0.0
    %3128 = vmatpush1.msra.mxu0 0.0
    %3129 = vmatprep.subr.mxu0 0.0
    %3130 = vmatpush1.msra.mxu0 0.0
    %3131 = vmatprep.subr.mxu0 0.0
    %3132 = vmatpush1.msra.mxu0 0.0
    %3133 = vmatprep.subr.mxu0 0.0
    %3134 = vmatpush1.msra.mxu0 0.0
    %3135 = vmatprep.subr.mxu0 0.0
    %3136 = vmatpush1.msra.mxu0 0.0
    %3137 = vmatprep.subr.mxu0 0.0
    %3138 = vmatpush1.msra.mxu0 0.0
    %3139 = vmatprep.subr.mxu0 0.0
    %3140 = vmatpush1.msra.mxu0 0.0
    %3141 = vmatprep.subr.mxu0 0.0
    %3142 = vmatpush1.msra.mxu0 0.0
    %3143 = vmatprep.subr.mxu0 0.0
    %3144 = vmatpush1.msra.mxu0 0.0
    %3145 = vmatprep.subr.mxu0 0.0
    %3146 = vmatpush1.msra.mxu0 0.0
    %3147 = vmatprep.subr.mxu0 0.0
    %3148 = vmatpush1.msra.mxu0 0.0
    %3149 = vmatprep.subr.mxu0 0.0
    %3150 = vmatpush1.msra.mxu0 0.0
    %3151 = vmatprep.subr.mxu0 0.0
    %3152 = vmatpush1.msra.mxu0 0.0
    %3153 = vmatprep.subr.mxu0 0.0
    %3154 = vmatpush1.msra.mxu0 0.0
    %3155 = vmatprep.subr.mxu0 0.0
    %3156 = vmatpush1.msra.mxu0 0.0
    %3157 = vmatprep.subr.mxu0 0.0
    %3158 = vmatpush1.msra.mxu0 0.0
    %3159 = vmatprep.subr.mxu0 0.0
    %3160 = vmatpush1.msra.mxu0 0.0
    %3161 = vmatprep.subr.mxu0 0.0
    %3162 = vmatpush1.msra.mxu0 0.0
    %3163 = vmatprep.subr.mxu0 0.0
    %3164 = vmatpush1.msra.mxu0 0.0
    %3165 = vmatprep.subr.mxu0 0.0
    %3166 = vmatpush1.msra.mxu0 0.0
    %3167 = vmatprep.subr.mxu0 0.0
    %3168 = vmatpush1.msra.mxu0 0.0
    %3169 = vmatprep.subr.mxu0 0.0
    %3170 = vmatpush1.msra.mxu0 0.0
    %3171 = vmatprep.subr.mxu0 0.0
    %3172 = vmatpush1.msra.mxu0 0.0
    %3173 = vmatprep.subr.mxu0 0.0
    %3174 = vmatpush1.msra.mxu0 0.0
    %3175 = vmatprep.subr.mxu0 0.0
    %3176 = vmatpush1.msra.mxu0 0.0
    %3177 = vmatprep.subr.mxu0 0.0
    %3178 = vmatpush1.msra.mxu0 0.0
    %3179 = vmatprep.mubr.f32.mxu0 0.0
    %3180 = vmatmul.mubr.f32.gmra.mrb[0].mxu0 %v2601
    %v3181 = vpop.f32.mrb[0].mxu0
    %v3182 = vadd.f32 0.0, %v3181
    %v3183 = vpop.f32.mrb[0].mxu0
    %3184 = vdwg.mxu0
    %3185 = vmatprep.subr.mxu0 0.0
    %3186 = vmatpush1.msra.mxu0 %v2812
    %3187 = vmatprep.subr.mxu0 0.0
    %3188 = vmatpush1.msra.mxu0 %v2813
    %3189 = vmatprep.subr.mxu0 0.0
    %3190 = vmatpush1.msra.mxu0 %v2814
    %3191 = vmatprep.subr.mxu0 0.0
    %3192 = vmatpush1.msra.mxu0 %v2815
    %3193 = vmatprep.subr.mxu0 0.0
    %3194 = vmatpush1.msra.mxu0 0.0
    %3195 = vmatprep.subr.mxu0 0.0
    %3196 = vmatpush1.msra.mxu0 0.0
    %3197 = vmatprep.subr.mxu0 0.0
    %3198 = vmatpush1.msra.mxu0 0.0
    %3199 = vmatprep.subr.mxu0 0.0
    %3200 = vmatpush1.msra.mxu0 0.0
    %3201 = vmatprep.subr.mxu0 0.0
    %3202 = vmatpush1.msra.mxu0 0.0
    %3203 = vmatprep.subr.mxu0 0.0
    %3204 = vmatpush1.msra.mxu0 0.0
    %3205 = vmatprep.subr.mxu0 0.0
    %3206 = vmatpush1.msra.mxu0 0.0
    %3207 = vmatprep.subr.mxu0 0.0
    %3208 = vmatpush1.msra.mxu0 0.0
    %3209 = vmatprep.subr.mxu0 0.0
    %3210 = vmatpush1.msra.mxu0 0.0
    %3211 = vmatprep.subr.mxu0 0.0
    %3212 = vmatpush1.msra.mxu0 0.0
    %3213 = vmatprep.subr.mxu0 0.0
    %3214 = vmatpush1.msra.mxu0 0.0
    %3215 = vmatprep.subr.mxu0 0.0
    %3216 = vmatpush1.msra.mxu0 0.0
    %3217 = vmatprep.subr.mxu0 0.0
    %3218 = vmatpush1.msra.mxu0 0.0
    %3219 = vmatprep.subr.mxu0 0.0
    %3220 = vmatpush1.msra.mxu0 0.0
    %3221 = vmatprep.subr.mxu0 0.0
    %3222 = vmatpush1.msra.mxu0 0.0
    %3223 = vmatprep.subr.mxu0 0.0
    %3224 = vmatpush1.msra.mxu0 0.0
    %3225 = vmatprep.subr.mxu0 0.0
    %3226 = vmatpush1.msra.mxu0 0.0
    %3227 = vmatprep.subr.mxu0 0.0
    %3228 = vmatpush1.msra.mxu0 0.0
    %3229 = vmatprep.subr.mxu0 0.0
    %3230 = vmatpush1.msra.mxu0 0.0
    %3231 = vmatprep.subr.mxu0 0.0
    %3232 = vmatpush1.msra.mxu0 0.0
    %3233 = vmatprep.subr.mxu0 0.0
    %3234 = vmatpush1.msra.mxu0 0.0
    %3235 = vmatprep.subr.mxu0 0.0
    %3236 = vmatpush1.msra.mxu0 0.0
    %3237 = vmatprep.subr.mxu0 0.0
    %3238 = vmatpush1.msra.mxu0 0.0
    %3239 = vmatprep.subr.mxu0 0.0
    %3240 = vmatpush1.msra.mxu0 0.0
    %3241 = vmatprep.subr.mxu0 0.0
    %3242 = vmatpush1.msra.mxu0 0.0
    %3243 = vmatprep.subr.mxu0 0.0
    %3244 = vmatpush1.msra.mxu0 0.0
    %3245 = vmatprep.subr.mxu0 0.0
    %3246 = vmatpush1.msra.mxu0 0.0
    %3247 = vmatprep.subr.mxu0 0.0
    %3248 = vmatpush1.msra.mxu0 0.0
    %3249 = vmatprep.mubr.f32.mxu0 0.0
    %3250 = vmatmul.mubr.f32.gmra.mrb[0].mxu0 %v1015
    %v3251 = vpop.f32.mrb[0].mxu0
    %v3252 = vadd.f32 %v3182, %v3251
    %v3253 = vpop.f32.mrb[0].mxu0
    %3254 = vdwg.mxu0
    %v3255 = vadd.f32 %v3252, %v2803
    %3256 = vmatprep.subr.mxu0 0.0
    %3257 = vmatpush1.msra.mxu0 %v2816
    %3258 = vmatprep.subr.mxu0 0.0
    %3259 = vmatpush1.msra.mxu0 %v2817
    %3260 = vmatprep.subr.mxu0 0.0
    %3261 = vmatpush1.msra.mxu0 %v2818
    %3262 = vmatprep.subr.mxu0 0.0
    %3263 = vmatpush1.msra.mxu0 %v2819
    %3264 = vmatprep.subr.mxu0 0.0
    %3265 = vmatpush1.msra.mxu0 0.0
    %3266 = vmatprep.subr.mxu0 0.0
    %3267 = vmatpush1.msra.mxu0 0.0
    %3268 = vmatprep.subr.mxu0 0.0
    %3269 = vmatpush1.msra.mxu0 0.0
    %3270 = vmatprep.subr.mxu0 0.0
    %3271 = vmatpush1.msra.mxu0 0.0
    %3272 = vmatprep.subr.mxu0 0.0
    %3273 = vmatpush1.msra.mxu0 0.0
    %3274 = vmatprep.subr.mxu0 0.0
    %3275 = vmatpush1.msra.mxu0 0.0
    %3276 = vmatprep.subr.mxu0 0.0
    %3277 = vmatpush1.msra.mxu0 0.0
    %3278 = vmatprep.subr.mxu0 0.0
    %3279 = vmatpush1.msra.mxu0 0.0
    %3280 = vmatprep.subr.mxu0 0.0
    %3281 = vmatpush1.msra.mxu0 0.0
    %3282 = vmatprep.subr.mxu0 0.0
    %3283 = vmatpush1.msra.mxu0 0.0
    %3284 = vmatprep.subr.mxu0 0.0
    %3285 = vmatpush1.msra.mxu0 0.0
    %3286 = vmatprep.subr.mxu0 0.0
    %3287 = vmatpush1.msra.mxu0 0.0
    %3288 = vmatprep.subr.mxu0 0.0
    %3289 = vmatpush1.msra.mxu0 0.0
    %3290 = vmatprep.subr.mxu0 0.0
    %3291 = vmatpush1.msra.mxu0 0.0
    %3292 = vmatprep.subr.mxu0 0.0
    %3293 = vmatpush1.msra.mxu0 0.0
    %3294 = vmatprep.subr.mxu0 0.0
    %3295 = vmatpush1.msra.mxu0 0.0
    %3296 = vmatprep.subr.mxu0 0.0
    %3297 = vmatpush1.msra.mxu0 0.0
    %3298 = vmatprep.subr.mxu0 0.0
    %3299 = vmatpush1.msra.mxu0 0.0
    %3300 = vmatprep.subr.mxu0 0.0
    %3301 = vmatpush1.msra.mxu0 0.0
    %3302 = vmatprep.subr.mxu0 0.0
    %3303 = vmatpush1.msra.mxu0 0.0
    %3304 = vmatprep.subr.mxu0 0.0
    %3305 = vmatpush1.msra.mxu0 0.0
    %3306 = vmatprep.subr.mxu0 0.0
    %3307 = vmatpush1.msra.mxu0 0.0
    %3308 = vmatprep.subr.mxu0 0.0
    %3309 = vmatpush1.msra.mxu0 0.0
    %3310 = vmatprep.subr.mxu0 0.0
    %3311 = vmatpush1.msra.mxu0 0.0
    %3312 = vmatprep.subr.mxu0 0.0
    %3313 = vmatpush1.msra.mxu0 0.0
    %3314 = vmatprep.subr.mxu0 0.0
    %3315 = vmatpush1.msra.mxu0 0.0
    %3316 = vmatprep.subr.mxu0 0.0
    %3317 = vmatpush1.msra.mxu0 0.0
    %3318 = vmatprep.subr.mxu0 0.0
    %3319 = vmatpush1.msra.mxu0 0.0
    %3320 = vmatprep.mubr.f32.mxu0 0.0
    %3321 = vmatmul.mubr.f32.gmra.mrb[0].mxu0 %v2501
    %v3322 = vpop.f32.mrb[0].mxu0
    %v3323 = vadd.f32 0.0, %v3322
    %v3324 = vpop.f32.mrb[0].mxu0
    %3325 = vdwg.mxu0
    %3326 = vmatprep.subr.mxu0 0.0
    %3327 = vmatpush1.msra.mxu0 %v2812
    %3328 = vmatprep.subr.mxu0 0.0
    %3329 = vmatpush1.msra.mxu0 %v2813
    %3330 = vmatprep.subr.mxu0 0.0
    %3331 = vmatpush1.msra.mxu0 %v2814
    %3332 = vmatprep.subr.mxu0 0.0
    %3333 = vmatpush1.msra.mxu0 %v2815
    %3334 = vmatprep.subr.mxu0 0.0
    %3335 = vmatpush1.msra.mxu0 0.0
    %3336 = vmatprep.subr.mxu0 0.0
    %3337 = vmatpush1.msra.mxu0 0.0
    %3338 = vmatprep.subr.mxu0 0.0
    %3339 = vmatpush1.msra.mxu0 0.0
    %3340 = vmatprep.subr.mxu0 0.0
    %3341 = vmatpush1.msra.mxu0 0.0
    %3342 = vmatprep.subr.mxu0 0.0
    %3343 = vmatpush1.msra.mxu0 0.0
    %3344 = vmatprep.subr.mxu0 0.0
    %3345 = vmatpush1.msra.mxu0 0.0
    %3346 = vmatprep.subr.mxu0 0.0
    %3347 = vmatpush1.msra.mxu0 0.0
    %3348 = vmatprep.subr.mxu0 0.0
    %3349 = vmatpush1.msra.mxu0 0.0
    %3350 = vmatprep.subr.mxu0 0.0
    %3351 = vmatpush1.msra.mxu0 0.0
    %3352 = vmatprep.subr.mxu0 0.0
    %3353 = vmatpush1.msra.mxu0 0.0
    %3354 = vmatprep.subr.mxu0 0.0
    %3355 = vmatpush1.msra.mxu0 0.0
    %3356 = vmatprep.subr.mxu0 0.0
    %3357 = vmatpush1.msra.mxu0 0.0
    %3358 = vmatprep.subr.mxu0 0.0
    %3359 = vmatpush1.msra.mxu0 0.0
    %3360 = vmatprep.subr.mxu0 0.0
    %3361 = vmatpush1.msra.mxu0 0.0
    %3362 = vmatprep.subr.mxu0 0.0
    %3363 = vmatpush1.msra.mxu0 0.0
    %3364 = vmatprep.subr.mxu0 0.0
    %3365 = vmatpush1.msra.mxu0 0.0
    %3366 = vmatprep.subr.mxu0 0.0
    %3367 = vmatpush1.msra.mxu0 0.0
    %3368 = vmatprep.subr.mxu0 0.0
    %3369 = vmatpush1.msra.mxu0 0.0
    %3370 = vmatprep.subr.mxu0 0.0
    %3371 = vmatpush1.msra.mxu0 0.0
    %3372 = vmatprep.subr.mxu0 0.0
    %3373 = vmatpush1.msra.mxu0 0.0
    %3374 = vmatprep.subr.mxu0 0.0
    %3375 = vmatpush1.msra.mxu0 0.0
    %3376 = vmatprep.subr.mxu0 0.0
    %3377 = vmatpush1.msra.mxu0 0.0
    %3378 = vmatprep.subr.mxu0 0.0
    %3379 = vmatpush1.msra.mxu0 0.0
    %3380 = vmatprep.subr.mxu0 0.0
    %3381 = vmatpush1.msra.mxu0 0.0
    %3382 = vmatprep.subr.mxu0 0.0
    %3383 = vmatpush1.msra.mxu0 0.0
    %3384 = vmatprep.subr.mxu0 0.0
    %3385 = vmatpush1.msra.mxu0 0.0
    %3386 = vmatprep.subr.mxu0 0.0
    %3387 = vmatpush1.msra.mxu0 0.0
    %3388 = vmatprep.subr.mxu0 0.0
    %3389 = vmatpush1.msra.mxu0 0.0
    %3390 = vmatprep.mubr.f32.mxu0 0.0
    %3391 = vmatmul.mubr.f32.gmra.mrb[0].mxu0 %v1115
    %v3392 = vpop.f32.mrb[0].mxu0
    %v3393 = vadd.f32 %v3323, %v3392
    %v3394 = vpop.f32.mrb[0].mxu0
    %3395 = vdwg.mxu0
    %v3396 = vadd.f32 %v3393, %v2803
    %3397 = vmatprep.subr.mxu0 0.0
    %3398 = vmatpush1.msra.mxu0 %v2816
    %3399 = vmatprep.subr.mxu0 0.0
    %3400 = vmatpush1.msra.mxu0 %v2817
    %3401 = vmatprep.subr.mxu0 0.0
    %3402 = vmatpush1.msra.mxu0 %v2818
    %3403 = vmatprep.subr.mxu0 0.0
    %3404 = vmatpush1.msra.mxu0 %v2819
    %3405 = vmatprep.subr.mxu0 0.0
    %3406 = vmatpush1.msra.mxu0 0.0
    %3407 = vmatprep.subr.mxu0 0.0
    %3408 = vmatpush1.msra.mxu0 0.0
    %3409 = vmatprep.subr.mxu0 0.0
    %3410 = vmatpush1.msra.mxu0 0.0
    %3411 = vmatprep.subr.mxu0 0.0
    %3412 = vmatpush1.msra.mxu0 0.0
    %3413 = vmatprep.subr.mxu0 0.0
    %3414 = vmatpush1.msra.mxu0 0.0
    %3415 = vmatprep.subr.mxu0 0.0
    %3416 = vmatpush1.msra.mxu0 0.0
    %3417 = vmatprep.subr.mxu0 0.0
    %3418 = vmatpush1.msra.mxu0 0.0
    %3419 = vmatprep.subr.mxu0 0.0
    %3420 = vmatpush1.msra.mxu0 0.0
    %3421 = vmatprep.subr.mxu0 0.0
    %3422 = vmatpush1.msra.mxu0 0.0
    %3423 = vmatprep.subr.mxu0 0.0
    %3424 = vmatpush1.msra.mxu0 0.0
    %3425 = vmatprep.subr.mxu0 0.0
    %3426 = vmatpush1.msra.mxu0 0.0
    %3427 = vmatprep.subr.mxu0 0.0
    %3428 = vmatpush1.msra.mxu0 0.0
    %3429 = vmatprep.subr.mxu0 0.0
    %3430 = vmatpush1.msra.mxu0 0.0
    %3431 = vmatprep.subr.mxu0 0.0
    %3432 = vmatpush1.msra.mxu0 0.0
    %3433 = vmatprep.subr.mxu0 0.0
    %3434 = vmatpush1.msra.mxu0 0.0
    %3435 = vmatprep.subr.mxu0 0.0
    %3436 = vmatpush1.msra.mxu0 0.0
    %3437 = vmatprep.subr.mxu0 0.0
    %3438 = vmatpush1.msra.mxu0 0.0
    %3439 = vmatprep.subr.mxu0 0.0
    %3440 = vmatpush1.msra.mxu0 0.0
    %3441 = vmatprep.subr.mxu0 0.0
    %3442 = vmatpush1.msra.mxu0 0.0
    %3443 = vmatprep.subr.mxu0 0.0
    %3444 = vmatpush1.msra.mxu0 0.0
    %3445 = vmatprep.subr.mxu0 0.0
    %3446 = vmatpush1.msra.mxu0 0.0
    %3447 = vmatprep.subr.mxu0 0.0
    %3448 = vmatpush1.msra.mxu0 0.0
    %3449 = vmatprep.subr.mxu0 0.0
    %3450 = vmatpush1.msra.mxu0 0.0
    %3451 = vmatprep.subr.mxu0 0.0
    %3452 = vmatpush1.msra.mxu0 0.0
    %3453 = vmatprep.subr.mxu0 0.0
    %3454 = vmatpush1.msra.mxu0 0.0
    %3455 = vmatprep.subr.mxu0 0.0
    %3456 = vmatpush1.msra.mxu0 0.0
    %3457 = vmatprep.subr.mxu0 0.0
    %3458 = vmatpush1.msra.mxu0 0.0
    %3459 = vmatprep.subr.mxu0 0.0
    %3460 = vmatpush1.msra.mxu0 0.0
    %3461 = vmatprep.mubr.f32.mxu0 0.0
    %3462 = vmatmul.mubr.f32.gmra.mrb[0].mxu0 %v2401
    %v3463 = vpop.f32.mrb[0].mxu0
    %v3464 = vadd.f32 0.0, %v3463
    %v3465 = vpop.f32.mrb[0].mxu0
    %3466 = vdwg.mxu0
    %3467 = vmatprep.subr.mxu0 0.0
    %3468 = vmatpush1.msra.mxu0 %v2812
    %3469 = vmatprep.subr.mxu0 0.0
    %3470 = vmatpush1.msra.mxu0 %v2813
    %3471 = vmatprep.subr.mxu0 0.0
    %3472 = vmatpush1.msra.mxu0 %v2814
    %3473 = vmatprep.subr.mxu0 0.0
    %3474 = vmatpush1.msra.mxu0 %v2815
    %3475 = vmatprep.subr.mxu0 0.0
    %3476 = vmatpush1.msra.mxu0 0.0
    %3477 = vmatprep.subr.mxu0 0.0
    %3478 = vmatpush1.msra.mxu0 0.0
    %3479 = vmatprep.subr.mxu0 0.0
    %3480 = vmatpush1.msra.mxu0 0.0
    %3481 = vmatprep.subr.mxu0 0.0
    %3482 = vmatpush1.msra.mxu0 0.0
    %3483 = vmatprep.subr.mxu0 0.0
    %3484 = vmatpush1.msra.mxu0 0.0
    %3485 = vmatprep.subr.mxu0 0.0
    %3486 = vmatpush1.msra.mxu0 0.0
    %3487 = vmatprep.subr.mxu0 0.0
    %3488 = vmatpush1.msra.mxu0 0.0
    %3489 = vmatprep.subr.mxu0 0.0
    %3490 = vmatpush1.msra.mxu0 0.0
    %3491 = vmatprep.subr.mxu0 0.0
    %3492 = vmatpush1.msra.mxu0 0.0
    %3493 = vmatprep.subr.mxu0 0.0
    %3494 = vmatpush1.msra.mxu0 0.0
    %3495 = vmatprep.subr.mxu0 0.0
    %3496 = vmatpush1.msra.mxu0 0.0
    %3497 = vmatprep.subr.mxu0 0.0
    %3498 = vmatpush1.msra.mxu0 0.0
    %3499 = vmatprep.subr.mxu0 0.0
    %3500 = vmatpush1.msra.mxu0 0.0
    %3501 = vmatprep.subr.mxu0 0.0
    %3502 = vmatpush1.msra.mxu0 0.0
    %3503 = vmatprep.subr.mxu0 0.0
    %3504 = vmatpush1.msra.mxu0 0.0
    %3505 = vmatprep.subr.mxu0 0.0
    %3506 = vmatpush1.msra.mxu0 0.0
    %3507 = vmatprep.subr.mxu0 0.0
    %3508 = vmatpush1.msra.mxu0 0.0
    %3509 = vmatprep.subr.mxu0 0.0
    %3510 = vmatpush1.msra.mxu0 0.0
    %3511 = vmatprep.subr.mxu0 0.0
    %3512 = vmatpush1.msra.mxu0 0.0
    %3513 = vmatprep.subr.mxu0 0.0
    %3514 = vmatpush1.msra.mxu0 0.0
    %3515 = vmatprep.subr.mxu0 0.0
    %3516 = vmatpush1.msra.mxu0 0.0
    %3517 = vmatprep.subr.mxu0 0.0
    %3518 = vmatpush1.msra.mxu0 0.0
    %3519 = vmatprep.subr.mxu0 0.0
    %3520 = vmatpush1.msra.mxu0 0.0
    %3521 = vmatprep.subr.mxu0 0.0
    %3522 = vmatpush1.msra.mxu0 0.0
    %3523 = vmatprep.subr.mxu0 0.0
    %3524 = vmatpush1.msra.mxu0 0.0
    %3525 = vmatprep.subr.mxu0 0.0
    %3526 = vmatpush1.msra.mxu0 0.0
    %3527 = vmatprep.subr.mxu0 0.0
    %3528 = vmatpush1.msra.mxu0 0.0
    %3529 = vmatprep.subr.mxu0 0.0
    %3530 = vmatpush1.msra.mxu0 0.0
    %3531 = vmatprep.mubr.f32.mxu0 0.0
    %3532 = vmatmul.mubr.f32.gmra.mrb[0].mxu0 %v1215
    %v3533 = vpop.f32.mrb[0].mxu0
    %v3534 = vadd.f32 %v3464, %v3533
    %v3535 = vpop.f32.mrb[0].mxu0
    %3536 = vdwg.mxu0
    %v3537 = vadd.f32 %v3534, %v2803
    %3538 = vmatprep.subr.mxu0 0.0
    %3539 = vmatpush1.msra.mxu0 %v2816
    %3540 = vmatprep.subr.mxu0 0.0
    %3541 = vmatpush1.msra.mxu0 %v2817
    %3542 = vmatprep.subr.mxu0 0.0
    %3543 = vmatpush1.msra.mxu0 %v2818
    %3544 = vmatprep.subr.mxu0 0.0
    %3545 = vmatpush1.msra.mxu0 %v2819
    %3546 = vmatprep.subr.mxu0 0.0
    %3547 = vmatpush1.msra.mxu0 0.0
    %3548 = vmatprep.subr.mxu0 0.0
    %3549 = vmatpush1.msra.mxu0 0.0
    %3550 = vmatprep.subr.mxu0 0.0
    %3551 = vmatpush1.msra.mxu0 0.0
    %3552 = vmatprep.subr.mxu0 0.0
    %3553 = vmatpush1.msra.mxu0 0.0
    %3554 = vmatprep.subr.mxu0 0.0
    %3555 = vmatpush1.msra.mxu0 0.0
    %3556 = vmatprep.subr.mxu0 0.0
    %3557 = vmatpush1.msra.mxu0 0.0
    %3558 = vmatprep.subr.mxu0 0.0
    %3559 = vmatpush1.msra.mxu0 0.0
    %3560 = vmatprep.subr.mxu0 0.0
    %3561 = vmatpush1.msra.mxu0 0.0
    %3562 = vmatprep.subr.mxu0 0.0
    %3563 = vmatpush1.msra.mxu0 0.0
    %3564 = vmatprep.subr.mxu0 0.0
    %3565 = vmatpush1.msra.mxu0 0.0
    %3566 = vmatprep.subr.mxu0 0.0
    %3567 = vmatpush1.msra.mxu0 0.0
    %3568 = vmatprep.subr.mxu0 0.0
    %3569 = vmatpush1.msra.mxu0 0.0
    %3570 = vmatprep.subr.mxu0 0.0
    %3571 = vmatpush1.msra.mxu0 0.0
    %3572 = vmatprep.subr.mxu0 0.0
    %3573 = vmatpush1.msra.mxu0 0.0
    %3574 = vmatprep.subr.mxu0 0.0
    %3575 = vmatpush1.msra.mxu0 0.0
    %3576 = vmatprep.subr.mxu0 0.0
    %3577 = vmatpush1.msra.mxu0 0.0
    %3578 = vmatprep.subr.mxu0 0.0
    %3579 = vmatpush1.msra.mxu0 0.0
    %3580 = vmatprep.subr.mxu0 0.0
    %3581 = vmatpush1.msra.mxu0 0.0
    %3582 = vmatprep.subr.mxu0 0.0
    %3583 = vmatpush1.msra.mxu0 0.0
    %3584 = vmatprep.subr.mxu0 0.0
    %3585 = vmatpush1.msra.mxu0 0.0
    %3586 = vmatprep.subr.mxu0 0.0
    %3587 = vmatpush1.msra.mxu0 0.0
    %3588 = vmatprep.subr.mxu0 0.0
    %3589 = vmatpush1.msra.mxu0 0.0
    %3590 = vmatprep.subr.mxu0 0.0
    %3591 = vmatpush1.msra.mxu0 0.0
    %3592 = vmatprep.subr.mxu0 0.0
    %3593 = vmatpush1.msra.mxu0 0.0
    %3594 = vmatprep.subr.mxu0 0.0
    %3595 = vmatpush1.msra.mxu0 0.0
    %3596 = vmatprep.subr.mxu0 0.0
    %3597 = vmatpush1.msra.mxu0 0.0
    %3598 = vmatprep.subr.mxu0 0.0
    %3599 = vmatpush1.msra.mxu0 0.0
    %3600 = vmatprep.subr.mxu0 0.0
    %3601 = vmatpush1.msra.mxu0 0.0
    %3602 = vmatprep.mubr.f32.mxu0 0.0
    %3603 = vmatmul.mubr.f32.gmra.mrb[0].mxu0 %v2301
    %v3604 = vpop.f32.mrb[0].mxu0
    %v3605 = vadd.f32 0.0, %v3604
    %v3606 = vpop.f32.mrb[0].mxu0
    %3607 = vdwg.mxu0
    %3608 = vmatprep.subr.mxu0 0.0
    %3609 = vmatpush1.msra.mxu0 %v2812
    %3610 = vmatprep.subr.mxu0 0.0
    %3611 = vmatpush1.msra.mxu0 %v2813
    %3612 = vmatprep.subr.mxu0 0.0
    %3613 = vmatpush1.msra.mxu0 %v2814
    %3614 = vmatprep.subr.mxu0 0.0
    %3615 = vmatpush1.msra.mxu0 %v2815
    %3616 = vmatprep.subr.mxu0 0.0
    %3617 = vmatpush1.msra.mxu0 0.0
    %3618 = vmatprep.subr.mxu0 0.0
    %3619 = vmatpush1.msra.mxu0 0.0
    %3620 = vmatprep.subr.mxu0 0.0
    %3621 = vmatpush1.msra.mxu0 0.0
    %3622 = vmatprep.subr.mxu0 0.0
    %3623 = vmatpush1.msra.mxu0 0.0
    %3624 = vmatprep.subr.mxu0 0.0
    %3625 = vmatpush1.msra.mxu0 0.0
    %3626 = vmatprep.subr.mxu0 0.0
    %3627 = vmatpush1.msra.mxu0 0.0
    %3628 = vmatprep.subr.mxu0 0.0
    %3629 = vmatpush1.msra.mxu0 0.0
    %3630 = vmatprep.subr.mxu0 0.0
    %3631 = vmatpush1.msra.mxu0 0.0
    %3632 = vmatprep.subr.mxu0 0.0
    %3633 = vmatpush1.msra.mxu0 0.0
    %3634 = vmatprep.subr.mxu0 0.0
    %3635 = vmatpush1.msra.mxu0 0.0
    %3636 = vmatprep.subr.mxu0 0.0
    %3637 = vmatpush1.msra.mxu0 0.0
    %3638 = vmatprep.subr.mxu0 0.0
    %3639 = vmatpush1.msra.mxu0 0.0
    %3640 = vmatprep.subr.mxu0 0.0
    %3641 = vmatpush1.msra.mxu0 0.0
    %3642 = vmatprep.subr.mxu0 0.0
    %3643 = vmatpush1.msra.mxu0 0.0
    %3644 = vmatprep.subr.mxu0 0.0
    %3645 = vmatpush1.msra.mxu0 0.0
    %3646 = vmatprep.subr.mxu0 0.0
    %3647 = vmatpush1.msra.mxu0 0.0
    %3648 = vmatprep.subr.mxu0 0.0
    %3649 = vmatpush1.msra.mxu0 0.0
    %3650 = vmatprep.subr.mxu0 0.0
    %3651 = vmatpush1.msra.mxu0 0.0
    %3652 = vmatprep.subr.mxu0 0.0
    %3653 = vmatpush1.msra.mxu0 0.0
    %3654 = vmatprep.subr.mxu0 0.0
    %3655 = vmatpush1.msra.mxu0 0.0
    %3656 = vmatprep.subr.mxu0 0.0
    %3657 = vmatpush1.msra.mxu0 0.0
    %3658 = vmatprep.subr.mxu0 0.0
    %3659 = vmatpush1.msra.mxu0 0.0
    %3660 = vmatprep.subr.mxu0 0.0
    %3661 = vmatpush1.msra.mxu0 0.0
    %3662 = vmatprep.subr.mxu0 0.0
    %3663 = vmatpush1.msra.mxu0 0.0
    %3664 = vmatprep.subr.mxu0 0.0
    %3665 = vmatpush1.msra.mxu0 0.0
    %3666 = vmatprep.subr.mxu0 0.0
    %3667 = vmatpush1.msra.mxu0 0.0
    %3668 = vmatprep.subr.mxu0 0.0
    %3669 = vmatpush1.msra.mxu0 0.0
    %3670 = vmatprep.subr.mxu0 0.0
    %3671 = vmatpush1.msra.mxu0 0.0
    %3672 = vmatprep.mubr.f32.mxu0 0.0
    %3673 = vmatmul.mubr.f32.gmra.mrb[0].mxu0 %v1315
    %v3674 = vpop.f32.mrb[0].mxu0
    %v3675 = vadd.f32 %v3605, %v3674
    %v3676 = vpop.f32.mrb[0].mxu0
    %3677 = vdwg.mxu0
    %v3678 = vadd.f32 %v3675, %v2803
    %3679 = vmatprep.subr.mxu0 0.0
    %3680 = vmatpush1.msra.mxu0 %v2816
    %3681 = vmatprep.subr.mxu0 0.0
    %3682 = vmatpush1.msra.mxu0 %v2817
    %3683 = vmatprep.subr.mxu0 0.0
    %3684 = vmatpush1.msra.mxu0 %v2818
    %3685 = vmatprep.subr.mxu0 0.0
    %3686 = vmatpush1.msra.mxu0 %v2819
    %3687 = vmatprep.subr.mxu0 0.0
    %3688 = vmatpush1.msra.mxu0 0.0
    %3689 = vmatprep.subr.mxu0 0.0
    %3690 = vmatpush1.msra.mxu0 0.0
    %3691 = vmatprep.subr.mxu0 0.0
    %3692 = vmatpush1.msra.mxu0 0.0
    %3693 = vmatprep.subr.mxu0 0.0
    %3694 = vmatpush1.msra.mxu0 0.0
    %3695 = vmatprep.subr.mxu0 0.0
    %3696 = vmatpush1.msra.mxu0 0.0
    %3697 = vmatprep.subr.mxu0 0.0
    %3698 = vmatpush1.msra.mxu0 0.0
    %3699 = vmatprep.subr.mxu0 0.0
    %3700 = vmatpush1.msra.mxu0 0.0
    %3701 = vmatprep.subr.mxu0 0.0
    %3702 = vmatpush1.msra.mxu0 0.0
    %3703 = vmatprep.subr.mxu0 0.0
    %3704 = vmatpush1.msra.mxu0 0.0
    %3705 = vmatprep.subr.mxu0 0.0
    %3706 = vmatpush1.msra.mxu0 0.0
    %3707 = vmatprep.subr.mxu0 0.0
    %3708 = vmatpush1.msra.mxu0 0.0
    %3709 = vmatprep.subr.mxu0 0.0
    %3710 = vmatpush1.msra.mxu0 0.0
    %3711 = vmatprep.subr.mxu0 0.0
    %3712 = vmatpush1.msra.mxu0 0.0
    %3713 = vmatprep.subr.mxu0 0.0
    %3714 = vmatpush1.msra.mxu0 0.0
    %3715 = vmatprep.subr.mxu0 0.0
    %3716 = vmatpush1.msra.mxu0 0.0
    %3717 = vmatprep.subr.mxu0 0.0
    %3718 = vmatpush1.msra.mxu0 0.0
    %3719 = vmatprep.subr.mxu0 0.0
    %3720 = vmatpush1.msra.mxu0 0.0
    %3721 = vmatprep.subr.mxu0 0.0
    %3722 = vmatpush1.msra.mxu0 0.0
    %3723 = vmatprep.subr.mxu0 0.0
    %3724 = vmatpush1.msra.mxu0 0.0
    %3725 = vmatprep.subr.mxu0 0.0
    %3726 = vmatpush1.msra.mxu0 0.0
    %3727 = vmatprep.subr.mxu0 0.0
    %3728 = vmatpush1.msra.mxu0 0.0
    %3729 = vmatprep.subr.mxu0 0.0
    %3730 = vmatpush1.msra.mxu0 0.0
    %3731 = vmatprep.subr.mxu0 0.0
    %3732 = vmatpush1.msra.mxu0 0.0
    %3733 = vmatprep.subr.mxu0 0.0
    %3734 = vmatpush1.msra.mxu0 0.0
    %3735 = vmatprep.subr.mxu0 0.0
    %3736 = vmatpush1.msra.mxu0 0.0
    %3737 = vmatprep.subr.mxu0 0.0
    %3738 = vmatpush1.msra.mxu0 0.0
    %3739 = vmatprep.subr.mxu0 0.0
    %3740 = vmatpush1.msra.mxu0 0.0
    %3741 = vmatprep.subr.mxu0 0.0
    %3742 = vmatpush1.msra.mxu0 0.0
    %3743 = vmatprep.mubr.f32.mxu0 0.0
    %3744 = vmatmul.mubr.f32.gmra.mrb[0].mxu0 %v2201
    %v3745 = vpop.f32.mrb[0].mxu0
    %v3746 = vadd.f32 0.0, %v3745
    %v3747 = vpop.f32.mrb[0].mxu0
    %3748 = vdwg.mxu0
    %3749 = vmatprep.subr.mxu0 0.0
    %3750 = vmatpush1.msra.mxu0 %v2812
    %3751 = vmatprep.subr.mxu0 0.0
    %3752 = vmatpush1.msra.mxu0 %v2813
    %3753 = vmatprep.subr.mxu0 0.0
    %3754 = vmatpush1.msra.mxu0 %v2814
    %3755 = vmatprep.subr.mxu0 0.0
    %3756 = vmatpush1.msra.mxu0 %v2815
    %3757 = vmatprep.subr.mxu0 0.0
    %3758 = vmatpush1.msra.mxu0 0.0
    %3759 = vmatprep.subr.mxu0 0.0
    %3760 = vmatpush1.msra.mxu0 0.0
    %3761 = vmatprep.subr.mxu0 0.0
    %3762 = vmatpush1.msra.mxu0 0.0
    %3763 = vmatprep.subr.mxu0 0.0
    %3764 = vmatpush1.msra.mxu0 0.0
    %3765 = vmatprep.subr.mxu0 0.0
    %3766 = vmatpush1.msra.mxu0 0.0
    %3767 = vmatprep.subr.mxu0 0.0
    %3768 = vmatpush1.msra.mxu0 0.0
    %3769 = vmatprep.subr.mxu0 0.0
    %3770 = vmatpush1.msra.mxu0 0.0
    %3771 = vmatprep.subr.mxu0 0.0
    %3772 = vmatpush1.msra.mxu0 0.0
    %3773 = vmatprep.subr.mxu0 0.0
    %3774 = vmatpush1.msra.mxu0 0.0
    %3775 = vmatprep.subr.mxu0 0.0
    %3776 = vmatpush1.msra.mxu0 0.0
    %3777 = vmatprep.subr.mxu0 0.0
    %3778 = vmatpush1.msra.mxu0 0.0
    %3779 = vmatprep.subr.mxu0 0.0
    %3780 = vmatpush1.msra.mxu0 0.0
    %3781 = vmatprep.subr.mxu0 0.0
    %3782 = vmatpush1.msra.mxu0 0.0
    %3783 = vmatprep.subr.mxu0 0.0
    %3784 = vmatpush1.msra.mxu0 0.0
    %3785 = vmatprep.subr.mxu0 0.0
    %3786 = vmatpush1.msra.mxu0 0.0
    %3787 = vmatprep.subr.mxu0 0.0
    %3788 = vmatpush1.msra.mxu0 0.0
    %3789 = vmatprep.subr.mxu0 0.0
    %3790 = vmatpush1.msra.mxu0 0.0
    %3791 = vmatprep.subr.mxu0 0.0
    %3792 = vmatpush1.msra.mxu0 0.0
    %3793 = vmatprep.subr.mxu0 0.0
    %3794 = vmatpush1.msra.mxu0 0.0
    %3795 = vmatprep.subr.mxu0 0.0
    %3796 = vmatpush1.msra.mxu0 0.0
    %3797 = vmatprep.subr.mxu0 0.0
    %3798 = vmatpush1.msra.mxu0 0.0
    %3799 = vmatprep.subr.mxu0 0.0
    %3800 = vmatpush1.msra.mxu0 0.0
    %3801 = vmatprep.subr.mxu0 0.0
    %3802 = vmatpush1.msra.mxu0 0.0
    %3803 = vmatprep.subr.mxu0 0.0
    %3804 = vmatpush1.msra.mxu0 0.0
    %3805 = vmatprep.subr.mxu0 0.0
    %3806 = vmatpush1.msra.mxu0 0.0
    %3807 = vmatprep.subr.mxu0 0.0
    %3808 = vmatpush1.msra.mxu0 0.0
    %3809 = vmatprep.subr.mxu0 0.0
    %3810 = vmatpush1.msra.mxu0 0.0
    %3811 = vmatprep.subr.mxu0 0.0
    %3812 = vmatpush1.msra.mxu0 0.0
    %3813 = vmatprep.mubr.f32.mxu0 0.0
    %3814 = vmatmul.mubr.f32.gmra.mrb[0].mxu0 %v1415
    %v3815 = vpop.f32.mrb[0].mxu0
    %v3816 = vadd.f32 %v3746, %v3815
    %v3817 = vpop.f32.mrb[0].mxu0
    %3818 = vdwg.mxu0
    %v3819 = vadd.f32 %v3816, %v2803
    %3820 = vmatprep.subr.mxu0 0.0
    %3821 = vmatpush1.msra.mxu0 %v2816
    %3822 = vmatprep.subr.mxu0 0.0
    %3823 = vmatpush1.msra.mxu0 %v2817
    %3824 = vmatprep.subr.mxu0 0.0
    %3825 = vmatpush1.msra.mxu0 %v2818
    %3826 = vmatprep.subr.mxu0 0.0
    %3827 = vmatpush1.msra.mxu0 %v2819
    %3828 = vmatprep.subr.mxu0 0.0
    %3829 = vmatpush1.msra.mxu0 0.0
    %3830 = vmatprep.subr.mxu0 0.0
    %3831 = vmatpush1.msra.mxu0 0.0
    %3832 = vmatprep.subr.mxu0 0.0
    %3833 = vmatpush1.msra.mxu0 0.0
    %3834 = vmatprep.subr.mxu0 0.0
    %3835 = vmatpush1.msra.mxu0 0.0
    %3836 = vmatprep.subr.mxu0 0.0
    %3837 = vmatpush1.msra.mxu0 0.0
    %3838 = vmatprep.subr.mxu0 0.0
    %3839 = vmatpush1.msra.mxu0 0.0
    %3840 = vmatprep.subr.mxu0 0.0
    %3841 = vmatpush1.msra.mxu0 0.0
    %3842 = vmatprep.subr.mxu0 0.0
    %3843 = vmatpush1.msra.mxu0 0.0
    %3844 = vmatprep.subr.mxu0 0.0
    %3845 = vmatpush1.msra.mxu0 0.0
    %3846 = vmatprep.subr.mxu0 0.0
    %3847 = vmatpush1.msra.mxu0 0.0
    %3848 = vmatprep.subr.mxu0 0.0
    %3849 = vmatpush1.msra.mxu0 0.0
    %3850 = vmatprep.subr.mxu0 0.0
    %3851 = vmatpush1.msra.mxu0 0.0
    %3852 = vmatprep.subr.mxu0 0.0
    %3853 = vmatpush1.msra.mxu0 0.0
    %3854 = vmatprep.subr.mxu0 0.0
    %3855 = vmatpush1.msra.mxu0 0.0
    %3856 = vmatprep.subr.mxu0 0.0
    %3857 = vmatpush1.msra.mxu0 0.0
    %3858 = vmatprep.subr.mxu0 0.0
    %3859 = vmatpush1.msra.mxu0 0.0
    %3860 = vmatprep.subr.mxu0 0.0
    %3861 = vmatpush1.msra.mxu0 0.0
    %3862 = vmatprep.subr.mxu0 0.0
    %3863 = vmatpush1.msra.mxu0 0.0
    %3864 = vmatprep.subr.mxu0 0.0
    %3865 = vmatpush1.msra.mxu0 0.0
    %3866 = vmatprep.subr.mxu0 0.0
    %3867 = vmatpush1.msra.mxu0 0.0
    %3868 = vmatprep.subr.mxu0 0.0
    %3869 = vmatpush1.msra.mxu0 0.0
    %3870 = vmatprep.subr.mxu0 0.0
    %3871 = vmatpush1.msra.mxu0 0.0
    %3872 = vmatprep.subr.mxu0 0.0
    %3873 = vmatpush1.msra.mxu0 0.0
    %3874 = vmatprep.subr.mxu0 0.0
    %3875 = vmatpush1.msra.mxu0 0.0
    %3876 = vmatprep.subr.mxu0 0.0
    %3877 = vmatpush1.msra.mxu0 0.0
    %3878 = vmatprep.subr.mxu0 0.0
    %3879 = vmatpush1.msra.mxu0 0.0
    %3880 = vmatprep.subr.mxu0 0.0
    %3881 = vmatpush1.msra.mxu0 0.0
    %3882 = vmatprep.subr.mxu0 0.0
    %3883 = vmatpush1.msra.mxu0 0.0
    %3884 = vmatprep.mubr.f32.mxu0 0.0
    %3885 = vmatmul.mubr.f32.gmra.mrb[0].mxu0 %v2097
    %v3886 = vpop.f32.mrb[0].mxu0
    %v3887 = vadd.f32 0.0, %v3886
    %v3888 = vpop.f32.mrb[0].mxu0
    %3889 = vdwg.mxu0
    %3891 = vrot.lane.b32.xlu0 %v1511, 32
    %v3892 = vpop.permute.xlu0 %3891
    %v3893 = vsel %vm810, %v3892, 0
    %3895 = vmatprep.subr.mxu0 0.0
    %3896 = vmatpush1.msra.mxu0 %v2812
    %3897 = vmatprep.subr.mxu0 0.0
    %3898 = vmatpush1.msra.mxu0 %v2813
    %3899 = vmatprep.subr.mxu0 0.0
    %3900 = vmatpush1.msra.mxu0 %v2814
    %3901 = vmatprep.subr.mxu0 0.0
    %3902 = vmatpush1.msra.mxu0 %v2815
    %3903 = vmatprep.subr.mxu0 0.0
    %3904 = vmatpush1.msra.mxu0 0.0
    %3905 = vmatprep.subr.mxu0 0.0
    %3906 = vmatpush1.msra.mxu0 0.0
    %3907 = vmatprep.subr.mxu0 0.0
    %3908 = vmatpush1.msra.mxu0 0.0
    %3909 = vmatprep.subr.mxu0 0.0
    %3910 = vmatpush1.msra.mxu0 0.0
    %3911 = vmatprep.subr.mxu0 0.0
    %3912 = vmatpush1.msra.mxu0 0.0
    %3913 = vmatprep.subr.mxu0 0.0
    %3914 = vmatpush1.msra.mxu0 0.0
    %3915 = vmatprep.subr.mxu0 0.0
    %3916 = vmatpush1.msra.mxu0 0.0
    %3917 = vmatprep.subr.mxu0 0.0
    %3918 = vmatpush1.msra.mxu0 0.0
    %3919 = vmatprep.subr.mxu0 0.0
    %3920 = vmatpush1.msra.mxu0 0.0
    %3921 = vmatprep.subr.mxu0 0.0
    %3922 = vmatpush1.msra.mxu0 0.0
    %3923 = vmatprep.subr.mxu0 0.0
    %3924 = vmatpush1.msra.mxu0 0.0
    %3925 = vmatprep.subr.mxu0 0.0
    %3926 = vmatpush1.msra.mxu0 0.0
    %3927 = vmatprep.subr.mxu0 0.0
    %3928 = vmatpush1.msra.mxu0 0.0
    %3929 = vmatprep.subr.mxu0 0.0
    %3930 = vmatpush1.msra.mxu0 0.0
    %3931 = vmatprep.subr.mxu0 0.0
    %3932 = vmatpush1.msra.mxu0 0.0
    %3933 = vmatprep.subr.mxu0 0.0
    %3934 = vmatpush1.msra.mxu0 0.0
    %3935 = vmatprep.subr.mxu0 0.0
    %3936 = vmatpush1.msra.mxu0 0.0
    %3937 = vmatprep.subr.mxu0 0.0
    %3938 = vmatpush1.msra.mxu0 0.0
    %3939 = vmatprep.subr.mxu0 0.0
    %3940 = vmatpush1.msra.mxu0 0.0
    %3941 = vmatprep.subr.mxu0 0.0
    %3942 = vmatpush1.msra.mxu0 0.0
    %3943 = vmatprep.subr.mxu0 0.0
    %3944 = vmatpush1.msra.mxu0 0.0
    %3945 = vmatprep.subr.mxu0 0.0
    %3946 = vmatpush1.msra.mxu0 0.0
    %3947 = vmatprep.subr.mxu0 0.0
    %3948 = vmatpush1.msra.mxu0 0.0
    %3949 = vmatprep.subr.mxu0 0.0
    %3950 = vmatpush1.msra.mxu0 0.0
    %3951 = vmatprep.subr.mxu0 0.0
    %3952 = vmatpush1.msra.mxu0 0.0
    %3953 = vmatprep.subr.mxu0 0.0
    %3954 = vmatpush1.msra.mxu0 0.0
    %3955 = vmatprep.subr.mxu0 0.0
    %3956 = vmatpush1.msra.mxu0 0.0
    %3957 = vmatprep.subr.mxu0 0.0
    %3958 = vmatpush1.msra.mxu0 0.0
    %3959 = vmatprep.mubr.f32.mxu0 0.0
    %3960 = vmatmul.mubr.f32.gmra.mrb[0].mxu0 %v3893
    %v3961 = vpop.f32.mrb[0].mxu0
    %v3962 = vadd.f32 %v3887, %v3961
    %v3963 = vpop.f32.mrb[0].mxu0
    %3964 = vdwg.mxu0
    %v3965 = vadd.f32 %v3962, %v2803
    %v3966 = vld [vmem:[#allocation10] sm:$0xff]
    %v3967 = vld [vmem:[#allocation10 + $0x8] sm:$0xff]
    %v3968 = vld [vmem:[#allocation10 + $0x10] sm:$0xff]
    %v3969 = vld [vmem:[#allocation10 + $0x18] sm:$0xff]
    %v3970 = vxor.u32 %v2973, 2147483648
    %v3971 = vmul.f32 %v3970, 1.442695
    %v3972 = vpow.pop %v3971
    %v3973 = vadd.f32 %v3972, 1.0
    %v3974 = vrcp.pop %v3973
    %v3975 = vmul.f32 1.0, %v3974
    %v3976 = vtanh.pop %v2973
    %3978 = vrot.lane.b32.xlu0 %v3976, 64
    %v3979 = vpop.permute.xlu0 %3978
    %v3981 = vmul.f32 %v3975, %v3979
    %v3982 = vtanh.pop %v3981
    %3984 = vrot.lane.b32.xlu0 %v3982, 96
    %v3985 = vpop.permute.xlu0 %3984
    %v3987 = vmul.f32 %v3975, %v3985
    %3989 = vrot.lane.b32.xlu0 %v3987, 32
    %v3990 = vpop.permute.xlu0 %3989
    %v3991 = vsel %vm810, %v3990, 0
    %3993 = vmatprep.subr.mxu0 0.0
    %3994 = vmatpush1.msra.mxu0 %v3966
    %3995 = vmatprep.subr.mxu0 0.0
    %3996 = vmatpush1.msra.mxu0 %v3967
    %3997 = vmatprep.subr.mxu0 0.0
    %3998 = vmatpush1.msra.mxu0 %v3968
    %3999 = vmatprep.subr.mxu0 0.0
    %4000 = vmatpush1.msra.mxu0 %v3969
    %4001 = vmatprep.subr.mxu0 0.0
    %4002 = vmatpush1.msra.mxu0 0.0
    %4003 = vmatprep.subr.mxu0 0.0
    %4004 = vmatpush1.msra.mxu0 0.0
    %4005 = vmatprep.subr.mxu0 0.0
    %4006 = vmatpush1.msra.mxu0 0.0
    %4007 = vmatprep.subr.mxu0 0.0
    %4008 = vmatpush1.msra.mxu0 0.0
    %4009 = vmatprep.subr.mxu0 0.0
    %4010 = vmatpush1.msra.mxu0 0.0
    %4011 = vmatprep.subr.mxu0 0.0
    %4012 = vmatpush1.msra.mxu0 0.0
    %4013 = vmatprep.subr.mxu0 0.0
    %4014 = vmatpush1.msra.mxu0 0.0
    %4015 = vmatprep.subr.mxu0 0.0
    %4016 = vmatpush1.msra.mxu0 0.0
    %4017 = vmatprep.subr.mxu0 0.0
    %4018 = vmatpush1.msra.mxu0 0.0
    %4019 = vmatprep.subr.mxu0 0.0
    %4020 = vmatpush1.msra.mxu0 0.0
    %4021 = vmatprep.subr.mxu0 0.0
    %4022 = vmatpush1.msra.mxu0 0.0
    %4023 = vmatprep.subr.mxu0 0.0
    %4024 = vmatpush1.msra.mxu0 0.0
    %4025 = vmatprep.subr.mxu0 0.0
    %4026 = vmatpush1.msra.mxu0 0.0
    %4027 = vmatprep.subr.mxu0 0.0
    %4028 = vmatpush1.msra.mxu0 0.0
    %4029 = vmatprep.subr.mxu0 0.0
    %4030 = vmatpush1.msra.mxu0 0.0
    %4031 = vmatprep.subr.mxu0 0.0
    %4032 = vmatpush1.msra.mxu0 0.0
    %4033 = vmatprep.subr.mxu0 0.0
    %4034 = vmatpush1.msra.mxu0 0.0
    %4035 = vmatprep.subr.mxu0 0.0
    %4036 = vmatpush1.msra.mxu0 0.0
    %4037 = vmatprep.subr.mxu0 0.0
    %4038 = vmatpush1.msra.mxu0 0.0
    %4039 = vmatprep.subr.mxu0 0.0
    %4040 = vmatpush1.msra.mxu0 0.0
    %4041 = vmatprep.subr.mxu0 0.0
    %4042 = vmatpush1.msra.mxu0 0.0
    %4043 = vmatprep.subr.mxu0 0.0
    %4044 = vmatpush1.msra.mxu0 0.0
    %4045 = vmatprep.subr.mxu0 0.0
    %4046 = vmatpush1.msra.mxu0 0.0
    %4047 = vmatprep.subr.mxu0 0.0
    %4048 = vmatpush1.msra.mxu0 0.0
    %4049 = vmatprep.subr.mxu0 0.0
    %4050 = vmatpush1.msra.mxu0 0.0
    %4051 = vmatprep.subr.mxu0 0.0
    %4052 = vmatpush1.msra.mxu0 0.0
    %4053 = vmatprep.subr.mxu0 0.0
    %4054 = vmatpush1.msra.mxu0 0.0
    %4055 = vmatprep.subr.mxu0 0.0
    %4056 = vmatpush1.msra.mxu0 0.0
    %4057 = vmatprep.mubr.f32.mxu0 0.0
    %4058 = vmatmul.mubr.f32.gmra.mrb[0].mxu0 %v3991
    %v4059 = vpop.f32.mrb[0].mxu0
    %v4060 = vadd.f32 0.0, %v4059
    %v4061 = vpop.f32.mrb[0].mxu0
    %4062 = vdwg.mxu0
    %v4063 = vadd.f32 %v3114, %v4060
    %v4064 = vxor.u32 %v4063, 2147483648
    %v4065 = vmul.f32 %v4064, 1.442695
    %v4066 = vpow.pop %v4065
    %v4067 = vadd.f32 %v4066, 1.0
    %v4068 = vrcp.pop %v4067
    %v4069 = vmul.f32 1.0, %v4068
    %v4070 = vtanh.pop %v4063
    %4072 = vrot.lane.b32.xlu0 %v3981, 32
    %v4073 = vpop.permute.xlu0 %4072
    %v4075 = vmul.f32 %v4069, %v4073
    %4077 = vrot.lane.b32.xlu0 %v4070, 64
    %v4078 = vpop.permute.xlu0 %4077
    %v4080 = vmul.f32 %v4069, %v4078
    %4082 = vrot.lane.b32.xlu0 %v4080, 32
    %v4083 = vpop.permute.xlu0 %4082
    %v4085 = vadd.f32 %v4075, %v4083
    %v4086 = vtanh.pop %v4085
    %4088 = vrot.lane.b32.xlu0 %v4086, 64
    %v4089 = vpop.permute.xlu0 %4088
    %v4091 = vmul.f32 %v4069, %v4089
    %4093 = vrot.lane.b32.xlu0 %v4091, 32
    %v4094 = vpop.permute.xlu0 %4093
    %v4095 = vsel %vm810, %v4094, 0
    %4097 = vmatprep.subr.mxu0 0.0
    %4098 = vmatpush1.msra.mxu0 %v3966
    %4099 = vmatprep.subr.mxu0 0.0
    %4100 = vmatpush1.msra.mxu0 %v3967
    %4101 = vmatprep.subr.mxu0 0.0
    %4102 = vmatpush1.msra.mxu0 %v3968
    %4103 = vmatprep.subr.mxu0 0.0
    %4104 = vmatpush1.msra.mxu0 %v3969
    %4105 = vmatprep.subr.mxu0 0.0
    %4106 = vmatpush1.msra.mxu0 0.0
    %4107 = vmatprep.subr.mxu0 0.0
    %4108 = vmatpush1.msra.mxu0 0.0
    %4109 = vmatprep.subr.mxu0 0.0
    %4110 = vmatpush1.msra.mxu0 0.0
    %4111 = vmatprep.subr.mxu0 0.0
    %4112 = vmatpush1.msra.mxu0 0.0
    %4113 = vmatprep.subr.mxu0 0.0
    %4114 = vmatpush1.msra.mxu0 0.0
    %4115 = vmatprep.subr.mxu0 0.0
    %4116 = vmatpush1.msra.mxu0 0.0
    %4117 = vmatprep.subr.mxu0 0.0
    %4118 = vmatpush1.msra.mxu0 0.0
    %4119 = vmatprep.subr.mxu0 0.0
    %4120 = vmatpush1.msra.mxu0 0.0
    %4121 = vmatprep.subr.mxu0 0.0
    %4122 = vmatpush1.msra.mxu0 0.0
    %4123 = vmatprep.subr.mxu0 0.0
    %4124 = vmatpush1.msra.mxu0 0.0
    %4125 = vmatprep.subr.mxu0 0.0
    %4126 = vmatpush1.msra.mxu0 0.0
    %4127 = vmatprep.subr.mxu0 0.0
    %4128 = vmatpush1.msra.mxu0 0.0
    %4129 = vmatprep.subr.mxu0 0.0
    %4130 = vmatpush1.msra.mxu0 0.0
    %4131 = vmatprep.subr.mxu0 0.0
    %4132 = vmatpush1.msra.mxu0 0.0
    %4133 = vmatprep.subr.mxu0 0.0
    %4134 = vmatpush1.msra.mxu0 0.0
    %4135 = vmatprep.subr.mxu0 0.0
    %4136 = vmatpush1.msra.mxu0 0.0
    %4137 = vmatprep.subr.mxu0 0.0
    %4138 = vmatpush1.msra.mxu0 0.0
    %4139 = vmatprep.subr.mxu0 0.0
    %4140 = vmatpush1.msra.mxu0 0.0
    %4141 = vmatprep.subr.mxu0 0.0
    %4142 = vmatpush1.msra.mxu0 0.0
    %4143 = vmatprep.subr.mxu0 0.0
    %4144 = vmatpush1.msra.mxu0 0.0
    %4145 = vmatprep.subr.mxu0 0.0
    %4146 = vmatpush1.msra.mxu0 0.0
    %4147 = vmatprep.subr.mxu0 0.0
    %4148 = vmatpush1.msra.mxu0 0.0
    %4149 = vmatprep.subr.mxu0 0.0
    %4150 = vmatpush1.msra.mxu0 0.0
    %4151 = vmatprep.subr.mxu0 0.0
    %4152 = vmatpush1.msra.mxu0 0.0
    %4153 = vmatprep.subr.mxu0 0.0
    %4154 = vmatpush1.msra.mxu0 0.0
    %4155 = vmatprep.subr.mxu0 0.0
    %4156 = vmatpush1.msra.mxu0 0.0
    %4157 = vmatprep.subr.mxu0 0.0
    %4158 = vmatpush1.msra.mxu0 0.0
    %4159 = vmatprep.subr.mxu0 0.0
    %4160 = vmatpush1.msra.mxu0 0.0
    %4161 = vmatprep.mubr.f32.mxu0 0.0
    %4162 = vmatmul.mubr.f32.gmra.mrb[0].mxu0 %v4095
    %v4163 = vpop.f32.mrb[0].mxu0
    %v4164 = vadd.f32 0.0, %v4163
    %v4165 = vpop.f32.mrb[0].mxu0
    %4166 = vdwg.mxu0
    %v4167 = vadd.f32 %v3255, %v4164
    %v4168 = vxor.u32 %v4167, 2147483648
    %v4169 = vmul.f32 %v4168, 1.442695
    %v4170 = vpow.pop %v4169
    %v4171 = vadd.f32 %v4170, 1.0
    %v4172 = vrcp.pop %v4171
    %v4173 = vmul.f32 1.0, %v4172
    %v4174 = vtanh.pop %v4167
    %v4175 = vmul.f32 %v4173, %v4085
    %4177 = vrot.lane.b32.xlu0 %v4174, 64
    %v4178 = vpop.permute.xlu0 %4177
    %v4180 = vmul.f32 %v4173, %v4178
    %4182 = vrot.lane.b32.xlu0 %v4180, 32
    %v4183 = vpop.permute.xlu0 %4182
    %v4185 = vadd.f32 %v4175, %v4183
    %v4186 = vtanh.pop %v4185
    %4188 = vrot.lane.b32.xlu0 %v4186, 64
    %v4189 = vpop.permute.xlu0 %4188
    %v4191 = vmul.f32 %v4173, %v4189
    %4193 = vrot.lane.b32.xlu0 %v4191, 32
    %v4194 = vpop.permute.xlu0 %4193
    %v4195 = vsel %vm810, %v4194, 0
    %4197 = vmatprep.subr.mxu0 0.0
    %4198 = vmatpush1.msra.mxu0 %v3966
    %4199 = vmatprep.subr.mxu0 0.0
    %4200 = vmatpush1.msra.mxu0 %v3967
    %4201 = vmatprep.subr.mxu0 0.0
    %4202 = vmatpush1.msra.mxu0 %v3968
    %4203 = vmatprep.subr.mxu0 0.0
    %4204 = vmatpush1.msra.mxu0 %v3969
    %4205 = vmatprep.subr.mxu0 0.0
    %4206 = vmatpush1.msra.mxu0 0.0
    %4207 = vmatprep.subr.mxu0 0.0
    %4208 = vmatpush1.msra.mxu0 0.0
    %4209 = vmatprep.subr.mxu0 0.0
    %4210 = vmatpush1.msra.mxu0 0.0
    %4211 = vmatprep.subr.mxu0 0.0
    %4212 = vmatpush1.msra.mxu0 0.0
    %4213 = vmatprep.subr.mxu0 0.0
    %4214 = vmatpush1.msra.mxu0 0.0
    %4215 = vmatprep.subr.mxu0 0.0
    %4216 = vmatpush1.msra.mxu0 0.0
    %4217 = vmatprep.subr.mxu0 0.0
    %4218 = vmatpush1.msra.mxu0 0.0
    %4219 = vmatprep.subr.mxu0 0.0
    %4220 = vmatpush1.msra.mxu0 0.0
    %4221 = vmatprep.subr.mxu0 0.0
    %4222 = vmatpush1.msra.mxu0 0.0
    %4223 = vmatprep.subr.mxu0 0.0
    %4224 = vmatpush1.msra.mxu0 0.0
    %4225 = vmatprep.subr.mxu0 0.0
    %4226 = vmatpush1.msra.mxu0 0.0
    %4227 = vmatprep.subr.mxu0 0.0
    %4228 = vmatpush1.msra.mxu0 0.0
    %4229 = vmatprep.subr.mxu0 0.0
    %4230 = vmatpush1.msra.mxu0 0.0
    %4231 = vmatprep.subr.mxu0 0.0
    %4232 = vmatpush1.msra.mxu0 0.0
    %4233 = vmatprep.subr.mxu0 0.0
    %4234 = vmatpush1.msra.mxu0 0.0
    %4235 = vmatprep.subr.mxu0 0.0
    %4236 = vmatpush1.msra.mxu0 0.0
    %4237 = vmatprep.subr.mxu0 0.0
    %4238 = vmatpush1.msra.mxu0 0.0
    %4239 = vmatprep.subr.mxu0 0.0
    %4240 = vmatpush1.msra.mxu0 0.0
    %4241 = vmatprep.subr.mxu0 0.0
    %4242 = vmatpush1.msra.mxu0 0.0
    %4243 = vmatprep.subr.mxu0 0.0
    %4244 = vmatpush1.msra.mxu0 0.0
    %4245 = vmatprep.subr.mxu0 0.0
    %4246 = vmatpush1.msra.mxu0 0.0
    %4247 = vmatprep.subr.mxu0 0.0
    %4248 = vmatpush1.msra.mxu0 0.0
    %4249 = vmatprep.subr.mxu0 0.0
    %4250 = vmatpush1.msra.mxu0 0.0
    %4251 = vmatprep.subr.mxu0 0.0
    %4252 = vmatpush1.msra.mxu0 0.0
    %4253 = vmatprep.subr.mxu0 0.0
    %4254 = vmatpush1.msra.mxu0 0.0
    %4255 = vmatprep.subr.mxu0 0.0
    %4256 = vmatpush1.msra.mxu0 0.0
    %4257 = vmatprep.subr.mxu0 0.0
    %4258 = vmatpush1.msra.mxu0 0.0
    %4259 = vmatprep.subr.mxu0 0.0
    %4260 = vmatpush1.msra.mxu0 0.0
    %4261 = vmatprep.mubr.f32.mxu0 0.0
    %4262 = vmatmul.mubr.f32.gmra.mrb[0].mxu0 %v4195
    %v4263 = vpop.f32.mrb[0].mxu0
    %v4264 = vadd.f32 0.0, %v4263
    %v4265 = vpop.f32.mrb[0].mxu0
    %4266 = vdwg.mxu0
    %v4267 = vadd.f32 %v3396, %v4264
    %v4268 = vxor.u32 %v4267, 2147483648
    %v4269 = vmul.f32 %v4268, 1.442695
    %v4270 = vpow.pop %v4269
    %v4271 = vadd.f32 %v4270, 1.0
    %v4272 = vrcp.pop %v4271
    %v4273 = vmul.f32 1.0, %v4272
    %v4274 = vtanh.pop %v4267
    %v4275 = vmul.f32 %v4273, %v4185
    %4277 = vrot.lane.b32.xlu0 %v4274, 64
    %v4278 = vpop.permute.xlu0 %4277
    %v4280 = vmul.f32 %v4273, %v4278
    %4282 = vrot.lane.b32.xlu0 %v4280, 32
    %v4283 = vpop.permute.xlu0 %4282
    %v4285 = vadd.f32 %v4275, %v4283
    %v4286 = vtanh.pop %v4285
    %4288 = vrot.lane.b32.xlu0 %v4286, 64
    %v4289 = vpop.permute.xlu0 %4288
    %v4291 = vmul.f32 %v4273, %v4289
    %4293 = vrot.lane.b32.xlu0 %v4291, 32
    %v4294 = vpop.permute.xlu0 %4293
    %v4295 = vsel %vm810, %v4294, 0
    %4297 = vmatprep.subr.mxu0 0.0
    %4298 = vmatpush1.msra.mxu0 %v3966
    %4299 = vmatprep.subr.mxu0 0.0
    %4300 = vmatpush1.msra.mxu0 %v3967
    %4301 = vmatprep.subr.mxu0 0.0
    %4302 = vmatpush1.msra.mxu0 %v3968
    %4303 = vmatprep.subr.mxu0 0.0
    %4304 = vmatpush1.msra.mxu0 %v3969
    %4305 = vmatprep.subr.mxu0 0.0
    %4306 = vmatpush1.msra.mxu0 0.0
    %4307 = vmatprep.subr.mxu0 0.0
    %4308 = vmatpush1.msra.mxu0 0.0
    %4309 = vmatprep.subr.mxu0 0.0
    %4310 = vmatpush1.msra.mxu0 0.0
    %4311 = vmatprep.subr.mxu0 0.0
    %4312 = vmatpush1.msra.mxu0 0.0
    %4313 = vmatprep.subr.mxu0 0.0
    %4314 = vmatpush1.msra.mxu0 0.0
    %4315 = vmatprep.subr.mxu0 0.0
    %4316 = vmatpush1.msra.mxu0 0.0
    %4317 = vmatprep.subr.mxu0 0.0
    %4318 = vmatpush1.msra.mxu0 0.0
    %4319 = vmatprep.subr.mxu0 0.0
    %4320 = vmatpush1.msra.mxu0 0.0
    %4321 = vmatprep.subr.mxu0 0.0
    %4322 = vmatpush1.msra.mxu0 0.0
    %4323 = vmatprep.subr.mxu0 0.0
    %4324 = vmatpush1.msra.mxu0 0.0
    %4325 = vmatprep.subr.mxu0 0.0
    %4326 = vmatpush1.msra.mxu0 0.0
    %4327 = vmatprep.subr.mxu0 0.0
    %4328 = vmatpush1.msra.mxu0 0.0
    %4329 = vmatprep.subr.mxu0 0.0
    %4330 = vmatpush1.msra.mxu0 0.0
    %4331 = vmatprep.subr.mxu0 0.0
    %4332 = vmatpush1.msra.mxu0 0.0
    %4333 = vmatprep.subr.mxu0 0.0
    %4334 = vmatpush1.msra.mxu0 0.0
    %4335 = vmatprep.subr.mxu0 0.0
    %4336 = vmatpush1.msra.mxu0 0.0
    %4337 = vmatprep.subr.mxu0 0.0
    %4338 = vmatpush1.msra.mxu0 0.0
    %4339 = vmatprep.subr.mxu0 0.0
    %4340 = vmatpush1.msra.mxu0 0.0
    %4341 = vmatprep.subr.mxu0 0.0
    %4342 = vmatpush1.msra.mxu0 0.0
    %4343 = vmatprep.subr.mxu0 0.0
    %4344 = vmatpush1.msra.mxu0 0.0
    %4345 = vmatprep.subr.mxu0 0.0
    %4346 = vmatpush1.msra.mxu0 0.0
    %4347 = vmatprep.subr.mxu0 0.0
    %4348 = vmatpush1.msra.mxu0 0.0
    %4349 = vmatprep.subr.mxu0 0.0
    %4350 = vmatpush1.msra.mxu0 0.0
    %4351 = vmatprep.subr.mxu0 0.0
    %4352 = vmatpush1.msra.mxu0 0.0
    %4353 = vmatprep.subr.mxu0 0.0
    %4354 = vmatpush1.msra.mxu0 0.0
    %4355 = vmatprep.subr.mxu0 0.0
    %4356 = vmatpush1.msra.mxu0 0.0
    %4357 = vmatprep.subr.mxu0 0.0
    %4358 = vmatpush1.msra.mxu0 0.0
    %4359 = vmatprep.subr.mxu0 0.0
    %4360 = vmatpush1.msra.mxu0 0.0
    %4361 = vmatprep.mubr.f32.mxu0 0.0
    %4362 = vmatmul.mubr.f32.gmra.mrb[0].mxu0 %v4295
    %v4363 = vpop.f32.mrb[0].mxu0
    %v4364 = vadd.f32 0.0, %v4363
    %v4365 = vpop.f32.mrb[0].mxu0
    %4366 = vdwg.mxu0
    %v4367 = vadd.f32 %v3537, %v4364
    %v4368 = vxor.u32 %v4367, 2147483648
    %v4369 = vmul.f32 %v4368, 1.442695
    %v4370 = vpow.pop %v4369
    %v4371 = vadd.f32 %v4370, 1.0
    %v4372 = vrcp.pop %v4371
    %v4373 = vmul.f32 1.0, %v4372
    %v4374 = vtanh.pop %v4367
    %v4375 = vmul.f32 %v4373, %v4285
    %4377 = vrot.lane.b32.xlu0 %v4374, 64
    %v4378 = vpop.permute.xlu0 %4377
    %v4380 = vmul.f32 %v4373, %v4378
    %4382 = vrot.lane.b32.xlu0 %v4380, 32
    %v4383 = vpop.permute.xlu0 %4382
    %v4385 = vadd.f32 %v4375, %v4383
    %v4386 = vtanh.pop %v4385
    %4388 = vrot.lane.b32.xlu0 %v4386, 64
    %v4389 = vpop.permute.xlu0 %4388
    %v4391 = vmul.f32 %v4373, %v4389
    %4393 = vrot.lane.b32.xlu0 %v4391, 32
    %v4394 = vpop.permute.xlu0 %4393
    %v4395 = vsel %vm810, %v4394, 0
    %4397 = vmatprep.subr.mxu0 0.0
    %4398 = vmatpush1.msra.mxu0 %v3966
    %4399 = vmatprep.subr.mxu0 0.0
    %4400 = vmatpush1.msra.mxu0 %v3967
    %4401 = vmatprep.subr.mxu0 0.0
    %4402 = vmatpush1.msra.mxu0 %v3968
    %4403 = vmatprep.subr.mxu0 0.0
    %4404 = vmatpush1.msra.mxu0 %v3969
    %4405 = vmatprep.subr.mxu0 0.0
    %4406 = vmatpush1.msra.mxu0 0.0
    %4407 = vmatprep.subr.mxu0 0.0
    %4408 = vmatpush1.msra.mxu0 0.0
    %4409 = vmatprep.subr.mxu0 0.0
    %4410 = vmatpush1.msra.mxu0 0.0
    %4411 = vmatprep.subr.mxu0 0.0
    %4412 = vmatpush1.msra.mxu0 0.0
    %4413 = vmatprep.subr.mxu0 0.0
    %4414 = vmatpush1.msra.mxu0 0.0
    %4415 = vmatprep.subr.mxu0 0.0
    %4416 = vmatpush1.msra.mxu0 0.0
    %4417 = vmatprep.subr.mxu0 0.0
    %4418 = vmatpush1.msra.mxu0 0.0
    %4419 = vmatprep.subr.mxu0 0.0
    %4420 = vmatpush1.msra.mxu0 0.0
    %4421 = vmatprep.subr.mxu0 0.0
    %4422 = vmatpush1.msra.mxu0 0.0
    %4423 = vmatprep.subr.mxu0 0.0
    %4424 = vmatpush1.msra.mxu0 0.0
    %4425 = vmatprep.subr.mxu0 0.0
    %4426 = vmatpush1.msra.mxu0 0.0
    %4427 = vmatprep.subr.mxu0 0.0
    %4428 = vmatpush1.msra.mxu0 0.0
    %4429 = vmatprep.subr.mxu0 0.0
    %4430 = vmatpush1.msra.mxu0 0.0
    %4431 = vmatprep.subr.mxu0 0.0
    %4432 = vmatpush1.msra.mxu0 0.0
    %4433 = vmatprep.subr.mxu0 0.0
    %4434 = vmatpush1.msra.mxu0 0.0
    %4435 = vmatprep.subr.mxu0 0.0
    %4436 = vmatpush1.msra.mxu0 0.0
    %4437 = vmatprep.subr.mxu0 0.0
    %4438 = vmatpush1.msra.mxu0 0.0
    %4439 = vmatprep.subr.mxu0 0.0
    %4440 = vmatpush1.msra.mxu0 0.0
    %4441 = vmatprep.subr.mxu0 0.0
    %4442 = vmatpush1.msra.mxu0 0.0
    %4443 = vmatprep.subr.mxu0 0.0
    %4444 = vmatpush1.msra.mxu0 0.0
    %4445 = vmatprep.subr.mxu0 0.0
    %4446 = vmatpush1.msra.mxu0 0.0
    %4447 = vmatprep.subr.mxu0 0.0
    %4448 = vmatpush1.msra.mxu0 0.0
    %4449 = vmatprep.subr.mxu0 0.0
    %4450 = vmatpush1.msra.mxu0 0.0
    %4451 = vmatprep.subr.mxu0 0.0
    %4452 = vmatpush1.msra.mxu0 0.0
    %4453 = vmatprep.subr.mxu0 0.0
    %4454 = vmatpush1.msra.mxu0 0.0
    %4455 = vmatprep.subr.mxu0 0.0
    %4456 = vmatpush1.msra.mxu0 0.0
    %4457 = vmatprep.subr.mxu0 0.0
    %4458 = vmatpush1.msra.mxu0 0.0
    %4459 = vmatprep.subr.mxu0 0.0
    %4460 = vmatpush1.msra.mxu0 0.0
    %4461 = vmatprep.mubr.f32.mxu0 0.0
    %4462 = vmatmul.mubr.f32.gmra.mrb[0].mxu0 %v4395
    %v4463 = vpop.f32.mrb[0].mxu0
    %v4464 = vadd.f32 0.0, %v4463
    %v4465 = vpop.f32.mrb[0].mxu0
    %4466 = vdwg.mxu0
    %v4467 = vadd.f32 %v3678, %v4464
    %v4468 = vxor.u32 %v4467, 2147483648
    %v4469 = vmul.f32 %v4468, 1.442695
    %v4470 = vpow.pop %v4469
    %v4471 = vadd.f32 %v4470, 1.0
    %v4472 = vrcp.pop %v4471
    %v4473 = vmul.f32 1.0, %v4472
    %v4474 = vtanh.pop %v4467
    %v4475 = vmul.f32 %v4473, %v4385
    %4477 = vrot.lane.b32.xlu0 %v4474, 64
    %v4478 = vpop.permute.xlu0 %4477
    %v4480 = vmul.f32 %v4473, %v4478
    %4482 = vrot.lane.b32.xlu0 %v4480, 32
    %v4483 = vpop.permute.xlu0 %4482
    %v4485 = vadd.f32 %v4475, %v4483
    %v4486 = vtanh.pop %v4485
    %4488 = vrot.lane.b32.xlu0 %v4486, 64
    %v4489 = vpop.permute.xlu0 %4488
    %v4491 = vmul.f32 %v4473, %v4489
    %4493 = vrot.lane.b32.xlu0 %v4491, 32
    %v4494 = vpop.permute.xlu0 %4493
    %v4495 = vsel %vm810, %v4494, 0
    %4497 = vmatprep.subr.mxu0 0.0
    %4498 = vmatpush1.msra.mxu0 %v3966
    %4499 = vmatprep.subr.mxu0 0.0
    %4500 = vmatpush1.msra.mxu0 %v3967
    %4501 = vmatprep.subr.mxu0 0.0
    %4502 = vmatpush1.msra.mxu0 %v3968
    %4503 = vmatprep.subr.mxu0 0.0
    %4504 = vmatpush1.msra.mxu0 %v3969
    %4505 = vmatprep.subr.mxu0 0.0
    %4506 = vmatpush1.msra.mxu0 0.0
    %4507 = vmatprep.subr.mxu0 0.0
    %4508 = vmatpush1.msra.mxu0 0.0
    %4509 = vmatprep.subr.mxu0 0.0
    %4510 = vmatpush1.msra.mxu0 0.0
    %4511 = vmatprep.subr.mxu0 0.0
    %4512 = vmatpush1.msra.mxu0 0.0
    %4513 = vmatprep.subr.mxu0 0.0
    %4514 = vmatpush1.msra.mxu0 0.0
    %4515 = vmatprep.subr.mxu0 0.0
    %4516 = vmatpush1.msra.mxu0 0.0
    %4517 = vmatprep.subr.mxu0 0.0
    %4518 = vmatpush1.msra.mxu0 0.0
    %4519 = vmatprep.subr.mxu0 0.0
    %4520 = vmatpush1.msra.mxu0 0.0
    %4521 = vmatprep.subr.mxu0 0.0
    %4522 = vmatpush1.msra.mxu0 0.0
    %4523 = vmatprep.subr.mxu0 0.0
    %4524 = vmatpush1.msra.mxu0 0.0
    %4525 = vmatprep.subr.mxu0 0.0
    %4526 = vmatpush1.msra.mxu0 0.0
    %4527 = vmatprep.subr.mxu0 0.0
    %4528 = vmatpush1.msra.mxu0 0.0
    %4529 = vmatprep.subr.mxu0 0.0
    %4530 = vmatpush1.msra.mxu0 0.0
    %4531 = vmatprep.subr.mxu0 0.0
    %4532 = vmatpush1.msra.mxu0 0.0
    %4533 = vmatprep.subr.mxu0 0.0
    %4534 = vmatpush1.msra.mxu0 0.0
    %4535 = vmatprep.subr.mxu0 0.0
    %4536 = vmatpush1.msra.mxu0 0.0
    %4537 = vmatprep.subr.mxu0 0.0
    %4538 = vmatpush1.msra.mxu0 0.0
    %4539 = vmatprep.subr.mxu0 0.0
    %4540 = vmatpush1.msra.mxu0 0.0
    %4541 = vmatprep.subr.mxu0 0.0
    %4542 = vmatpush1.msra.mxu0 0.0
    %4543 = vmatprep.subr.mxu0 0.0
    %4544 = vmatpush1.msra.mxu0 0.0
    %4545 = vmatprep.subr.mxu0 0.0
    %4546 = vmatpush1.msra.mxu0 0.0
    %4547 = vmatprep.subr.mxu0 0.0
    %4548 = vmatpush1.msra.mxu0 0.0
    %4549 = vmatprep.subr.mxu0 0.0
    %4550 = vmatpush1.msra.mxu0 0.0
    %4551 = vmatprep.subr.mxu0 0.0
    %4552 = vmatpush1.msra.mxu0 0.0
    %4553 = vmatprep.subr.mxu0 0.0
    %4554 = vmatpush1.msra.mxu0 0.0
    %4555 = vmatprep.subr.mxu0 0.0
    %4556 = vmatpush1.msra.mxu0 0.0
    %4557 = vmatprep.subr.mxu0 0.0
    %4558 = vmatpush1.msra.mxu0 0.0
    %4559 = vmatprep.subr.mxu0 0.0
    %4560 = vmatpush1.msra.mxu0 0.0
    %4561 = vmatprep.mubr.f32.mxu0 0.0
    %4562 = vmatmul.mubr.f32.gmra.mrb[0].mxu0 %v4495
    %v4563 = vpop.f32.mrb[0].mxu0
    %v4564 = vadd.f32 0.0, %v4563
    %v4565 = vpop.f32.mrb[0].mxu0
    %4566 = vdwg.mxu0
    %v4567 = vadd.f32 %v3819, %v4564
    %v4568 = vxor.u32 %v4567, 2147483648
    %v4569 = vmul.f32 %v4568, 1.442695
    %v4570 = vpow.pop %v4569
    %v4571 = vadd.f32 %v4570, 1.0
    %v4572 = vrcp.pop %v4571
    %v4573 = vmul.f32 1.0, %v4572
    %v4574 = vtanh.pop %v4567
    %v4575 = vmul.f32 %v4573, %v4485
    %4577 = vrot.lane.b32.xlu0 %v4574, 64
    %v4578 = vpop.permute.xlu0 %4577
    %v4580 = vmul.f32 %v4573, %v4578
    %4582 = vrot.lane.b32.xlu0 %v4580, 32
    %v4583 = vpop.permute.xlu0 %4582
    %v4585 = vadd.f32 %v4575, %v4583
    %v4586 = vtanh.pop %v4585
    %4588 = vrot.lane.b32.xlu0 %v4586, 64
    %v4589 = vpop.permute.xlu0 %4588
    %v4591 = vmul.f32 %v4573, %v4589
    %4593 = vrot.lane.b32.xlu0 %v4591, 32
    %v4594 = vpop.permute.xlu0 %4593
    %v4595 = vsel %vm810, %v4594, 0
    %4597 = vmatprep.subr.mxu0 0.0
    %4598 = vmatpush1.msra.mxu0 %v3966
    %4599 = vmatprep.subr.mxu0 0.0
    %4600 = vmatpush1.msra.mxu0 %v3967
    %4601 = vmatprep.subr.mxu0 0.0
    %4602 = vmatpush1.msra.mxu0 %v3968
    %4603 = vmatprep.subr.mxu0 0.0
    %4604 = vmatpush1.msra.mxu0 %v3969
    %4605 = vmatprep.subr.mxu0 0.0
    %4606 = vmatpush1.msra.mxu0 0.0
    %4607 = vmatprep.subr.mxu0 0.0
    %4608 = vmatpush1.msra.mxu0 0.0
    %4609 = vmatprep.subr.mxu0 0.0
    %4610 = vmatpush1.msra.mxu0 0.0
    %4611 = vmatprep.subr.mxu0 0.0
    %4612 = vmatpush1.msra.mxu0 0.0
    %4613 = vmatprep.subr.mxu0 0.0
    %4614 = vmatpush1.msra.mxu0 0.0
    %4615 = vmatprep.subr.mxu0 0.0
    %4616 = vmatpush1.msra.mxu0 0.0
    %4617 = vmatprep.subr.mxu0 0.0
    %4618 = vmatpush1.msra.mxu0 0.0
    %4619 = vmatprep.subr.mxu0 0.0
    %4620 = vmatpush1.msra.mxu0 0.0
    %4621 = vmatprep.subr.mxu0 0.0
    %4622 = vmatpush1.msra.mxu0 0.0
    %4623 = vmatprep.subr.mxu0 0.0
    %4624 = vmatpush1.msra.mxu0 0.0
    %4625 = vmatprep.subr.mxu0 0.0
    %4626 = vmatpush1.msra.mxu0 0.0
    %4627 = vmatprep.subr.mxu0 0.0
    %4628 = vmatpush1.msra.mxu0 0.0
    %4629 = vmatprep.subr.mxu0 0.0
    %4630 = vmatpush1.msra.mxu0 0.0
    %4631 = vmatprep.subr.mxu0 0.0
    %4632 = vmatpush1.msra.mxu0 0.0
    %4633 = vmatprep.subr.mxu0 0.0
    %4634 = vmatpush1.msra.mxu0 0.0
    %4635 = vmatprep.subr.mxu0 0.0
    %4636 = vmatpush1.msra.mxu0 0.0
    %4637 = vmatprep.subr.mxu0 0.0
    %4638 = vmatpush1.msra.mxu0 0.0
    %4639 = vmatprep.subr.mxu0 0.0
    %4640 = vmatpush1.msra.mxu0 0.0
    %4641 = vmatprep.subr.mxu0 0.0
    %4642 = vmatpush1.msra.mxu0 0.0
    %4643 = vmatprep.subr.mxu0 0.0
    %4644 = vmatpush1.msra.mxu0 0.0
    %4645 = vmatprep.subr.mxu0 0.0
    %4646 = vmatpush1.msra.mxu0 0.0
    %4647 = vmatprep.subr.mxu0 0.0
    %4648 = vmatpush1.msra.mxu0 0.0
    %4649 = vmatprep.subr.mxu0 0.0
    %4650 = vmatpush1.msra.mxu0 0.0
    %4651 = vmatprep.subr.mxu0 0.0
    %4652 = vmatpush1.msra.mxu0 0.0
    %4653 = vmatprep.subr.mxu0 0.0
    %4654 = vmatpush1.msra.mxu0 0.0
    %4655 = vmatprep.subr.mxu0 0.0
    %4656 = vmatpush1.msra.mxu0 0.0
    %4657 = vmatprep.subr.mxu0 0.0
    %4658 = vmatpush1.msra.mxu0 0.0
    %4659 = vmatprep.subr.mxu0 0.0
    %4660 = vmatpush1.msra.mxu0 0.0
    %4661 = vmatprep.mubr.f32.mxu0 0.0
    %4662 = vmatmul.mubr.f32.gmra.mrb[0].mxu0 %v4595
    %v4663 = vpop.f32.mrb[0].mxu0
    %v4664 = vadd.f32 0.0, %v4663
    %v4665 = vpop.f32.mrb[0].mxu0
    %4666 = vdwg.mxu0
    %v4667 = vadd.f32 %v3965, %v4664
    %v4668 = vxor.u32 %v4667, 2147483648
    %v4669 = vmul.f32 %v4668, 1.442695
    %v4670 = vpow.pop %v4669
    %v4671 = vadd.f32 %v4670, 1.0
    %v4672 = vrcp.pop %v4671
    %v4673 = vmul.f32 1.0, %v4672
    %v4674 = vtanh.pop %v4667
    %v4675 = vmul.f32 %v4673, %v4585
    %4677 = vrot.lane.b32.xlu0 %v4674, 64
    %v4678 = vpop.permute.xlu0 %4677
    %v4680 = vmul.f32 %v4673, %v4678
    %4682 = vrot.lane.b32.xlu0 %v4680, 32
    %v4683 = vpop.permute.xlu0 %4682
    %v4685 = vadd.f32 %v4675, %v4683
    %v4686 = vtanh.pop %v4685
    %4688 = vrot.lane.b32.xlu0 %v4686, 64
    %v4689 = vpop.permute.xlu0 %4688
    %v4691 = vmul.f32 %v4673, %v4689
    %4692 = vmatprep.subr.mxu0 0.0
    %4693 = vmatpush1.msra.mxu0 %v2824
    %4694 = vmatprep.subr.mxu0 0.0
    %4695 = vmatpush1.msra.mxu0 %v2825
    %4696 = vmatprep.subr.mxu0 0.0
    %4697 = vmatpush1.msra.mxu0 %v2826
    %4698 = vmatprep.subr.mxu0 0.0
    %4699 = vmatpush1.msra.mxu0 %v2827
    %4700 = vmatprep.subr.mxu0 0.0
    %4701 = vmatpush1.msra.mxu0 0.0
    %4702 = vmatprep.subr.mxu0 0.0
    %4703 = vmatpush1.msra.mxu0 0.0
    %4704 = vmatprep.subr.mxu0 0.0
    %4705 = vmatpush1.msra.mxu0 0.0
    %4706 = vmatprep.subr.mxu0 0.0
    %4707 = vmatpush1.msra.mxu0 0.0
    %4708 = vmatprep.subr.mxu0 0.0
    %4709 = vmatpush1.msra.mxu0 0.0
    %4710 = vmatprep.subr.mxu0 0.0
    %4711 = vmatpush1.msra.mxu0 0.0
    %4712 = vmatprep.subr.mxu0 0.0
    %4713 = vmatpush1.msra.mxu0 0.0
    %4714 = vmatprep.subr.mxu0 0.0
    %4715 = vmatpush1.msra.mxu0 0.0
    %4716 = vmatprep.subr.mxu0 0.0
    %4717 = vmatpush1.msra.mxu0 0.0
    %4718 = vmatprep.subr.mxu0 0.0
    %4719 = vmatpush1.msra.mxu0 0.0
    %4720 = vmatprep.subr.mxu0 0.0
    %4721 = vmatpush1.msra.mxu0 0.0
    %4722 = vmatprep.subr.mxu0 0.0
    %4723 = vmatpush1.msra.mxu0 0.0
    %4724 = vmatprep.subr.mxu0 0.0
    %4725 = vmatpush1.msra.mxu0 0.0
    %4726 = vmatprep.subr.mxu0 0.0
    %4727 = vmatpush1.msra.mxu0 0.0
    %4728 = vmatprep.subr.mxu0 0.0
    %4729 = vmatpush1.msra.mxu0 0.0
    %4730 = vmatprep.subr.mxu0 0.0
    %4731 = vmatpush1.msra.mxu0 0.0
    %4732 = vmatprep.subr.mxu0 0.0
    %4733 = vmatpush1.msra.mxu0 0.0
    %4734 = vmatprep.subr.mxu0 0.0
    %4735 = vmatpush1.msra.mxu0 0.0
    %4736 = vmatprep.subr.mxu0 0.0
    %4737 = vmatpush1.msra.mxu0 0.0
    %4738 = vmatprep.subr.mxu0 0.0
    %4739 = vmatpush1.msra.mxu0 0.0
    %4740 = vmatprep.subr.mxu0 0.0
    %4741 = vmatpush1.msra.mxu0 0.0
    %4742 = vmatprep.subr.mxu0 0.0
    %4743 = vmatpush1.msra.mxu0 0.0
    %4744 = vmatprep.subr.mxu0 0.0
    %4745 = vmatpush1.msra.mxu0 0.0
    %4746 = vmatprep.subr.mxu0 0.0
    %4747 = vmatpush1.msra.mxu0 0.0
    %4748 = vmatprep.subr.mxu0 0.0
    %4749 = vmatpush1.msra.mxu0 0.0
    %4750 = vmatprep.subr.mxu0 0.0
    %4751 = vmatpush1.msra.mxu0 0.0
    %4752 = vmatprep.subr.mxu0 0.0
    %4753 = vmatpush1.msra.mxu0 0.0
    %4754 = vmatprep.subr.mxu0 0.0
    %4755 = vmatpush1.msra.mxu0 0.0
    %4756 = vmatprep.mubr.f32.mxu0 0.0
    %4757 = vmatmul.mubr.f32.gmra.mrb[0].mxu0 %v2097
    %v4758 = vpop.f32.mrb[0].mxu0
    %v4759 = vadd.f32 0.0, %v4758
    %v4760 = vpop.f32.mrb[0].mxu0
    %4761 = vdwg.mxu0
    %4762 = vmatprep.subr.mxu0 0.0
    %4763 = vmatpush1.msra.mxu0 %v2820
    %4764 = vmatprep.subr.mxu0 0.0
    %4765 = vmatpush1.msra.mxu0 %v2821
    %4766 = vmatprep.subr.mxu0 0.0
    %4767 = vmatpush1.msra.mxu0 %v2822
    %4768 = vmatprep.subr.mxu0 0.0
    %4769 = vmatpush1.msra.mxu0 %v2823
    %4770 = vmatprep.subr.mxu0 0.0
    %4771 = vmatpush1.msra.mxu0 0.0
    %4772 = vmatprep.subr.mxu0 0.0
    %4773 = vmatpush1.msra.mxu0 0.0
    %4774 = vmatprep.subr.mxu0 0.0
    %4775 = vmatpush1.msra.mxu0 0.0
    %4776 = vmatprep.subr.mxu0 0.0
    %4777 = vmatpush1.msra.mxu0 0.0
    %4778 = vmatprep.subr.mxu0 0.0
    %4779 = vmatpush1.msra.mxu0 0.0
    %4780 = vmatprep.subr.mxu0 0.0
    %4781 = vmatpush1.msra.mxu0 0.0
    %4782 = vmatprep.subr.mxu0 0.0
    %4783 = vmatpush1.msra.mxu0 0.0
    %4784 = vmatprep.subr.mxu0 0.0
    %4785 = vmatpush1.msra.mxu0 0.0
    %4786 = vmatprep.subr.mxu0 0.0
    %4787 = vmatpush1.msra.mxu0 0.0
    %4788 = vmatprep.subr.mxu0 0.0
    %4789 = vmatpush1.msra.mxu0 0.0
    %4790 = vmatprep.subr.mxu0 0.0
    %4791 = vmatpush1.msra.mxu0 0.0
    %4792 = vmatprep.subr.mxu0 0.0
    %4793 = vmatpush1.msra.mxu0 0.0
    %4794 = vmatprep.subr.mxu0 0.0
    %4795 = vmatpush1.msra.mxu0 0.0
    %4796 = vmatprep.subr.mxu0 0.0
    %4797 = vmatpush1.msra.mxu0 0.0
    %4798 = vmatprep.subr.mxu0 0.0
    %4799 = vmatpush1.msra.mxu0 0.0
    %4800 = vmatprep.subr.mxu0 0.0
    %4801 = vmatpush1.msra.mxu0 0.0
    %4802 = vmatprep.subr.mxu0 0.0
    %4803 = vmatpush1.msra.mxu0 0.0
    %4804 = vmatprep.subr.mxu0 0.0
    %4805 = vmatpush1.msra.mxu0 0.0
    %4806 = vmatprep.subr.mxu0 0.0
    %4807 = vmatpush1.msra.mxu0 0.0
    %4808 = vmatprep.subr.mxu0 0.0
    %4809 = vmatpush1.msra.mxu0 0.0
    %4810 = vmatprep.subr.mxu0 0.0
    %4811 = vmatpush1.msra.mxu0 0.0
    %4812 = vmatprep.subr.mxu0 0.0
    %4813 = vmatpush1.msra.mxu0 0.0
    %4814 = vmatprep.subr.mxu0 0.0
    %4815 = vmatpush1.msra.mxu0 0.0
    %4816 = vmatprep.subr.mxu0 0.0
    %4817 = vmatpush1.msra.mxu0 0.0
    %4818 = vmatprep.subr.mxu0 0.0
    %4819 = vmatpush1.msra.mxu0 0.0
    %4820 = vmatprep.subr.mxu0 0.0
    %4821 = vmatpush1.msra.mxu0 0.0
    %4822 = vmatprep.subr.mxu0 0.0
    %4823 = vmatpush1.msra.mxu0 0.0
    %4824 = vmatprep.subr.mxu0 0.0
    %4825 = vmatpush1.msra.mxu0 0.0
    %4826 = vmatprep.mubr.f32.mxu0 0.0
    %4827 = vmatmul.mubr.f32.gmra.mrb[0].mxu0 %v3893
    %v4828 = vpop.f32.mrb[0].mxu0
    %v4829 = vadd.f32 %v4759, %v4828
    %v4830 = vpop.f32.mrb[0].mxu0
    %4831 = vdwg.mxu0
    %v4832 = vadd.f32 %v4829, %v2810
    %v4833 = vxor.u32 %v4832, 2147483648
    %v4834 = vmul.f32 %v4833, 1.442695
    %v4835 = vpow.pop %v4834
    %v4836 = vadd.f32 %v4835, 1.0
    %v4837 = vrcp.pop %v4836
    %v4838 = vmul.f32 1.0, %v4837
    %v4839 = vtanh.pop %v4832
    %4841 = vrot.lane.b32.xlu0 %v4839, 64
    %v4842 = vpop.permute.xlu0 %4841
    %v4844 = vmul.f32 %v4838, %v4842
    %v4845 = vtanh.pop %v4844
    %4847 = vrot.lane.b32.xlu0 %v4845, 96
    %v4848 = vpop.permute.xlu0 %4847
    %v4850 = vmul.f32 %v4838, %v4848
    %v4851 = vmax.f32 %v4691, 0.0
    %v4852 = vmax.f32 %v4850, 0.0
    %v4853 = vld [vmem:[%s13] sm:$0xff]
    %v4854 = vld [vmem:[%s13 + $0x8] sm:$0xff]
    %v4855 = vld [vmem:[%s13 + $0x10] sm:$0xff]
    %v4856 = vld [vmem:[%s13 + $0x18] sm:$0xff]
    %v4857 = vld [vmem:[%s13 + $0x20] sm:$0xff]
    %v4858 = vld [vmem:[%s13 + $0x28] sm:$0xff]
    %v4859 = vld [vmem:[%s13 + $0x30] sm:$0xff]
    %v4860 = vld [vmem:[%s13 + $0x38] sm:$0xff]
    %4862 = vrot.lane.b32.xlu0 %v4852, 32
    %v4863 = vpop.permute.xlu0 %4862
    %v4864 = vsel %vm810, %v4863, 0
    %4866 = vmatprep.subr.mxu0 0.0
    %4867 = vmatpush1.msra.mxu0 %v4857
    %4868 = vmatprep.subr.mxu0 0.0
    %4869 = vmatpush1.msra.mxu0 %v4858
    %4870 = vmatprep.subr.mxu0 0.0
    %4871 = vmatpush1.msra.mxu0 %v4859
    %4872 = vmatprep.subr.mxu0 0.0
    %4873 = vmatpush1.msra.mxu0 %v4860
    %4874 = vmatprep.subr.mxu0 0.0
    %4875 = vmatpush1.msra.mxu0 0.0
    %4876 = vmatprep.subr.mxu0 0.0
    %4877 = vmatpush1.msra.mxu0 0.0
    %4878 = vmatprep.subr.mxu0 0.0
    %4879 = vmatpush1.msra.mxu0 0.0
    %4880 = vmatprep.subr.mxu0 0.0
    %4881 = vmatpush1.msra.mxu0 0.0
    %4882 = vmatprep.subr.mxu0 0.0
    %4883 = vmatpush1.msra.mxu0 0.0
    %4884 = vmatprep.subr.mxu0 0.0
    %4885 = vmatpush1.msra.mxu0 0.0
    %4886 = vmatprep.subr.mxu0 0.0
    %4887 = vmatpush1.msra.mxu0 0.0
    %4888 = vmatprep.subr.mxu0 0.0
    %4889 = vmatpush1.msra.mxu0 0.0
    %4890 = vmatprep.subr.mxu0 0.0
    %4891 = vmatpush1.msra.mxu0 0.0
    %4892 = vmatprep.subr.mxu0 0.0
    %4893 = vmatpush1.msra.mxu0 0.0
    %4894 = vmatprep.subr.mxu0 0.0
    %4895 = vmatpush1.msra.mxu0 0.0
    %4896 = vmatprep.subr.mxu0 0.0
    %4897 = vmatpush1.msra.mxu0 0.0
    %4898 = vmatprep.subr.mxu0 0.0
    %4899 = vmatpush1.msra.mxu0 0.0
    %4900 = vmatprep.subr.mxu0 0.0
    %4901 = vmatpush1.msra.mxu0 0.0
    %4902 = vmatprep.subr.mxu0 0.0
    %4903 = vmatpush1.msra.mxu0 0.0
    %4904 = vmatprep.subr.mxu0 0.0
    %4905 = vmatpush1.msra.mxu0 0.0
    %4906 = vmatprep.subr.mxu0 0.0
    %4907 = vmatpush1.msra.mxu0 0.0
    %4908 = vmatprep.subr.mxu0 0.0
    %4909 = vmatpush1.msra.mxu0 0.0
    %4910 = vmatprep.subr.mxu0 0.0
    %4911 = vmatpush1.msra.mxu0 0.0
    %4912 = vmatprep.subr.mxu0 0.0
    %4913 = vmatpush1.msra.mxu0 0.0
    %4914 = vmatprep.subr.mxu0 0.0
    %4915 = vmatpush1.msra.mxu0 0.0
    %4916 = vmatprep.subr.mxu0 0.0
    %4917 = vmatpush1.msra.mxu0 0.0
    %4918 = vmatprep.subr.mxu0 0.0
    %4919 = vmatpush1.msra.mxu0 0.0
    %4920 = vmatprep.subr.mxu0 0.0
    %4921 = vmatpush1.msra.mxu0 0.0
    %4922 = vmatprep.subr.mxu0 0.0
    %4923 = vmatpush1.msra.mxu0 0.0
    %4924 = vmatprep.subr.mxu0 0.0
    %4925 = vmatpush1.msra.mxu0 0.0
    %4926 = vmatprep.subr.mxu0 0.0
    %4927 = vmatpush1.msra.mxu0 0.0
    %4928 = vmatprep.subr.mxu0 0.0
    %4929 = vmatpush1.msra.mxu0 0.0
    %4930 = vmatprep.mubr.f32.mxu0 0.0
    %4931 = vmatmul.mubr.f32.gmra.mrb[0].mxu0 %v4864
    %v4932 = vpop.f32.mrb[0].mxu0
    %v4933 = vadd.f32 0.0, %v4932
    %v4934 = vpop.f32.mrb[0].mxu0
    %4935 = vdwg.mxu0
    %4937 = vrot.lane.b32.xlu0 %v4851, 32
    %v4938 = vpop.permute.xlu0 %4937
    %v4939 = vsel %vm810, %v4938, 0
    %4941 = vmatprep.subr.mxu0 0.0
    %4942 = vmatpush1.msra.mxu0 %v4853
    %4943 = vmatprep.subr.mxu0 0.0
    %4944 = vmatpush1.msra.mxu0 %v4854
    %4945 = vmatprep.subr.mxu0 0.0
    %4946 = vmatpush1.msra.mxu0 %v4855
    %4947 = vmatprep.subr.mxu0 0.0
    %4948 = vmatpush1.msra.mxu0 %v4856
    %4949 = vmatprep.subr.mxu0 0.0
    %4950 = vmatpush1.msra.mxu0 0.0
    %4951 = vmatprep.subr.mxu0 0.0
    %4952 = vmatpush1.msra.mxu0 0.0
    %4953 = vmatprep.subr.mxu0 0.0
    %4954 = vmatpush1.msra.mxu0 0.0
    %4955 = vmatprep.subr.mxu0 0.0
    %4956 = vmatpush1.msra.mxu0 0.0
    %4957 = vmatprep.subr.mxu0 0.0
    %4958 = vmatpush1.msra.mxu0 0.0
    %4959 = vmatprep.subr.mxu0 0.0
    %4960 = vmatpush1.msra.mxu0 0.0
    %4961 = vmatprep.subr.mxu0 0.0
    %4962 = vmatpush1.msra.mxu0 0.0
    %4963 = vmatprep.subr.mxu0 0.0
    %4964 = vmatpush1.msra.mxu0 0.0
    %4965 = vmatprep.subr.mxu0 0.0
    %4966 = vmatpush1.msra.mxu0 0.0
    %4967 = vmatprep.subr.mxu0 0.0
    %4968 = vmatpush1.msra.mxu0 0.0
    %4969 = vmatprep.subr.mxu0 0.0
    %4970 = vmatpush1.msra.mxu0 0.0
    %4971 = vmatprep.subr.mxu0 0.0
    %4972 = vmatpush1.msra.mxu0 0.0
    %4973 = vmatprep.subr.mxu0 0.0
    %4974 = vmatpush1.msra.mxu0 0.0
    %4975 = vmatprep.subr.mxu0 0.0
    %4976 = vmatpush1.msra.mxu0 0.0
    %4977 = vmatprep.subr.mxu0 0.0
    %4978 = vmatpush1.msra.mxu0 0.0
    %4979 = vmatprep.subr.mxu0 0.0
    %4980 = vmatpush1.msra.mxu0 0.0
    %4981 = vmatprep.subr.mxu0 0.0
    %4982 = vmatpush1.msra.mxu0 0.0
    %4983 = vmatprep.subr.mxu0 0.0
    %4984 = vmatpush1.msra.mxu0 0.0
    %4985 = vmatprep.subr.mxu0 0.0
    %4986 = vmatpush1.msra.mxu0 0.0
    %4987 = vmatprep.subr.mxu0 0.0
    %4988 = vmatpush1.msra.mxu0 0.0
    %4989 = vmatprep.subr.mxu0 0.0
    %4990 = vmatpush1.msra.mxu0 0.0
    %4991 = vmatprep.subr.mxu0 0.0
    %4992 = vmatpush1.msra.mxu0 0.0
    %4993 = vmatprep.subr.mxu0 0.0
    %4994 = vmatpush1.msra.mxu0 0.0
    %4995 = vmatprep.subr.mxu0 0.0
    %4996 = vmatpush1.msra.mxu0 0.0
    %4997 = vmatprep.subr.mxu0 0.0
    %4998 = vmatpush1.msra.mxu0 0.0
    %4999 = vmatprep.subr.mxu0 0.0
    %5000 = vmatpush1.msra.mxu0 0.0
    %5001 = vmatprep.subr.mxu0 0.0
    %5002 = vmatpush1.msra.mxu0 0.0
    %5003 = vmatprep.subr.mxu0 0.0
    %5004 = vmatpush1.msra.mxu0 0.0
    %5005 = vmatprep.mubr.f32.mxu0 0.0
    %5006 = vmatmul.mubr.f32.gmra.mrb[0].mxu0 %v4939
    %v5007 = vpop.f32.mrb[0].mxu0
    %v5008 = vadd.f32 %v4933, %v5007
    %v5009 = vpop.f32.mrb[0].mxu0
    %5010 = vdwg.mxu0
    %v5011 = vld [vmem:[#allocation16] sm:$0x1]
    %v5013 = vlaneseq
    %v5014 = vshrl.u32 %v5013, 7
    %v5015 = vsub.s32 0, %v5014
    %v5016 = vrot.slane %v5011, %v5015
    %v5018 = vadd.f32 %v5008, %v5016
    %vm5019 = vcmask 25600
    %5020 = vst.msk [vmem:[#allocation17] sm:$0x3] %vm5019, %v5018
    // Predicated region
    $region98: #{model_forward_pallas.1} parent=1 // pred_check
      _
    $region99: #{model_forward_pallas.1} parent=1 // pred_check_branch
      %5022 = sbr.rel (0) target = $region101
    $region100: #{model_forward_pallas.1} parent=1 // pred_region
      %s5024 = ssub.s32 32, 32
      %5025 = vsyncadd [#allocation4], %s5024
      %s5027 = sshll.u32 [#allocation17], 4
      %s5028 = int_to_ptr.vmem [resolvable:$true] %s5027
      %5030 = dma.vmem_to_hbm [thread:$0]  %s5028, 32, %s15, [#allocation4]
    $region101: #{model_forward_pallas.1} parent=1 // pred_fallthru
      _
    // Predicated region
    $region102: #{model_forward_pallas.1} parent=1 // pred_check
      _
    $region103: #{model_forward_pallas.1} parent=1 // pred_check_branch
      %5032 = sbr.rel (0) target = $region105
    $region104: #{model_forward_pallas.1} parent=1 // pred_region
      %5033 = dma.done [#allocation4], 32
    $region105: #{model_forward_pallas.1} parent=1 // pred_fallthru
      _
    %5034 = vsyncpa [#allocation3], 1
    %5035 = vsyncpa [#allocation6], 1
    %5036 = vsyncpa [#allocation9], 1
    %5037 = vsyncpa [#allocation12], 1
    %5038 = vsyncpa [#allocation15], 1
    %5039 = vsyncpa [#allocation4], 1

</llo_original>
